<compile_context>
chip_gen: v7x
topology: tpu7x:2x2x1
jax: 0.10.0
libtpu: 0.0.40
codegen_flags: <defaults>
</compile_context>

<pallas_src>
import jax
import jax.numpy as jnp
from jax.experimental import pallas as pl
from jax.experimental.pallas import tpu as pltpu


def _roll_lanes(v, shift):
    """np.roll semantics along the last (lane-dense) axis via an XLU rotate."""
    n = v.shape[-1]
    shift = shift % n
    if shift == 0:
        return v
    return pltpu.roll(v, shift, v.ndim - 1)


def _make_sse_kernel(*, H, W, K, HW, sb, num_lf):
    def kernel(x_ref, klf_ref, w1_ref, o_ref):
        b = pl.program_id(0)       # batch element (outer axis, megacore-sharded)
        out_ch = o_ref.shape[0]

        # ---------------- LF half: steerable 3x3 circular conv (per scale) --------
        @pl.when(b < num_lf)
        def _lf_branch():
            # column-edge masks, built once per step at (1, HW) and broadcast
            col = jax.lax.broadcasted_iota(jnp.int32, (1, HW), 1) % W
            edge_l = col == 0
            edge_r = col == W - 1
            for sc in range(sb):                        # static loop over scales in the block
                xs = x_ref[:, sc * HW:(sc + 1) * HW]    # (C, HW) f32, lane-aligned slice
                # circular column neighbours; the single wrapped column is fixed by one select
                x_wm = jnp.where(edge_l, _roll_lanes(xs, 1 - W), _roll_lanes(xs, 1))    # dw=0
                x_wp = jnp.where(edge_r, _roll_lanes(xs, W - 1), _roll_lanes(xs, -1))   # dw=2
                acc = jnp.zeros((out_ch, HW), jnp.float32)
                for dh in range(K):                     # just-in-time taps (<=5 live copies)
                    rshift = -(dh - 1) * W              # exact circular H-wrap on the flat HW axis
                    for dw, xv in enumerate((x_wm, xs, x_wp)):
                        tap = _roll_lanes(xv, rshift)
                        # NOTE: a fused (OUT, KK*C) x (KK*C, HW) contraction is the
                        # alternative worth re-benchmarking on v6e; 9-tap accumulation
                        # avoids sublane-stacking the taps.
                        acc = acc + jnp.dot(klf_ref[sc, dh * K + dw], tap,
                                            preferred_element_type=jnp.float32)
                o_ref[:, sc * HW:(sc + 1) * HW] = acc.astype(o_ref.dtype)

        # ---------------- HF half: 1x1x1 conv (channel mixing), one big dot -------
        @pl.when(b >= num_lf)
        def _hf_branch():
            o_ref[...] = jnp.dot(w1_ref[...], x_ref[...],
                                 preferred_element_type=jnp.float32).astype(o_ref.dtype)

    return kernel


def _largest_divisor_leq(n, cap):
    cap = int(max(1, min(n, cap)))
    for d in range(cap, 0, -1):
        if n % d == 0:
            return d
    return 1


def _vmem_limit_bytes():
    # v7x has 64 MiB of VMEM per TensorCore (vs 128 MiB on v5e/v6e); leave headroom.
    try:
        cap = int(pltpu.get_tpu_info().vmem_capacity_bytes)
    except Exception:
        cap = 64 * 1024 * 1024
    return int(max(32 * 1024 * 1024, min(cap - 16 * 1024 * 1024, 100 * 1024 * 1024)))


def sse_conv_h_h_forward(x, weight_LF, weight_HF, weight_1x1, basis,
                         even_indices, odd_indices, *,
                         kernel_size=3, padding=1,
                         out_dtype=jnp.bfloat16, scale_block=None,
                         block_target_bytes=4 * 1024 * 1024):
    # weight_HF / odd_indices belong to the module but are unused when res=False.
    del weight_HF, odd_indices
    assert padding == kernel_size // 2, "circular 'same' conv expected"
    twoB, C, S, H, W = x.shape
    B = twoB // 2
    K = kernel_size
    OUT = weight_LF.shape[0]
    HW = H * W
    assert HW % 128 == 0, "flattened spatial axis must stay lane-dense"

    # How many scales each grid step covers: grow the tile to amortize the per-step
    # overhead, capped so the double-buffered in/out blocks stay well inside VMEM.
    out_bytes = jnp.dtype(out_dtype).itemsize
    per_scale_bytes = HW * (C * x.dtype.itemsize + OUT * out_bytes)
    if scale_block is None:
        scale_block = _largest_divisor_leq(S, max(1, block_target_bytes // per_scale_bytes))
    sb = scale_block
    assert S % sb == 0

    # Tiny parameter prep in plain JAX (weights only): steerable LF kernel laid out
    # (S, K*K, OUT, C) so tap index t = dh*K + dw is a clean leading index.
    # Activations are NOT touched here -> no extra full-HBM cast pass.
    basis_LF = basis[even_indices]                                  # (F_LF, S, K, K)
    klf = jnp.einsum('ocf,fsij->sijoc', weight_LF, basis_LF)        # (S, K, K, OUT, C)
    klf = klf.reshape(S, K * K, OUT, C).astype(x.dtype)
    w1 = weight_1x1.reshape(OUT, C).astype(x.dtype)

    # Free reshape: (2B, C, S, H, W) -> (2B, C, S*H*W); no cast, no HBM copy.
    x_flat = x.reshape(twoB, C, S * HW)

    kernel = _make_sse_kernel(H=H, W=W, K=K, HW=HW, sb=sb, num_lf=B)

    out_flat = pl.pallas_call(
        kernel,
        out_shape=jax.ShapeDtypeStruct((twoB, OUT, S * HW), out_dtype),
        grid=(twoB, S // sb),                     # batch outer (megacore), scale-block inner
        in_specs=[
            pl.BlockSpec((None, C, sb * HW), lambda b, s: (b, 0, s)),
            pl.BlockSpec((sb, K * K, OUT, C), lambda b, s: (s, 0, 0, 0)),
            pl.BlockSpec((OUT, C), lambda b, s: (0, 0)),
        ],
        out_specs=pl.BlockSpec((None, OUT, sb * HW), lambda b, s: (b, 0, s)),
        compiler_params=pltpu.CompilerParams(
            dimension_semantics=("parallel", "parallel"),
            vmem_limit_bytes=_vmem_limit_bytes()),
    )(x_flat, klf, w1)

    # stride == 1 -> PyTorch's avg_pool3d branch is a no-op; nothing to add here.
    return out_flat.reshape(twoB, OUT, S, H, W)   # free row-major split of the lane axis


def reference_forward(x, weight_LF, weight_1x1, basis, even_indices, *, padding=1):
    # Pure-JAX f32 reference mirroring the PyTorch forward (res=False, stride=1).
    twoB, C, S, H, W = x.shape
    B = twoB // 2
    K = basis.shape[-1]
    x_lf, x_hf = x[:B], x[B:]
    basis_LF = basis[even_indices]
    kmat = jnp.einsum('oif,fskl->soikl', weight_LF, basis_LF)       # (S, OUT, C, K, K)
    xp = jnp.pad(x_lf, ((0, 0), (0, 0), (0, 0),
                        (padding, padding), (padding, padding)), mode='wrap')
    out_lf = jnp.zeros((B, weight_LF.shape[0], S, H, W), jnp.float32)
    for dh in range(K):
        for dw in range(K):
            out_lf = out_lf + jnp.einsum(
                'soi,bishw->boshw', kmat[:, :, :, dh, dw],
                xp[:, :, :, dh:dh + H, dw:dw + W],
                precision=jax.lax.Precision.HIGHEST)
    out_hf = jnp.einsum('oi,bishw->boshw', weight_1x1.reshape(-1, C), x_hf,
                        precision=jax.lax.Precision.HIGHEST)
    return jnp.concatenate([out_lf, out_hf], axis=0)


if __name__ == "__main__":
    B, C, OUT, S, H, W = 2, 4, 8, 4, 16, 16
    K = 3
    num_funcs_total = 6
    even_indices = jnp.arange(0, num_funcs_total, 2)   # LF basis indices
    odd_indices = jnp.arange(1, num_funcs_total, 2)    # HF basis indices (unused, res=False)
    F_LF = int(even_indices.shape[0])
    F_HF = int(odd_indices.shape[0])

    key = jax.random.PRNGKey(0)
    kx, kb, kwl, kwh, kw1 = jax.random.split(key, 5)
    x = jax.random.normal(kx, (2 * B, C, S, H, W), jnp.float32)
    basis = jax.random.normal(kb, (num_funcs_total, S, K, K), jnp.float32)

    def kaiming_uniform(k, shape):
        # matches nn.init.kaiming_uniform_(w, a=sqrt(5)): bound = 1/sqrt(fan_in)
        fan_in = 1
        for d in shape[1:]:
            fan_in *= d
        bound = (1.0 / fan_in) ** 0.5
        return jax.random.uniform(k, shape, jnp.float32, -bound, bound)

    weight_LF = kaiming_uniform(kwl, (OUT, C, F_LF))
    weight_HF = kaiming_uniform(kwh, (OUT, C, F_HF))     # declared in __init__, unused here
    weight_1x1 = kaiming_uniform(kw1, (OUT, C, 1, 1))    # scale_size == 1 -> 4-D weight

    out = sse_conv_h_h_forward(x, weight_LF, weight_HF, weight_1x1, basis,
                               even_indices, odd_indices)
    out = jax.block_until_ready(out)

    ref = reference_forward(x, weight_LF, weight_1x1, basis, even_indices)
    assert out.shape == (2 * B, OUT, S, H, W), out.shape
    assert out.dtype == jnp.bfloat16, out.dtype
    # f32 in-kernel compute; tolerance only covers MXU rounding + the bf16 output cast.
    err = jnp.max(jnp.abs(out.astype(jnp.float32) - ref))
    assert jnp.allclose(out.astype(jnp.float32), ref, rtol=3e-2, atol=3e-2), float(err)
    print("KERNEL_OK")
</pallas_src>

<mosaic_0001>
module attributes {stable_mosaic.version = 11 : i64} {
  func.func @kernel(%arg0: i32, %arg1: i32, %arg2: memref<1x4x1024xf32, #tpu.memory_space<vmem>>, %arg3: memref<4x9x8x4xf32, #tpu.memory_space<vmem>>, %arg4: memref<8x4xf32, #tpu.memory_space<vmem>>, %arg5: memref<1x8x1024xbf16, #tpu.memory_space<vmem>>) attributes {dimension_semantics = [#tpu.dimension_semantics<parallel>, #tpu.dimension_semantics<parallel>], iteration_bounds = array<i64: 4, 1>, scalar_prefetch = 0 : i64, scratch_operands = 0 : i64, tpu.core_type = #tpu.core_type<tc>, window_params = [{transform_indices = @transform_0, window_bounds = array<i64: 1, 4, 1024>}, {transform_indices = @transform_1, window_bounds = array<i64: 4, 9, 8, 4>}, {pipeline_mode = #tpu.pipeline_mode<synchronous>, transform_indices = @transform_2, window_bounds = array<i64: 8, 4>}, {transform_indices = @transform_3, window_bounds = array<i64: 1, 8, 1024>}]} {
    %c2_i32 = arith.constant 2 : i32
    %0 = arith.cmpi slt, %arg0, %c2_i32 : i32
    %1 = arith.extui %0 : i1 to i32
    %c0_i32 = arith.constant 0 : i32
    %2 = arith.cmpi ne, %1, %c0_i32 : i32
    scf.if %2 {
      %6 = tpu.iota {dimensions = array<i32: 1>} : vector<1x256xi32>
      %c16_i32 = arith.constant 16 : i32
      %c0_i32_2 = arith.constant 0 : i32
      %7 = arith.cmpi eq, %c16_i32, %c0_i32_2 : i32
      %c1_i32 = arith.constant 1 : i32
      %8 = arith.select %7, %c1_i32, %c16_i32 : i32
      %9 = vector.broadcast %8 : i32 to vector<1x256xi32>
      %10 = arith.remsi %6, %9 : vector<1x256xi32>
      %c0_i32_3 = arith.constant 0 : i32
      %11 = vector.broadcast %c0_i32_3 : i32 to vector<1x256xi32>
      %12 = arith.cmpi ne, %10, %11 : vector<1x256xi32>
      %c0_i32_4 = arith.constant 0 : i32
      %13 = vector.broadcast %c0_i32_4 : i32 to vector<1x256xi32>
      %14 = arith.cmpi slt, %10, %13 : vector<1x256xi32>
      %c0_i32_5 = arith.constant 0 : i32
      %15 = arith.cmpi slt, %8, %c0_i32_5 : i32
      %16 = vector.broadcast %15 : i1 to vector<1x256xi1>
      %17 = vector.broadcast %16 : vector<1x256xi1> to vector<1x256xi1>
      %18 = arith.xori %14, %17 : vector<1x256xi1>
      %19 = arith.andi %18, %12 : vector<1x256xi1>
      %20 = vector.broadcast %8 : i32 to vector<1x256xi32>
      %21 = arith.addi %10, %20 : vector<1x256xi32>
      %22 = arith.select %19, %21, %10 : vector<1x256xi1>, vector<1x256xi32>
      %c0_i32_6 = arith.constant 0 : i32
      %23 = vector.broadcast %c0_i32_6 : i32 to vector<1x256xi32>
      %24 = arith.cmpi eq, %22, %23 : vector<1x256xi32>
      %c15_i32 = arith.constant 15 : i32
      %25 = vector.broadcast %c15_i32 : i32 to vector<1x256xi32>
      %26 = arith.cmpi eq, %22, %25 : vector<1x256xi32>
      %c0 = arith.constant 0 : index
      %c0_7 = arith.constant 0 : index
      %c0_8 = arith.constant 0 : index
      %27 = vector.load %arg2[%c0, %c0_7, %c0_8] : memref<1x4x1024xf32, #tpu.memory_space<vmem>>, vector<1x4x256xf32>
      %28 = vector.shape_cast %27 : vector<1x4x256xf32> to vector<4x256xf32>
      %c241_i32 = arith.constant 241 : i32
      %29 = tpu.dynamic_rotate %28 by %c241_i32 dim 1 : vector<4x256xf32>, i32 -> vector<4x256xf32>
      %c1_i32_9 = arith.constant 1 : i32
      %30 = tpu.dynamic_rotate %28 by %c1_i32_9 dim 1 : vector<4x256xf32>, i32 -> vector<4x256xf32>
      %31 = vector.shape_cast %24 : vector<1x256xi1> to vector<1x256xi1>
      %32 = vector.broadcast %31 : vector<1x256xi1> to vector<4x256xi1>
      %33 = arith.select %32, %29, %30 : vector<4x256xi1>, vector<4x256xf32>
      %c15_i32_10 = arith.constant 15 : i32
      %34 = tpu.dynamic_rotate %28 by %c15_i32_10 dim 1 : vector<4x256xf32>, i32 -> vector<4x256xf32>
      %c255_i32 = arith.constant 255 : i32
      %35 = tpu.dynamic_rotate %28 by %c255_i32 dim 1 : vector<4x256xf32>, i32 -> vector<4x256xf32>
      %36 = vector.shape_cast %26 : vector<1x256xi1> to vector<1x256xi1>
      %37 = vector.broadcast %36 : vector<1x256xi1> to vector<4x256xi1>
      %38 = arith.select %37, %34, %35 : vector<4x256xi1>, vector<4x256xf32>
      %cst = arith.constant 0.000000e+00 : f32
      %39 = vector.broadcast %cst : f32 to vector<8x256xf32>
      %c16_i32_11 = arith.constant 16 : i32
      %40 = tpu.dynamic_rotate %33 by %c16_i32_11 dim 1 : vector<4x256xf32>, i32 -> vector<4x256xf32>
      %c0_12 = arith.constant 0 : index
      %c0_13 = arith.constant 0 : index
      %c0_14 = arith.constant 0 : index
      %c0_15 = arith.constant 0 : index
      %41 = vector.load %arg3[%c0_12, %c0_13, %c0_14, %c0_15] : memref<4x9x8x4xf32, #tpu.memory_space<vmem>>, vector<1x1x8x4xf32>
      %42 = vector.shape_cast %41 : vector<1x1x8x4xf32> to vector<8x4xf32>
      %cst_16 = arith.constant dense<0.000000e+00> : vector<8x256xf32>
      %43 = tpu.matmul %42, %40, %cst_16 {dimension_numbers = #tpu.dot_dimension_numbers<[1], [0], [0], [1], [0, 0, 1, 1], [], []>} : vector<8x4xf32>, vector<4x256xf32>, vector<8x256xf32> -> vector<8x256xf32>
      %44 = arith.addf %39, %43 : vector<8x256xf32>
      %c16_i32_17 = arith.constant 16 : i32
      %45 = tpu.dynamic_rotate %28 by %c16_i32_17 dim 1 : vector<4x256xf32>, i32 -> vector<4x256xf32>
      %c0_18 = arith.constant 0 : index
      %c1 = arith.constant 1 : index
      %c0_19 = arith.constant 0 : index
      %c0_20 = arith.constant 0 : index
      %46 = vector.load %arg3[%c0_18, %c1, %c0_19, %c0_20] : memref<4x9x8x4xf32, #tpu.memory_space<vmem>>, vector<1x1x8x4xf32>
      %47 = vector.shape_cast %46 : vector<1x1x8x4xf32> to vector<8x4xf32>
      %cst_21 = arith.constant dense<0.000000e+00> : vector<8x256xf32>
      %48 = tpu.matmul %47, %45, %cst_21 {dimension_numbers = #tpu.dot_dimension_numbers<[1], [0], [0], [1], [0, 0, 1, 1], [], []>} : vector<8x4xf32>, vector<4x256xf32>, vector<8x256xf32> -> vector<8x256xf32>
      %49 = arith.addf %44, %48 : vector<8x256xf32>
      %c16_i32_22 = arith.constant 16 : i32
      %50 = tpu.dynamic_rotate %38 by %c16_i32_22 dim 1 : vector<4x256xf32>, i32 -> vector<4x256xf32>
      %c0_23 = arith.constant 0 : index
      %c2 = arith.constant 2 : index
      %c0_24 = arith.constant 0 : index
      %c0_25 = arith.constant 0 : index
      %51 = vector.load %arg3[%c0_23, %c2, %c0_24, %c0_25] : memref<4x9x8x4xf32, #tpu.memory_space<vmem>>, vector<1x1x8x4xf32>
      %52 = vector.shape_cast %51 : vector<1x1x8x4xf32> to vector<8x4xf32>
      %cst_26 = arith.constant dense<0.000000e+00> : vector<8x256xf32>
      %53 = tpu.matmul %52, %50, %cst_26 {dimension_numbers = #tpu.dot_dimension_numbers<[1], [0], [0], [1], [0, 0, 1, 1], [], []>} : vector<8x4xf32>, vector<4x256xf32>, vector<8x256xf32> -> vector<8x256xf32>
      %54 = arith.addf %49, %53 : vector<8x256xf32>
      %c0_27 = arith.constant 0 : index
      %c3 = arith.constant 3 : index
      %c0_28 = arith.constant 0 : index
      %c0_29 = arith.constant 0 : index
      %55 = vector.load %arg3[%c0_27, %c3, %c0_28, %c0_29] : memref<4x9x8x4xf32, #tpu.memory_space<vmem>>, vector<1x1x8x4xf32>
      %56 = vector.shape_cast %55 : vector<1x1x8x4xf32> to vector<8x4xf32>
      %cst_30 = arith.constant dense<0.000000e+00> : vector<8x256xf32>
      %57 = tpu.matmul %56, %33, %cst_30 {dimension_numbers = #tpu.dot_dimension_numbers<[1], [0], [0], [1], [0, 0, 1, 1], [], []>} : vector<8x4xf32>, vector<4x256xf32>, vector<8x256xf32> -> vector<8x256xf32>
      %58 = arith.addf %54, %57 : vector<8x256xf32>
      %c0_31 = arith.constant 0 : index
      %c4 = arith.constant 4 : index
      %c0_32 = arith.constant 0 : index
      %c0_33 = arith.constant 0 : index
      %59 = vector.load %arg3[%c0_31, %c4, %c0_32, %c0_33] : memref<4x9x8x4xf32, #tpu.memory_space<vmem>>, vector<1x1x8x4xf32>
      %60 = vector.shape_cast %59 : vector<1x1x8x4xf32> to vector<8x4xf32>
      %cst_34 = arith.constant dense<0.000000e+00> : vector<8x256xf32>
      %61 = tpu.matmul %60, %28, %cst_34 {dimension_numbers = #tpu.dot_dimension_numbers<[1], [0], [0], [1], [0, 0, 1, 1], [], []>} : vector<8x4xf32>, vector<4x256xf32>, vector<8x256xf32> -> vector<8x256xf32>
      %62 = arith.addf %58, %61 : vector<8x256xf32>
      %c0_35 = arith.constant 0 : index
      %c5 = arith.constant 5 : index
      %c0_36 = arith.constant 0 : index
      %c0_37 = arith.constant 0 : index
      %63 = vector.load %arg3[%c0_35, %c5, %c0_36, %c0_37] : memref<4x9x8x4xf32, #tpu.memory_space<vmem>>, vector<1x1x8x4xf32>
      %64 = vector.shape_cast %63 : vector<1x1x8x4xf32> to vector<8x4xf32>
      %cst_38 = arith.constant dense<0.000000e+00> : vector<8x256xf32>
      %65 = tpu.matmul %64, %38, %cst_38 {dimension_numbers = #tpu.dot_dimension_numbers<[1], [0], [0], [1], [0, 0, 1, 1], [], []>} : vector<8x4xf32>, vector<4x256xf32>, vector<8x256xf32> -> vector<8x256xf32>
      %66 = arith.addf %62, %65 : vector<8x256xf32>
      %c240_i32 = arith.constant 240 : i32
      %67 = tpu.dynamic_rotate %33 by %c240_i32 dim 1 : vector<4x256xf32>, i32 -> vector<4x256xf32>
      %c0_39 = arith.constant 0 : index
      %c6 = arith.constant 6 : index
      %c0_40 = arith.constant 0 : index
      %c0_41 = arith.constant 0 : index
      %68 = vector.load %arg3[%c0_39, %c6, %c0_40, %c0_41] : memref<4x9x8x4xf32, #tpu.memory_space<vmem>>, vector<1x1x8x4xf32>
      %69 = vector.shape_cast %68 : vector<1x1x8x4xf32> to vector<8x4xf32>
      %cst_42 = arith.constant dense<0.000000e+00> : vector<8x256xf32>
      %70 = tpu.matmul %69, %67, %cst_42 {dimension_numbers = #tpu.dot_dimension_numbers<[1], [0], [0], [1], [0, 0, 1, 1], [], []>} : vector<8x4xf32>, vector<4x256xf32>, vector<8x256xf32> -> vector<8x256xf32>
      %71 = arith.addf %66, %70 : vector<8x256xf32>
      %c240_i32_43 = arith.constant 240 : i32
      %72 = tpu.dynamic_rotate %28 by %c240_i32_43 dim 1 : vector<4x256xf32>, i32 -> vector<4x256xf32>
      %c0_44 = arith.constant 0 : index
      %c7 = arith.constant 7 : index
      %c0_45 = arith.constant 0 : index
      %c0_46 = arith.constant 0 : index
      %73 = vector.load %arg3[%c0_44, %c7, %c0_45, %c0_46] : memref<4x9x8x4xf32, #tpu.memory_space<vmem>>, vector<1x1x8x4xf32>
      %74 = vector.shape_cast %73 : vector<1x1x8x4xf32> to vector<8x4xf32>
      %cst_47 = arith.constant dense<0.000000e+00> : vector<8x256xf32>
      %75 = tpu.matmul %74, %72, %cst_47 {dimension_numbers = #tpu.dot_dimension_numbers<[1], [0], [0], [1], [0, 0, 1, 1], [], []>} : vector<8x4xf32>, vector<4x256xf32>, vector<8x256xf32> -> vector<8x256xf32>
      %76 = arith.addf %71, %75 : vector<8x256xf32>
      %c240_i32_48 = arith.constant 240 : i32
      %77 = tpu.dynamic_rotate %38 by %c240_i32_48 dim 1 : vector<4x256xf32>, i32 -> vector<4x256xf32>
      %c0_49 = arith.constant 0 : index
      %c8 = arith.constant 8 : index
      %c0_50 = arith.constant 0 : index
      %c0_51 = arith.constant 0 : index
      %78 = vector.load %arg3[%c0_49, %c8, %c0_50, %c0_51] : memref<4x9x8x4xf32, #tpu.memory_space<vmem>>, vector<1x1x8x4xf32>
      %79 = vector.shape_cast %78 : vector<1x1x8x4xf32> to vector<8x4xf32>
      %cst_52 = arith.constant dense<0.000000e+00> : vector<8x256xf32>
      %80 = tpu.matmul %79, %77, %cst_52 {dimension_numbers = #tpu.dot_dimension_numbers<[1], [0], [0], [1], [0, 0, 1, 1], [], []>} : vector<8x4xf32>, vector<4x256xf32>, vector<8x256xf32> -> vector<8x256xf32>
      %81 = arith.addf %76, %80 : vector<8x256xf32>
      %82 = arith.truncf %81 : vector<8x256xf32> to vector<8x256xbf16>
      %c0_53 = arith.constant 0 : index
      %c0_54 = arith.constant 0 : index
      %c0_55 = arith.constant 0 : index
      %83 = vector.load %arg5[%c0_53, %c0_54, %c0_55] : memref<1x8x1024xbf16, #tpu.memory_space<vmem>>, vector<1x8x256xbf16>
      %84 = vector.shape_cast %83 : vector<1x8x256xbf16> to vector<8x256xbf16>
      %85 = vector.shape_cast %82 : vector<8x256xbf16> to vector<1x8x256xbf16>
      tpu.vector_store %arg5[%c0_53, %c0_54, %c0_55], %85 {strides = array<i32>} : memref<1x8x1024xbf16, #tpu.memory_space<vmem>>, vector<1x8x256xbf16>,
      %c0_56 = arith.constant 0 : index
      %c0_57 = arith.constant 0 : index
      %c256 = arith.constant 256 : index
      %86 = vector.load %arg2[%c0_56, %c0_57, %c256] : memref<1x4x1024xf32, #tpu.memory_space<vmem>>, vector<1x4x256xf32>
      %87 = vector.shape_cast %86 : vector<1x4x256xf32> to vector<4x256xf32>
      %c241_i32_58 = arith.constant 241 : i32
      %88 = tpu.dynamic_rotate %87 by %c241_i32_58 dim 1 : vector<4x256xf32>, i32 -> vector<4x256xf32>
      %c1_i32_59 = arith.constant 1 : i32
      %89 = tpu.dynamic_rotate %87 by %c1_i32_59 dim 1 : vector<4x256xf32>, i32 -> vector<4x256xf32>
      %90 = vector.shape_cast %24 : vector<1x256xi1> to vector<1x256xi1>
      %91 = vector.broadcast %90 : vector<1x256xi1> to vector<4x256xi1>
      %92 = arith.select %91, %88, %89 : vector<4x256xi1>, vector<4x256xf32>
      %c15_i32_60 = arith.constant 15 : i32
      %93 = tpu.dynamic_rotate %87 by %c15_i32_60 dim 1 : vector<4x256xf32>, i32 -> vector<4x256xf32>
      %c255_i32_61 = arith.constant 255 : i32
      %94 = tpu.dynamic_rotate %87 by %c255_i32_61 dim 1 : vector<4x256xf32>, i32 -> vector<4x256xf32>
      %95 = vector.shape_cast %26 : vector<1x256xi1> to vector<1x256xi1>
      %96 = vector.broadcast %95 : vector<1x256xi1> to vector<4x256xi1>
      %97 = arith.select %96, %93, %94 : vector<4x256xi1>, vector<4x256xf32>
      %cst_62 = arith.constant 0.000000e+00 : f32
      %98 = vector.broadcast %cst_62 : f32 to vector<8x256xf32>
      %c16_i32_63 = arith.constant 16 : i32
      %99 = tpu.dynamic_rotate %92 by %c16_i32_63 dim 1 : vector<4x256xf32>, i32 -> vector<4x256xf32>
      %c1_64 = arith.constant 1 : index
      %c0_65 = arith.constant 0 : index
      %c0_66 = arith.constant 0 : index
      %c0_67 = arith.constant 0 : index
      %100 = vector.load %arg3[%c1_64, %c0_65, %c0_66, %c0_67] : memref<4x9x8x4xf32, #tpu.memory_space<vmem>>, vector<1x1x8x4xf32>
      %101 = vector.shape_cast %100 : vector<1x1x8x4xf32> to vector<8x4xf32>
      %cst_68 = arith.constant dense<0.000000e+00> : vector<8x256xf32>
      %102 = tpu.matmul %101, %99, %cst_68 {dimension_numbers = #tpu.dot_dimension_numbers<[1], [0], [0], [1], [0, 0, 1, 1], [], []>} : vector<8x4xf32>, vector<4x256xf32>, vector<8x256xf32> -> vector<8x256xf32>
      %103 = arith.addf %98, %102 : vector<8x256xf32>
      %c16_i32_69 = arith.constant 16 : i32
      %104 = tpu.dynamic_rotate %87 by %c16_i32_69 dim 1 : vector<4x256xf32>, i32 -> vector<4x256xf32>
      %c1_70 = arith.constant 1 : index
      %c1_71 = arith.constant 1 : index
      %c0_72 = arith.constant 0 : index
      %c0_73 = arith.constant 0 : index
      %105 = vector.load %arg3[%c1_70, %c1_71, %c0_72, %c0_73] : memref<4x9x8x4xf32, #tpu.memory_space<vmem>>, vector<1x1x8x4xf32>
      %106 = vector.shape_cast %105 : vector<1x1x8x4xf32> to vector<8x4xf32>
      %cst_74 = arith.constant dense<0.000000e+00> : vector<8x256xf32>
      %107 = tpu.matmul %106, %104, %cst_74 {dimension_numbers = #tpu.dot_dimension_numbers<[1], [0], [0], [1], [0, 0, 1, 1], [], []>} : vector<8x4xf32>, vector<4x256xf32>, vector<8x256xf32> -> vector<8x256xf32>
      %108 = arith.addf %103, %107 : vector<8x256xf32>
      %c16_i32_75 = arith.constant 16 : i32
      %109 = tpu.dynamic_rotate %97 by %c16_i32_75 dim 1 : vector<4x256xf32>, i32 -> vector<4x256xf32>
      %c1_76 = arith.constant 1 : index
      %c2_77 = arith.constant 2 : index
      %c0_78 = arith.constant 0 : index
      %c0_79 = arith.constant 0 : index
      %110 = vector.load %arg3[%c1_76, %c2_77, %c0_78, %c0_79] : memref<4x9x8x4xf32, #tpu.memory_space<vmem>>, vector<1x1x8x4xf32>
      %111 = vector.shape_cast %110 : vector<1x1x8x4xf32> to vector<8x4xf32>
      %cst_80 = arith.constant dense<0.000000e+00> : vector<8x256xf32>
      %112 = tpu.matmul %111, %109, %cst_80 {dimension_numbers = #tpu.dot_dimension_numbers<[1], [0], [0], [1], [0, 0, 1, 1], [], []>} : vector<8x4xf32>, vector<4x256xf32>, vector<8x256xf32> -> vector<8x256xf32>
      %113 = arith.addf %108, %112 : vector<8x256xf32>
      %c1_81 = arith.constant 1 : index
      %c3_82 = arith.constant 3 : index
      %c0_83 = arith.constant 0 : index
      %c0_84 = arith.constant 0 : index
      %114 = vector.load %arg3[%c1_81, %c3_82, %c0_83, %c0_84] : memref<4x9x8x4xf32, #tpu.memory_space<vmem>>, vector<1x1x8x4xf32>
      %115 = vector.shape_cast %114 : vector<1x1x8x4xf32> to vector<8x4xf32>
      %cst_85 = arith.constant dense<0.000000e+00> : vector<8x256xf32>
      %116 = tpu.matmul %115, %92, %cst_85 {dimension_numbers = #tpu.dot_dimension_numbers<[1], [0], [0], [1], [0, 0, 1, 1], [], []>} : vector<8x4xf32>, vector<4x256xf32>, vector<8x256xf32> -> vector<8x256xf32>
      %117 = arith.addf %113, %116 : vector<8x256xf32>
      %c1_86 = arith.constant 1 : index
      %c4_87 = arith.constant 4 : index
      %c0_88 = arith.constant 0 : index
      %c0_89 = arith.constant 0 : index
      %118 = vector.load %arg3[%c1_86, %c4_87, %c0_88, %c0_89] : memref<4x9x8x4xf32, #tpu.memory_space<vmem>>, vector<1x1x8x4xf32>
      %119 = vector.shape_cast %118 : vector<1x1x8x4xf32> to vector<8x4xf32>
      %cst_90 = arith.constant dense<0.000000e+00> : vector<8x256xf32>
      %120 = tpu.matmul %119, %87, %cst_90 {dimension_numbers = #tpu.dot_dimension_numbers<[1], [0], [0], [1], [0, 0, 1, 1], [], []>} : vector<8x4xf32>, vector<4x256xf32>, vector<8x256xf32> -> vector<8x256xf32>
      %121 = arith.addf %117, %120 : vector<8x256xf32>
      %c1_91 = arith.constant 1 : index
      %c5_92 = arith.constant 5 : index
      %c0_93 = arith.constant 0 : index
      %c0_94 = arith.constant 0 : index
      %122 = vector.load %arg3[%c1_91, %c5_92, %c0_93, %c0_94] : memref<4x9x8x4xf32, #tpu.memory_space<vmem>>, vector<1x1x8x4xf32>
      %123 = vector.shape_cast %122 : vector<1x1x8x4xf32> to vector<8x4xf32>
      %cst_95 = arith.constant dense<0.000000e+00> : vector<8x256xf32>
      %124 = tpu.matmul %123, %97, %cst_95 {dimension_numbers = #tpu.dot_dimension_numbers<[1], [0], [0], [1], [0, 0, 1, 1], [], []>} : vector<8x4xf32>, vector<4x256xf32>, vector<8x256xf32> -> vector<8x256xf32>
      %125 = arith.addf %121, %124 : vector<8x256xf32>
      %c240_i32_96 = arith.constant 240 : i32
      %126 = tpu.dynamic_rotate %92 by %c240_i32_96 dim 1 : vector<4x256xf32>, i32 -> vector<4x256xf32>
      %c1_97 = arith.constant 1 : index
      %c6_98 = arith.constant 6 : index
      %c0_99 = arith.constant 0 : index
      %c0_100 = arith.constant 0 : index
      %127 = vector.load %arg3[%c1_97, %c6_98, %c0_99, %c0_100] : memref<4x9x8x4xf32, #tpu.memory_space<vmem>>, vector<1x1x8x4xf32>
      %128 = vector.shape_cast %127 : vector<1x1x8x4xf32> to vector<8x4xf32>
      %cst_101 = arith.constant dense<0.000000e+00> : vector<8x256xf32>
      %129 = tpu.matmul %128, %126, %cst_101 {dimension_numbers = #tpu.dot_dimension_numbers<[1], [0], [0], [1], [0, 0, 1, 1], [], []>} : vector<8x4xf32>, vector<4x256xf32>, vector<8x256xf32> -> vector<8x256xf32>
      %130 = arith.addf %125, %129 : vector<8x256xf32>
      %c240_i32_102 = arith.constant 240 : i32
      %131 = tpu.dynamic_rotate %87 by %c240_i32_102 dim 1 : vector<4x256xf32>, i32 -> vector<4x256xf32>
      %c1_103 = arith.constant 1 : index
      %c7_104 = arith.constant 7 : index
      %c0_105 = arith.constant 0 : index
      %c0_106 = arith.constant 0 : index
      %132 = vector.load %arg3[%c1_103, %c7_104, %c0_105, %c0_106] : memref<4x9x8x4xf32, #tpu.memory_space<vmem>>, vector<1x1x8x4xf32>
      %133 = vector.shape_cast %132 : vector<1x1x8x4xf32> to vector<8x4xf32>
      %cst_107 = arith.constant dense<0.000000e+00> : vector<8x256xf32>
      %134 = tpu.matmul %133, %131, %cst_107 {dimension_numbers = #tpu.dot_dimension_numbers<[1], [0], [0], [1], [0, 0, 1, 1], [], []>} : vector<8x4xf32>, vector<4x256xf32>, vector<8x256xf32> -> vector<8x256xf32>
      %135 = arith.addf %130, %134 : vector<8x256xf32>
      %c240_i32_108 = arith.constant 240 : i32
      %136 = tpu.dynamic_rotate %97 by %c240_i32_108 dim 1 : vector<4x256xf32>, i32 -> vector<4x256xf32>
      %c1_109 = arith.constant 1 : index
      %c8_110 = arith.constant 8 : index
      %c0_111 = arith.constant 0 : index
      %c0_112 = arith.constant 0 : index
      %137 = vector.load %arg3[%c1_109, %c8_110, %c0_111, %c0_112] : memref<4x9x8x4xf32, #tpu.memory_space<vmem>>, vector<1x1x8x4xf32>
      %138 = vector.shape_cast %137 : vector<1x1x8x4xf32> to vector<8x4xf32>
      %cst_113 = arith.constant dense<0.000000e+00> : vector<8x256xf32>
      %139 = tpu.matmul %138, %136, %cst_113 {dimension_numbers = #tpu.dot_dimension_numbers<[1], [0], [0], [1], [0, 0, 1, 1], [], []>} : vector<8x4xf32>, vector<4x256xf32>, vector<8x256xf32> -> vector<8x256xf32>
      %140 = arith.addf %135, %139 : vector<8x256xf32>
      %141 = arith.truncf %140 : vector<8x256xf32> to vector<8x256xbf16>
      %c0_114 = arith.constant 0 : index
      %c0_115 = arith.constant 0 : index
      %c256_116 = arith.constant 256 : index
      %142 = vector.load %arg5[%c0_114, %c0_115, %c256_116] : memref<1x8x1024xbf16, #tpu.memory_space<vmem>>, vector<1x8x256xbf16>
      %143 = vector.shape_cast %142 : vector<1x8x256xbf16> to vector<8x256xbf16>
      %144 = vector.shape_cast %141 : vector<8x256xbf16> to vector<1x8x256xbf16>
      tpu.vector_store %arg5[%c0_114, %c0_115, %c256_116], %144 {strides = array<i32>} : memref<1x8x1024xbf16, #tpu.memory_space<vmem>>, vector<1x8x256xbf16>,
      %c0_117 = arith.constant 0 : index
      %c0_118 = arith.constant 0 : index
      %c512 = arith.constant 512 : index
      %145 = vector.load %arg2[%c0_117, %c0_118, %c512] : memref<1x4x1024xf32, #tpu.memory_space<vmem>>, vector<1x4x256xf32>
      %146 = vector.shape_cast %145 : vector<1x4x256xf32> to vector<4x256xf32>
      %c241_i32_119 = arith.constant 241 : i32
      %147 = tpu.dynamic_rotate %146 by %c241_i32_119 dim 1 : vector<4x256xf32>, i32 -> vector<4x256xf32>
      %c1_i32_120 = arith.constant 1 : i32
      %148 = tpu.dynamic_rotate %146 by %c1_i32_120 dim 1 : vector<4x256xf32>, i32 -> vector<4x256xf32>
      %149 = vector.shape_cast %24 : vector<1x256xi1> to vector<1x256xi1>
      %150 = vector.broadcast %149 : vector<1x256xi1> to vector<4x256xi1>
      %151 = arith.select %150, %147, %148 : vector<4x256xi1>, vector<4x256xf32>
      %c15_i32_121 = arith.constant 15 : i32
      %152 = tpu.dynamic_rotate %146 by %c15_i32_121 dim 1 : vector<4x256xf32>, i32 -> vector<4x256xf32>
      %c255_i32_122 = arith.constant 255 : i32
      %153 = tpu.dynamic_rotate %146 by %c255_i32_122 dim 1 : vector<4x256xf32>, i32 -> vector<4x256xf32>
      %154 = vector.shape_cast %26 : vector<1x256xi1> to vector<1x256xi1>
      %155 = vector.broadcast %154 : vector<1x256xi1> to vector<4x256xi1>
      %156 = arith.select %155, %152, %153 : vector<4x256xi1>, vector<4x256xf32>
      %cst_123 = arith.constant 0.000000e+00 : f32
      %157 = vector.broadcast %cst_123 : f32 to vector<8x256xf32>
      %c16_i32_124 = arith.constant 16 : i32
      %158 = tpu.dynamic_rotate %151 by %c16_i32_124 dim 1 : vector<4x256xf32>, i32 -> vector<4x256xf32>
      %c2_125 = arith.constant 2 : index
      %c0_126 = arith.constant 0 : index
      %c0_127 = arith.constant 0 : index
      %c0_128 = arith.constant 0 : index
      %159 = vector.load %arg3[%c2_125, %c0_126, %c0_127, %c0_128] : memref<4x9x8x4xf32, #tpu.memory_space<vmem>>, vector<1x1x8x4xf32>
      %160 = vector.shape_cast %159 : vector<1x1x8x4xf32> to vector<8x4xf32>
      %cst_129 = arith.constant dense<0.000000e+00> : vector<8x256xf32>
      %161 = tpu.matmul %160, %158, %cst_129 {dimension_numbers = #tpu.dot_dimension_numbers<[1], [0], [0], [1], [0, 0, 1, 1], [], []>} : vector<8x4xf32>, vector<4x256xf32>, vector<8x256xf32> -> vector<8x256xf32>
      %162 = arith.addf %157, %161 : vector<8x256xf32>
      %c16_i32_130 = arith.constant 16 : i32
      %163 = tpu.dynamic_rotate %146 by %c16_i32_130 dim 1 : vector<4x256xf32>, i32 -> vector<4x256xf32>
      %c2_131 = arith.constant 2 : index
      %c1_132 = arith.constant 1 : index
      %c0_133 = arith.constant 0 : index
      %c0_134 = arith.constant 0 : index
      %164 = vector.load %arg3[%c2_131, %c1_132, %c0_133, %c0_134] : memref<4x9x8x4xf32, #tpu.memory_space<vmem>>, vector<1x1x8x4xf32>
      %165 = vector.shape_cast %164 : vector<1x1x8x4xf32> to vector<8x4xf32>
      %cst_135 = arith.constant dense<0.000000e+00> : vector<8x256xf32>
      %166 = tpu.matmul %165, %163, %cst_135 {dimension_numbers = #tpu.dot_dimension_numbers<[1], [0], [0], [1], [0, 0, 1, 1], [], []>} : vector<8x4xf32>, vector<4x256xf32>, vector<8x256xf32> -> vector<8x256xf32>
      %167 = arith.addf %162, %166 : vector<8x256xf32>
      %c16_i32_136 = arith.constant 16 : i32
      %168 = tpu.dynamic_rotate %156 by %c16_i32_136 dim 1 : vector<4x256xf32>, i32 -> vector<4x256xf32>
      %c2_137 = arith.constant 2 : index
      %c2_138 = arith.constant 2 : index
      %c0_139 = arith.constant 0 : index
      %c0_140 = arith.constant 0 : index
      %169 = vector.load %arg3[%c2_137, %c2_138, %c0_139, %c0_140] : memref<4x9x8x4xf32, #tpu.memory_space<vmem>>, vector<1x1x8x4xf32>
      %170 = vector.shape_cast %169 : vector<1x1x8x4xf32> to vector<8x4xf32>
      %cst_141 = arith.constant dense<0.000000e+00> : vector<8x256xf32>
      %171 = tpu.matmul %170, %168, %cst_141 {dimension_numbers = #tpu.dot_dimension_numbers<[1], [0], [0], [1], [0, 0, 1, 1], [], []>} : vector<8x4xf32>, vector<4x256xf32>, vector<8x256xf32> -> vector<8x256xf32>
      %172 = arith.addf %167, %171 : vector<8x256xf32>
      %c2_142 = arith.constant 2 : index
      %c3_143 = arith.constant 3 : index
      %c0_144 = arith.constant 0 : index
      %c0_145 = arith.constant 0 : index
      %173 = vector.load %arg3[%c2_142, %c3_143, %c0_144, %c0_145] : memref<4x9x8x4xf32, #tpu.memory_space<vmem>>, vector<1x1x8x4xf32>
      %174 = vector.shape_cast %173 : vector<1x1x8x4xf32> to vector<8x4xf32>
      %cst_146 = arith.constant dense<0.000000e+00> : vector<8x256xf32>
      %175 = tpu.matmul %174, %151, %cst_146 {dimension_numbers = #tpu.dot_dimension_numbers<[1], [0], [0], [1], [0, 0, 1, 1], [], []>} : vector<8x4xf32>, vector<4x256xf32>, vector<8x256xf32> -> vector<8x256xf32>
      %176 = arith.addf %172, %175 : vector<8x256xf32>
      %c2_147 = arith.constant 2 : index
      %c4_148 = arith.constant 4 : index
      %c0_149 = arith.constant 0 : index
      %c0_150 = arith.constant 0 : index
      %177 = vector.load %arg3[%c2_147, %c4_148, %c0_149, %c0_150] : memref<4x9x8x4xf32, #tpu.memory_space<vmem>>, vector<1x1x8x4xf32>
      %178 = vector.shape_cast %177 : vector<1x1x8x4xf32> to vector<8x4xf32>
      %cst_151 = arith.constant dense<0.000000e+00> : vector<8x256xf32>
      %179 = tpu.matmul %178, %146, %cst_151 {dimension_numbers = #tpu.dot_dimension_numbers<[1], [0], [0], [1], [0, 0, 1, 1], [], []>} : vector<8x4xf32>, vector<4x256xf32>, vector<8x256xf32> -> vector<8x256xf32>
      %180 = arith.addf %176, %179 : vector<8x256xf32>
      %c2_152 = arith.constant 2 : index
      %c5_153 = arith.constant 5 : index
      %c0_154 = arith.constant 0 : index
      %c0_155 = arith.constant 0 : index
      %181 = vector.load %arg3[%c2_152, %c5_153, %c0_154, %c0_155] : memref<4x9x8x4xf32, #tpu.memory_space<vmem>>, vector<1x1x8x4xf32>
      %182 = vector.shape_cast %181 : vector<1x1x8x4xf32> to vector<8x4xf32>
      %cst_156 = arith.constant dense<0.000000e+00> : vector<8x256xf32>
      %183 = tpu.matmul %182, %156, %cst_156 {dimension_numbers = #tpu.dot_dimension_numbers<[1], [0], [0], [1], [0, 0, 1, 1], [], []>} : vector<8x4xf32>, vector<4x256xf32>, vector<8x256xf32> -> vector<8x256xf32>
      %184 = arith.addf %180, %183 : vector<8x256xf32>
      %c240_i32_157 = arith.constant 240 : i32
      %185 = tpu.dynamic_rotate %151 by %c240_i32_157 dim 1 : vector<4x256xf32>, i32 -> vector<4x256xf32>
      %c2_158 = arith.constant 2 : index
      %c6_159 = arith.constant 6 : index
      %c0_160 = arith.constant 0 : index
      %c0_161 = arith.constant 0 : index
      %186 = vector.load %arg3[%c2_158, %c6_159, %c0_160, %c0_161] : memref<4x9x8x4xf32, #tpu.memory_space<vmem>>, vector<1x1x8x4xf32>
      %187 = vector.shape_cast %186 : vector<1x1x8x4xf32> to vector<8x4xf32>
      %cst_162 = arith.constant dense<0.000000e+00> : vector<8x256xf32>
      %188 = tpu.matmul %187, %185, %cst_162 {dimension_numbers = #tpu.dot_dimension_numbers<[1], [0], [0], [1], [0, 0, 1, 1], [], []>} : vector<8x4xf32>, vector<4x256xf32>, vector<8x256xf32> -> vector<8x256xf32>
      %189 = arith.addf %184, %188 : vector<8x256xf32>
      %c240_i32_163 = arith.constant 240 : i32
      %190 = tpu.dynamic_rotate %146 by %c240_i32_163 dim 1 : vector<4x256xf32>, i32 -> vector<4x256xf32>
      %c2_164 = arith.constant 2 : index
      %c7_165 = arith.constant 7 : index
      %c0_166 = arith.constant 0 : index
      %c0_167 = arith.constant 0 : index
      %191 = vector.load %arg3[%c2_164, %c7_165, %c0_166, %c0_167] : memref<4x9x8x4xf32, #tpu.memory_space<vmem>>, vector<1x1x8x4xf32>
      %192 = vector.shape_cast %191 : vector<1x1x8x4xf32> to vector<8x4xf32>
      %cst_168 = arith.constant dense<0.000000e+00> : vector<8x256xf32>
      %193 = tpu.matmul %192, %190, %cst_168 {dimension_numbers = #tpu.dot_dimension_numbers<[1], [0], [0], [1], [0, 0, 1, 1], [], []>} : vector<8x4xf32>, vector<4x256xf32>, vector<8x256xf32> -> vector<8x256xf32>
      %194 = arith.addf %189, %193 : vector<8x256xf32>
      %c240_i32_169 = arith.constant 240 : i32
      %195 = tpu.dynamic_rotate %156 by %c240_i32_169 dim 1 : vector<4x256xf32>, i32 -> vector<4x256xf32>
      %c2_170 = arith.constant 2 : index
      %c8_171 = arith.constant 8 : index
      %c0_172 = arith.constant 0 : index
      %c0_173 = arith.constant 0 : index
      %196 = vector.load %arg3[%c2_170, %c8_171, %c0_172, %c0_173] : memref<4x9x8x4xf32, #tpu.memory_space<vmem>>, vector<1x1x8x4xf32>
      %197 = vector.shape_cast %196 : vector<1x1x8x4xf32> to vector<8x4xf32>
      %cst_174 = arith.constant dense<0.000000e+00> : vector<8x256xf32>
      %198 = tpu.matmul %197, %195, %cst_174 {dimension_numbers = #tpu.dot_dimension_numbers<[1], [0], [0], [1], [0, 0, 1, 1], [], []>} : vector<8x4xf32>, vector<4x256xf32>, vector<8x256xf32> -> vector<8x256xf32>
      %199 = arith.addf %194, %198 : vector<8x256xf32>
      %200 = arith.truncf %199 : vector<8x256xf32> to vector<8x256xbf16>
      %c0_175 = arith.constant 0 : index
      %c0_176 = arith.constant 0 : index
      %c512_177 = arith.constant 512 : index
      %201 = vector.load %arg5[%c0_175, %c0_176, %c512_177] : memref<1x8x1024xbf16, #tpu.memory_space<vmem>>, vector<1x8x256xbf16>
      %202 = vector.shape_cast %201 : vector<1x8x256xbf16> to vector<8x256xbf16>
      %203 = vector.shape_cast %200 : vector<8x256xbf16> to vector<1x8x256xbf16>
      tpu.vector_store %arg5[%c0_175, %c0_176, %c512_177], %203 {strides = array<i32>} : memref<1x8x1024xbf16, #tpu.memory_space<vmem>>, vector<1x8x256xbf16>,
      %c0_178 = arith.constant 0 : index
      %c0_179 = arith.constant 0 : index
      %c768 = arith.constant 768 : index
      %204 = vector.load %arg2[%c0_178, %c0_179, %c768] : memref<1x4x1024xf32, #tpu.memory_space<vmem>>, vector<1x4x256xf32>
      %205 = vector.shape_cast %204 : vector<1x4x256xf32> to vector<4x256xf32>
      %c241_i32_180 = arith.constant 241 : i32
      %206 = tpu.dynamic_rotate %205 by %c241_i32_180 dim 1 : vector<4x256xf32>, i32 -> vector<4x256xf32>
      %c1_i32_181 = arith.constant 1 : i32
      %207 = tpu.dynamic_rotate %205 by %c1_i32_181 dim 1 : vector<4x256xf32>, i32 -> vector<4x256xf32>
      %208 = vector.shape_cast %24 : vector<1x256xi1> to vector<1x256xi1>
      %209 = vector.broadcast %208 : vector<1x256xi1> to vector<4x256xi1>
      %210 = arith.select %209, %206, %207 : vector<4x256xi1>, vector<4x256xf32>
      %c15_i32_182 = arith.constant 15 : i32
      %211 = tpu.dynamic_rotate %205 by %c15_i32_182 dim 1 : vector<4x256xf32>, i32 -> vector<4x256xf32>
      %c255_i32_183 = arith.constant 255 : i32
      %212 = tpu.dynamic_rotate %205 by %c255_i32_183 dim 1 : vector<4x256xf32>, i32 -> vector<4x256xf32>
      %213 = vector.shape_cast %26 : vector<1x256xi1> to vector<1x256xi1>
      %214 = vector.broadcast %213 : vector<1x256xi1> to vector<4x256xi1>
      %215 = arith.select %214, %211, %212 : vector<4x256xi1>, vector<4x256xf32>
      %cst_184 = arith.constant 0.000000e+00 : f32
      %216 = vector.broadcast %cst_184 : f32 to vector<8x256xf32>
      %c16_i32_185 = arith.constant 16 : i32
      %217 = tpu.dynamic_rotate %210 by %c16_i32_185 dim 1 : vector<4x256xf32>, i32 -> vector<4x256xf32>
      %c3_186 = arith.constant 3 : index
      %c0_187 = arith.constant 0 : index
      %c0_188 = arith.constant 0 : index
      %c0_189 = arith.constant 0 : index
      %218 = vector.load %arg3[%c3_186, %c0_187, %c0_188, %c0_189] : memref<4x9x8x4xf32, #tpu.memory_space<vmem>>, vector<1x1x8x4xf32>
      %219 = vector.shape_cast %218 : vector<1x1x8x4xf32> to vector<8x4xf32>
      %cst_190 = arith.constant dense<0.000000e+00> : vector<8x256xf32>
      %220 = tpu.matmul %219, %217, %cst_190 {dimension_numbers = #tpu.dot_dimension_numbers<[1], [0], [0], [1], [0, 0, 1, 1], [], []>} : vector<8x4xf32>, vector<4x256xf32>, vector<8x256xf32> -> vector<8x256xf32>
      %221 = arith.addf %216, %220 : vector<8x256xf32>
      %c16_i32_191 = arith.constant 16 : i32
      %222 = tpu.dynamic_rotate %205 by %c16_i32_191 dim 1 : vector<4x256xf32>, i32 -> vector<4x256xf32>
      %c3_192 = arith.constant 3 : index
      %c1_193 = arith.constant 1 : index
      %c0_194 = arith.constant 0 : index
      %c0_195 = arith.constant 0 : index
      %223 = vector.load %arg3[%c3_192, %c1_193, %c0_194, %c0_195] : memref<4x9x8x4xf32, #tpu.memory_space<vmem>>, vector<1x1x8x4xf32>
      %224 = vector.shape_cast %223 : vector<1x1x8x4xf32> to vector<8x4xf32>
      %cst_196 = arith.constant dense<0.000000e+00> : vector<8x256xf32>
      %225 = tpu.matmul %224, %222, %cst_196 {dimension_numbers = #tpu.dot_dimension_numbers<[1], [0], [0], [1], [0, 0, 1, 1], [], []>} : vector<8x4xf32>, vector<4x256xf32>, vector<8x256xf32> -> vector<8x256xf32>
      %226 = arith.addf %221, %225 : vector<8x256xf32>
      %c16_i32_197 = arith.constant 16 : i32
      %227 = tpu.dynamic_rotate %215 by %c16_i32_197 dim 1 : vector<4x256xf32>, i32 -> vector<4x256xf32>
      %c3_198 = arith.constant 3 : index
      %c2_199 = arith.constant 2 : index
      %c0_200 = arith.constant 0 : index
      %c0_201 = arith.constant 0 : index
      %228 = vector.load %arg3[%c3_198, %c2_199, %c0_200, %c0_201] : memref<4x9x8x4xf32, #tpu.memory_space<vmem>>, vector<1x1x8x4xf32>
      %229 = vector.shape_cast %228 : vector<1x1x8x4xf32> to vector<8x4xf32>
      %cst_202 = arith.constant dense<0.000000e+00> : vector<8x256xf32>
      %230 = tpu.matmul %229, %227, %cst_202 {dimension_numbers = #tpu.dot_dimension_numbers<[1], [0], [0], [1], [0, 0, 1, 1], [], []>} : vector<8x4xf32>, vector<4x256xf32>, vector<8x256xf32> -> vector<8x256xf32>
      %231 = arith.addf %226, %230 : vector<8x256xf32>
      %c3_203 = arith.constant 3 : index
      %c3_204 = arith.constant 3 : index
      %c0_205 = arith.constant 0 : index
      %c0_206 = arith.constant 0 : index
      %232 = vector.load %arg3[%c3_203, %c3_204, %c0_205, %c0_206] : memref<4x9x8x4xf32, #tpu.memory_space<vmem>>, vector<1x1x8x4xf32>
      %233 = vector.shape_cast %232 : vector<1x1x8x4xf32> to vector<8x4xf32>
      %cst_207 = arith.constant dense<0.000000e+00> : vector<8x256xf32>
      %234 = tpu.matmul %233, %210, %cst_207 {dimension_numbers = #tpu.dot_dimension_numbers<[1], [0], [0], [1], [0, 0, 1, 1], [], []>} : vector<8x4xf32>, vector<4x256xf32>, vector<8x256xf32> -> vector<8x256xf32>
      %235 = arith.addf %231, %234 : vector<8x256xf32>
      %c3_208 = arith.constant 3 : index
      %c4_209 = arith.constant 4 : index
      %c0_210 = arith.constant 0 : index
      %c0_211 = arith.constant 0 : index
      %236 = vector.load %arg3[%c3_208, %c4_209, %c0_210, %c0_211] : memref<4x9x8x4xf32, #tpu.memory_space<vmem>>, vector<1x1x8x4xf32>
      %237 = vector.shape_cast %236 : vector<1x1x8x4xf32> to vector<8x4xf32>
      %cst_212 = arith.constant dense<0.000000e+00> : vector<8x256xf32>
      %238 = tpu.matmul %237, %205, %cst_212 {dimension_numbers = #tpu.dot_dimension_numbers<[1], [0], [0], [1], [0, 0, 1, 1], [], []>} : vector<8x4xf32>, vector<4x256xf32>, vector<8x256xf32> -> vector<8x256xf32>
      %239 = arith.addf %235, %238 : vector<8x256xf32>
      %c3_213 = arith.constant 3 : index
      %c5_214 = arith.constant 5 : index
      %c0_215 = arith.constant 0 : index
      %c0_216 = arith.constant 0 : index
      %240 = vector.load %arg3[%c3_213, %c5_214, %c0_215, %c0_216] : memref<4x9x8x4xf32, #tpu.memory_space<vmem>>, vector<1x1x8x4xf32>
      %241 = vector.shape_cast %240 : vector<1x1x8x4xf32> to vector<8x4xf32>
      %cst_217 = arith.constant dense<0.000000e+00> : vector<8x256xf32>
      %242 = tpu.matmul %241, %215, %cst_217 {dimension_numbers = #tpu.dot_dimension_numbers<[1], [0], [0], [1], [0, 0, 1, 1], [], []>} : vector<8x4xf32>, vector<4x256xf32>, vector<8x256xf32> -> vector<8x256xf32>
      %243 = arith.addf %239, %242 : vector<8x256xf32>
      %c240_i32_218 = arith.constant 240 : i32
      %244 = tpu.dynamic_rotate %210 by %c240_i32_218 dim 1 : vector<4x256xf32>, i32 -> vector<4x256xf32>
      %c3_219 = arith.constant 3 : index
      %c6_220 = arith.constant 6 : index
      %c0_221 = arith.constant 0 : index
      %c0_222 = arith.constant 0 : index
      %245 = vector.load %arg3[%c3_219, %c6_220, %c0_221, %c0_222] : memref<4x9x8x4xf32, #tpu.memory_space<vmem>>, vector<1x1x8x4xf32>
      %246 = vector.shape_cast %245 : vector<1x1x8x4xf32> to vector<8x4xf32>
      %cst_223 = arith.constant dense<0.000000e+00> : vector<8x256xf32>
      %247 = tpu.matmul %246, %244, %cst_223 {dimension_numbers = #tpu.dot_dimension_numbers<[1], [0], [0], [1], [0, 0, 1, 1], [], []>} : vector<8x4xf32>, vector<4x256xf32>, vector<8x256xf32> -> vector<8x256xf32>
      %248 = arith.addf %243, %247 : vector<8x256xf32>
      %c240_i32_224 = arith.constant 240 : i32
      %249 = tpu.dynamic_rotate %205 by %c240_i32_224 dim 1 : vector<4x256xf32>, i32 -> vector<4x256xf32>
      %c3_225 = arith.constant 3 : index
      %c7_226 = arith.constant 7 : index
      %c0_227 = arith.constant 0 : index
      %c0_228 = arith.constant 0 : index
      %250 = vector.load %arg3[%c3_225, %c7_226, %c0_227, %c0_228] : memref<4x9x8x4xf32, #tpu.memory_space<vmem>>, vector<1x1x8x4xf32>
      %251 = vector.shape_cast %250 : vector<1x1x8x4xf32> to vector<8x4xf32>
      %cst_229 = arith.constant dense<0.000000e+00> : vector<8x256xf32>
      %252 = tpu.matmul %251, %249, %cst_229 {dimension_numbers = #tpu.dot_dimension_numbers<[1], [0], [0], [1], [0, 0, 1, 1], [], []>} : vector<8x4xf32>, vector<4x256xf32>, vector<8x256xf32> -> vector<8x256xf32>
      %253 = arith.addf %248, %252 : vector<8x256xf32>
      %c240_i32_230 = arith.constant 240 : i32
      %254 = tpu.dynamic_rotate %215 by %c240_i32_230 dim 1 : vector<4x256xf32>, i32 -> vector<4x256xf32>
      %c3_231 = arith.constant 3 : index
      %c8_232 = arith.constant 8 : index
      %c0_233 = arith.constant 0 : index
      %c0_234 = arith.constant 0 : index
      %255 = vector.load %arg3[%c3_231, %c8_232, %c0_233, %c0_234] : memref<4x9x8x4xf32, #tpu.memory_space<vmem>>, vector<1x1x8x4xf32>
      %256 = vector.shape_cast %255 : vector<1x1x8x4xf32> to vector<8x4xf32>
      %cst_235 = arith.constant dense<0.000000e+00> : vector<8x256xf32>
      %257 = tpu.matmul %256, %254, %cst_235 {dimension_numbers = #tpu.dot_dimension_numbers<[1], [0], [0], [1], [0, 0, 1, 1], [], []>} : vector<8x4xf32>, vector<4x256xf32>, vector<8x256xf32> -> vector<8x256xf32>
      %258 = arith.addf %253, %257 : vector<8x256xf32>
      %259 = arith.truncf %258 : vector<8x256xf32> to vector<8x256xbf16>
      %c0_236 = arith.constant 0 : index
      %c0_237 = arith.constant 0 : index
      %c768_238 = arith.constant 768 : index
      %260 = vector.load %arg5[%c0_236, %c0_237, %c768_238] : memref<1x8x1024xbf16, #tpu.memory_space<vmem>>, vector<1x8x256xbf16>
      %261 = vector.shape_cast %260 : vector<1x8x256xbf16> to vector<8x256xbf16>
      %262 = vector.shape_cast %259 : vector<8x256xbf16> to vector<1x8x256xbf16>
      tpu.vector_store %arg5[%c0_236, %c0_237, %c768_238], %262 {strides = array<i32>} : memref<1x8x1024xbf16, #tpu.memory_space<vmem>>, vector<1x8x256xbf16>,
    } else {
    }
    %c2_i32_0 = arith.constant 2 : i32
    %3 = arith.cmpi sge, %arg0, %c2_i32_0 : i32
    %4 = arith.extui %3 : i1 to i32
    %c0_i32_1 = arith.constant 0 : i32
    %5 = arith.cmpi ne, %4, %c0_i32_1 : i32
    scf.if %5 {
      %c0 = arith.constant 0 : index
      %c0_2 = arith.constant 0 : index
      %6 = vector.load %arg4[%c0, %c0_2] : memref<8x4xf32, #tpu.memory_space<vmem>>, vector<8x4xf32>
      %c0_3 = arith.constant 0 : index
      %c0_4 = arith.constant 0 : index
      %c0_5 = arith.constant 0 : index
      %7 = vector.load %arg2[%c0_3, %c0_4, %c0_5] : memref<1x4x1024xf32, #tpu.memory_space<vmem>>, vector<1x4x1024xf32>
      %8 = vector.shape_cast %7 : vector<1x4x1024xf32> to vector<4x1024xf32>
      %cst = arith.constant dense<0.000000e+00> : vector<8x1024xf32>
      %9 = tpu.matmul %6, %8, %cst {dimension_numbers = #tpu.dot_dimension_numbers<[1], [0], [0], [1], [0, 0, 1, 1], [], []>} : vector<8x4xf32>, vector<4x1024xf32>, vector<8x1024xf32> -> vector<8x1024xf32>
      %10 = arith.truncf %9 : vector<8x1024xf32> to vector<8x1024xbf16>
      %c0_6 = arith.constant 0 : index
      %c0_7 = arith.constant 0 : index
      %c0_8 = arith.constant 0 : index
      %11 = vector.load %arg5[%c0_6, %c0_7, %c0_8] : memref<1x8x1024xbf16, #tpu.memory_space<vmem>>, vector<1x8x1024xbf16>
      %12 = vector.shape_cast %11 : vector<1x8x1024xbf16> to vector<8x1024xbf16>
      %13 = vector.shape_cast %10 : vector<8x1024xbf16> to vector<1x8x1024xbf16>
      tpu.vector_store %arg5[%c0_6, %c0_7, %c0_8], %13 {strides = array<i32>} : memref<1x8x1024xbf16, #tpu.memory_space<vmem>>, vector<1x8x1024xbf16>,
    } else {
    }
    return
  }
  func.func @transform_0(%arg0: i32, %arg1: i32) -> (i32, i32, i32) {
    %c0_i32 = arith.constant 0 : i32
    %c0_i32_0 = arith.constant 0 : i32
    return %arg0, %c0_i32, %arg1 : i32, i32, i32
  }
  func.func @transform_1(%arg0: i32, %arg1: i32) -> (i32, i32, i32, i32) {
    %c0_i32 = arith.constant 0 : i32
    %c0_i32_0 = arith.constant 0 : i32
    %c0_i32_1 = arith.constant 0 : i32
    %c0_i32_2 = arith.constant 0 : i32
    return %arg1, %c0_i32, %c0_i32_0, %c0_i32_1 : i32, i32, i32, i32
  }
  func.func @transform_2(%arg0: i32, %arg1: i32) -> (i32, i32) {
    %c0_i32 = arith.constant 0 : i32
    %c0_i32_0 = arith.constant 0 : i32
    %c0_i32_1 = arith.constant 0 : i32
    return %c0_i32, %c0_i32_0 : i32, i32
  }
  func.func @transform_3(%arg0: i32, %arg1: i32) -> (i32, i32, i32) {
    %c0_i32 = arith.constant 0 : i32
    %c0_i32_0 = arith.constant 0 : i32
    return %arg0, %c0_i32, %arg1 : i32, i32, i32
  }
}

</mosaic_0001>

<llo_original>
// kernel: tpu_custom_call.1
$region0: #{tpu_custom_call.1}
  #allocation0 [shape = 'u32[]', space=smem, size = 0x4, offset = 0x4, fixed_abs, tag = 'smem constant byte address 0x4 - core index']
  #allocation1 [shape = 'u32[144,128]{1,0:T(1,128)}', space=vmem, size = 0x12000, scoped, tag = 'internal scratch']
  %s0 = inlined_call_operand.vmem [shape: f32[4,4,1024], index: 0, kind: input, shape index: {}]
  %s1 = inlined_call_operand.vmem [shape: f32[4,9,8,4], index: 1, kind: input, shape index: {}]
  %s2 = inlined_call_operand.vmem [shape: f32[8,4], index: 2, kind: input, shape index: {}]
  %s3 = inlined_call_operand.hbm [shape: bf16[4,8,1024], index: 3, kind: output, shape index: {}]
  %s4 = sld [smem:[#allocation0]]
  $region53: #{tpu_custom_call.1} parent=0
    _
  %s6 = ssub.s32 1, %s4
  %s7 = scalar_select 0, %s6, %s4
  $region1: #{tpu_custom_call.1} parent=0
    #allocation2 [shape = 'u8[32768]{0}', space=vmem, size = 0x8000, scoped, tag = 'output window, operand 0']
    #allocation3 [shape = 's32[2]{0}', space=sflag, size = 0x8, scoped, tag = 'scoped memory for tpu_custom_call.1']
    %8 = vsyncpa [#allocation3], 0
    %s9 = scalar_lea.sflag [#allocation3], 1
    %10 = vsyncpa %s9, 0
    loop: start=0, step=1, limit=6
    $region2: #{tpu_custom_call.1} parent=1 // loop_pre_header
      _
    $region3: #{tpu_custom_call.1} parent=1 // loop_header
      %s12 = sphi 0, %s16
      %p13 = scmp.ge.s32.totalorder %s12, 6
      %s19 = sphi 0, %s31
      %s20 = sphi 0, %s27
      %s21 = sphi 0, %s19
      %s22 = sphi 0, %s20
      %s23 = sphi 0, %s21
      %s24 = sphi 0, %s22
      %s36 = sphi 0, %s38
      %s39 = sphi 0, %s36
      %s40 = sphi 0, %s39
      %s56 = sphi 0, %s40
      %s62 = sphi 0, %s64
      %s65 = sphi 0, %s62
      %s66 = sphi 0, %s65
      %s82 = sphi 0, %s66
      %s86 = sphi 0, %s86
      %s88 = sphi 0, %s86
      %s89 = sphi 0, %s88
      %s103 = sphi 0, %s89
      %s111 = sphi 0, %s113
      %s114 = sphi 0, %s111
      %s115 = sphi 0, %s114
      %s131 = sphi 0, %s115
    $region4: #{tpu_custom_call.1} parent=1 // loop_header_branch
      %15 = sbr.rel (%p13) target = $region8
    $region5: #{tpu_custom_call.1} parent=1 // loop_body
      %s17 = ssub.s32 %s12, 1
      %s18 = ssub.s32 %s12, 2
      %s25 = sadd.s32 1, %s20
      %p26 = scmp.ge.s32.totalorder %s25, 1
      %s27 = scalar_select %p26, 0, %s25
      %s28 = sadd.s32 1, %s19
      %s29 = scalar_select %p26, %s28, %s19
      %p30 = scmp.ge.s32.totalorder %s29, 4
      %s31 = scalar_select %p30, 0, %s29
      %s32 = ssub.s32 %s19, %s31
      %s33 = ssub.s32 %s20, %s27
      %s34 = sor.u32 %s32, %s33
      %p35 = scmp.eq.s32.totalorder %s34, 0
      %s37 = sadd.s32 %s36, 1
      %s38 = scalar_select %p35, %s36, %s37
      %p41 = pneg %p35
      %p42 = scmp.eq.s32.totalorder %s12, 3
      %p43 = por %p41, %p42
      %p44 = scmp.ne.s32.totalorder %s36, %s39
      %p45 = scmp.eq.s32.totalorder %s12, 0
      %p46 = por %p44, %p45
      %p47 = scmp.ne.s32.totalorder %s36, %s39
      %p48 = scmp.eq.s32.totalorder %s17, 3
      %p49 = por %p47, %p48
      %p50 = scmp.ne.s32.totalorder %s39, %s40
      %p51 = scmp.eq.s32.totalorder %s17, 0
      %p52 = por %p50, %p51
      %p53 = scmp.ne.s32.totalorder %s39, %s40
      %p54 = scmp.eq.s32.totalorder %s18, 3
      %p55 = por %p53, %p54
      %p57 = scmp.ne.s32.totalorder %s40, %s56
      %p58 = scmp.eq.s32.totalorder %s18, 0
      %p59 = por %p57, %p58
      %s60 = ssub.s32 %s20, %s27
      %p61 = scmp.eq.s32.totalorder %s60, 0
      %s63 = sadd.s32 %s62, 1
      %s64 = scalar_select %p61, %s62, %s63
      %p67 = pneg %p61
      %p68 = scmp.eq.s32.totalorder %s12, 3
      %p69 = por %p67, %p68
      %p70 = scmp.ne.s32.totalorder %s62, %s65
      %p71 = scmp.eq.s32.totalorder %s12, 0
      %p72 = por %p70, %p71
      %p73 = scmp.ne.s32.totalorder %s62, %s65
      %p74 = scmp.eq.s32.totalorder %s17, 3
      %p75 = por %p73, %p74
      %p76 = scmp.ne.s32.totalorder %s65, %s66
      %p77 = scmp.eq.s32.totalorder %s17, 0
      %p78 = por %p76, %p77
      %p79 = scmp.ne.s32.totalorder %s65, %s66
      %p80 = scmp.eq.s32.totalorder %s18, 3
      %p81 = por %p79, %p80
      %p83 = scmp.ne.s32.totalorder %s66, %s82
      %p84 = scmp.eq.s32.totalorder %s18, 0
      %p85 = por %p83, %p84
      %s87 = sadd.s32 %s86, 1
      %p90 = scmp.eq.s32.totalorder %s12, 3
      %p91 = scmp.ne.s32.totalorder %s86, %s88
      %p92 = scmp.eq.s32.totalorder %s12, 0
      %p93 = por %p91, %p92
      %p94 = scmp.ne.s32.totalorder %s86, %s88
      %p95 = scmp.eq.s32.totalorder %s17, 3
      %p96 = por %p94, %p95
      %p97 = scmp.ne.s32.totalorder %s88, %s89
      %p98 = scmp.eq.s32.totalorder %s17, 0
      %p99 = por %p97, %p98
      %p100 = scmp.ne.s32.totalorder %s88, %s89
      %p101 = scmp.eq.s32.totalorder %s18, 3
      %p102 = por %p100, %p101
      %p104 = scmp.ne.s32.totalorder %s89, %s103
      %p105 = scmp.eq.s32.totalorder %s18, 0
      %p106 = por %p104, %p105
      %s107 = ssub.s32 %s19, %s31
      %s108 = ssub.s32 %s20, %s27
      %s109 = sor.u32 %s107, %s108
      %p110 = scmp.eq.s32.totalorder %s109, 0
      %s112 = sadd.s32 %s111, 1
      %s113 = scalar_select %p110, %s111, %s112
      %p116 = pneg %p110
      %p117 = scmp.eq.s32.totalorder %s12, 3
      %p118 = por %p116, %p117
      %p119 = scmp.ne.s32.totalorder %s111, %s114
      %p120 = scmp.eq.s32.totalorder %s12, 0
      %p121 = por %p119, %p120
      %p122 = scmp.ne.s32.totalorder %s111, %s114
      %p123 = scmp.eq.s32.totalorder %s17, 3
      %p124 = por %p122, %p123
      %p125 = scmp.ne.s32.totalorder %s114, %s115
      %p126 = scmp.eq.s32.totalorder %s17, 0
      %p127 = por %p125, %p126
      %p128 = scmp.ne.s32.totalorder %s114, %s115
      %p129 = scmp.eq.s32.totalorder %s18, 3
      %p130 = por %p128, %p129
      %p132 = scmp.ne.s32.totalorder %s115, %s131
      %p133 = scmp.eq.s32.totalorder %s18, 0
      %p134 = por %p132, %p133
      %p135 = scmp.le.s32.totalorder 1, %s12
      %p136 = scmp.lt.s32.totalorder %s12, 5
      %p137 = pnand %p135, %p136
      %p138 = pneg %p137
      // Predicated region
      $region9: #{tpu_custom_call.1} parent=5 // pred_check
        _
      $region10: #{tpu_custom_call.1} parent=5 // pred_check_branch
        %140 = sbr.rel (%p137) target = $region12
      $region11: #{tpu_custom_call.1} parent=5 // pred_region
        %s141 = ssub.s32 %s12, 1
        // Predicated region
        $region13: #{tpu_custom_call.1} parent=11 // pred_check
          %p142 = pneg %p78
        $region14: #{tpu_custom_call.1} parent=11 // pred_check_branch
          %144 = sbr.rel (%p142) target = $region16
        $region15: #{tpu_custom_call.1} parent=11 // pred_region
          %s145 = smul.u32 4, %s22
          %p146 = scmp.lt.s32.totalorder %s145, 3
          %s147 = scalar_select %p146, %s145, 3
          %s148 = smul.addr %s147, 9
          %s149 = smul.addr %s148, 8
          %s150 = scalar_lea.vmem %s1, %s149
          %s151 = smul.u32 4, %s22
        $region16: #{tpu_custom_call.1} parent=11 // pred_fallthru
          _
        // Predicated region
        $region17: #{tpu_custom_call.1} parent=11 // pred_check
          %p152 = pneg %p99
        $region18: #{tpu_custom_call.1} parent=11 // pred_check_branch
          %154 = sbr.rel (%p152) target = $region20
        $region19: #{tpu_custom_call.1} parent=11 // pred_region
          _
        $region20: #{tpu_custom_call.1} parent=11 // pred_fallthru
          _
      $region12: #{tpu_custom_call.1} parent=5 // pred_fallthru
        _
      %p155 = scmp.lt.s32.totalorder %s12, 4
      // Predicated region
      $region21: #{tpu_custom_call.1} parent=5 // pred_check
        %p156 = pneg %p155
      $region22: #{tpu_custom_call.1} parent=5 // pred_check_branch
        %158 = sbr.rel (%p156) target = $region24
      $region23: #{tpu_custom_call.1} parent=5 // pred_region
        // Predicated region
        $region25: #{tpu_custom_call.1} parent=23 // pred_check
          %p159 = pneg %p46
        $region26: #{tpu_custom_call.1} parent=23 // pred_check_branch
          %161 = sbr.rel (%p159) target = $region28
        $region27: #{tpu_custom_call.1} parent=23 // pred_region
          %s162 = smul.u32 8, %s20
          %p163 = scmp.lt.s32.totalorder %s19, 3
          %s164 = scalar_select %p163, %s19, 3
          %p165 = scmp.lt.s32.totalorder %s162, 7
          %s166 = scalar_select %p165, %s162, 7
          %s167 = smul.addr %s164, 8
          %s168 = sadd.s32 %s166, %s167
          %s169 = smul.addr %s168, 4
          %s170 = scalar_lea.vmem %s0, %s169
          %s171 = smul.u32 8, %s20
        $region28: #{tpu_custom_call.1} parent=23 // pred_fallthru
          _
      $region24: #{tpu_custom_call.1} parent=5 // pred_fallthru
        _
      %p172 = scmp.le.s32.totalorder 1, %s12
      %p173 = scmp.lt.s32.totalorder %s12, 5
      %p174 = pnand %p172, %p173
      %p175 = pneg %p174
      // Predicated region
      $region29: #{tpu_custom_call.1} parent=5 // pred_check
        _
      $region30: #{tpu_custom_call.1} parent=5 // pred_check_branch
        %177 = sbr.rel (%p174) target = $region32
      $region31: #{tpu_custom_call.1} parent=5 // pred_region
        %s178 = ssub.s32 %s12, 1
        %s179 = smul.u32 8, %s22
        %p180 = scmp.lt.s32.totalorder %s21, 3
        %s181 = scalar_select %p180, %s21, 3
        %p182 = scmp.lt.s32.totalorder %s179, 7
        %s183 = scalar_select %p182, %s179, 7
        %s184 = smul.addr %s181, 8
        %s185 = sadd.s32 %s183, %s184
        %s186 = smul.addr %s185, 4
        %s187 = scalar_lea.vmem %s0, %s186
        %p188 = pneg %p52
        %p189 = pneg %p49
        %s190 = smul.u32 4, %s22
        %p191 = scmp.lt.s32.totalorder %s190, 3
        %s192 = scalar_select %p191, %s190, 3
        %s193 = smul.addr %s192, 9
        %s194 = smul.addr %s193, 8
        %s195 = scalar_lea.vmem %s1, %s194
        %p196 = pneg %p78
        %p197 = pneg %p75
        %p198 = pneg %p99
        %p199 = pneg %p96
        %p200 = pneg %p127
        %p201 = pneg %p124
        %s202 = sand.u32 %s114, 1
        %s203 = scalar_lea.sflag [#allocation3], %s202
        %s204 = sand.u32 %s114, 1
        %s205 = smul.addr %s204, 32
        %s206 = scalar_lea.vmem [#allocation2], %s205
        %s207 = smul.u32 8, %s22
        %p208 = scmp.lt.s32.totalorder %s21, 3
        %s209 = scalar_select %p208, %s21, 3
        %p210 = scmp.lt.s32.totalorder %s207, 7
        %s211 = scalar_select %p210, %s207, 7
        %s212 = smul.addr %s209, 8
        %s213 = sadd.s32 %s211, %s212
        %s214 = smul.addr %s213, 4
        %s215 = scalar_lea.vmem %s0, %s214
        %s216 = smul.u32 8, %s22
        %s217 = smul.u32 4, %s22
        %p218 = scmp.lt.s32.totalorder %s217, 3
        %s219 = scalar_select %p218, %s217, 3
        %s220 = smul.addr %s219, 9
        %s221 = smul.addr %s220, 8
        %s222 = scalar_lea.vmem %s1, %s221
        %s223 = smul.u32 4, %s22
        %s224 = smul.u32 8, %s22
        %p225 = scmp.lt.s32.totalorder %s21, 2
        // Predicated region
        $region33: #{tpu_custom_call.1} parent=31 // pred_check
          %p226 = pneg %p225
        $region34: #{tpu_custom_call.1} parent=31 // pred_check_branch
          %228 = sbr.rel (%p226) target = $region36
        $region35: #{tpu_custom_call.1} parent=31 // pred_region
          %v229 = vlaneseq
          %v230 = vand.u32 %v229, 127
          %v231 = vadd.s32 %v230, 128
          %vm232 = vcmp.lt.s32.totalorder %v230, 0
          %v233 = vsub.s32 0, %v230
          %v234 = vsel %vm232, %v233, %v230
          %v235 = vshrl.u32 %v234, 4
          %v236 = vand.u32 %v234, 15
          %v237 = vsub.s32 0, %v236
          %v238 = vsel %vm232, %v237, %v236
          %vm239 = vcmp.lt.s32.totalorder %v231, 0
          %v240 = vsub.s32 0, %v231
          %v241 = vsel %vm239, %v240, %v231
          %v242 = vshrl.u32 %v241, 4
          %v243 = vand.u32 %v241, 15
          %v244 = vsub.s32 0, %v243
          %v245 = vsel %vm239, %v244, %v243
          %vm246 = vcmp.ne.s32.totalorder %v238, 0
          %vm247 = vcmp.ne.s32.totalorder %v245, 0
          %vm248 = vcmp.lt.s32.totalorder %v238, 0
          %vm249 = vcmp.lt.s32.totalorder %v245, 0
          %vm250 = vmand %vm248, %vm246
          %vm251 = vmand %vm249, %vm247
          %v252 = vadd.s32 %v238, 16
          %v253 = vadd.s32 %v245, 16
          %v254 = vsel %vm250, %v252, %v238
          %v255 = vsel %vm251, %v253, %v245
          %vm256 = vcmp.eq.s32.totalorder %v254, 0
          %vm257 = vcmp.eq.s32.totalorder %v255, 0
          %vm258 = vcmp.eq.s32.totalorder %v254, 15
          %vm259 = vcmp.eq.s32.totalorder %v255, 15
          %v260 = vld [vmem:[%s215] sm:$0xff]
          %v262 = vcombine.high %v260, %v260
          %264 = vrot.lane.b32.xlu0 %v260, 113
          %v265 = vpop.permute.xlu0 %264
          %266 = vrot.lane.b32.xlu0 %v262, 113
          %v267 = vpop.permute.xlu0 %266
          %vm268 = vcmp.lt.s32.totalorder %v230, 113
          %v269 = vsel %vm268, %v265, %v267
          %v270 = vsel %vm268, %v267, %v265
          %271 = vrot.lane.b32.xlu0 %v260, 1
          %v272 = vpop.permute.xlu0 %271
          %273 = vrot.lane.b32.xlu0 %v262, 1
          %v274 = vpop.permute.xlu0 %273
          %vm275 = vcmp.lt.s32.totalorder %v230, 1
          %v276 = vsel %vm275, %v272, %v274
          %v277 = vsel %vm275, %v274, %v272
          %v278 = vsel %vm256, 1, 0
          %v279 = vsel %vm257, 1, 0
          %vm280 = vcmp.eq.s32.totalorder %v278, 1
          %vm281 = vcmp.eq.s32.totalorder %v279, 1
          %v282 = vsel %vm280, %v269, %v277
          %v283 = vsel %vm281, %v270, %v276
          %284 = vrot.lane.b32.xlu0 %v260, 15
          %v285 = vpop.permute.xlu0 %284
          %286 = vrot.lane.b32.xlu0 %v262, 15
          %v287 = vpop.permute.xlu0 %286
          %vm288 = vcmp.lt.s32.totalorder %v230, 15
          %v289 = vsel %vm288, %v285, %v287
          %v290 = vsel %vm288, %v287, %v285
          %291 = vrot.lane.b32.xlu0 %v260, 127
          %v292 = vpop.permute.xlu0 %291
          %293 = vrot.lane.b32.xlu0 %v262, 127
          %v294 = vpop.permute.xlu0 %293
          %vm295 = vcmp.lt.s32.totalorder %v230, 127
          %v296 = vsel %vm295, %v292, %v294
          %v297 = vsel %vm295, %v294, %v292
          %v298 = vsel %vm258, 1, 0
          %v299 = vsel %vm259, 1, 0
          %vm300 = vcmp.eq.s32.totalorder %v298, 1
          %vm301 = vcmp.eq.s32.totalorder %v299, 1
          %v302 = vsel %vm300, %v290, %v296
          %v303 = vsel %vm301, %v289, %v297
          %304 = vrot.lane.b32.xlu0 %v282, 16
          %v305 = vpop.permute.xlu0 %304
          %306 = vrot.lane.b32.xlu0 %v283, 16
          %v307 = vpop.permute.xlu0 %306
          %vm308 = vcmp.lt.s32.totalorder %v230, 16
          %v309 = vsel %vm308, %v305, %v307
          %v310 = vsel %vm308, %v307, %v305
          %v311 = vld [vmem:[%s222] sm:$0xff]
          %312 = vrot.lane.b32.xlu0 %v260, 16
          %v313 = vpop.permute.xlu0 %312
          %314 = vrot.lane.b32.xlu0 %v262, 16
          %v315 = vpop.permute.xlu0 %314
          %v316 = vsel %vm308, %v313, %v315
          %v317 = vsel %vm308, %v315, %v313
          %s318 = scalar_lea.vmem %s222, 8
          %v319 = vld [vmem:[%s318] sm:$0xff]
          %vm320 = vcmask 31744
          %v322 = vsel %vm320, %v319, 0
          %vm324 = vcmask 1043456
          %v326 = vsel %vm324, %v317, 0
          %v329 = vsel %vm324, %v316, 0
          %331 = vmatprep.subr.mxu0 %v329
          %332 = vmatpush1.msra.mxu0 %v326
          %333 = vmatprep.subr.mxu0 0.0
          %334 = vmatpush1.msra.mxu0 0.0
          %335 = vmatprep.subr.mxu0 0.0
          %336 = vmatpush1.msra.mxu0 0.0
          %337 = vmatprep.subr.mxu0 0.0
          %338 = vmatpush1.msra.mxu0 0.0
          %339 = vmatprep.subr.mxu0 0.0
          %340 = vmatpush1.msra.mxu0 0.0
          %341 = vmatprep.subr.mxu0 0.0
          %342 = vmatpush1.msra.mxu0 0.0
          %343 = vmatprep.subr.mxu0 0.0
          %344 = vmatpush1.msra.mxu0 0.0
          %345 = vmatprep.subr.mxu0 0.0
          %346 = vmatpush1.msra.mxu0 0.0
          %347 = vmatprep.subr.mxu0 0.0
          %348 = vmatpush1.msra.mxu0 0.0
          %349 = vmatprep.subr.mxu0 0.0
          %350 = vmatpush1.msra.mxu0 0.0
          %351 = vmatprep.subr.mxu0 0.0
          %352 = vmatpush1.msra.mxu0 0.0
          %353 = vmatprep.subr.mxu0 0.0
          %354 = vmatpush1.msra.mxu0 0.0
          %355 = vmatprep.subr.mxu0 0.0
          %356 = vmatpush1.msra.mxu0 0.0
          %357 = vmatprep.subr.mxu0 0.0
          %358 = vmatpush1.msra.mxu0 0.0
          %359 = vmatprep.subr.mxu0 0.0
          %360 = vmatpush1.msra.mxu0 0.0
          %361 = vmatprep.subr.mxu0 0.0
          %362 = vmatpush1.msra.mxu0 0.0
          %363 = vmatprep.subr.mxu0 0.0
          %364 = vmatpush1.msra.mxu0 0.0
          %365 = vmatprep.subr.mxu0 0.0
          %366 = vmatpush1.msra.mxu0 0.0
          %367 = vmatprep.subr.mxu0 0.0
          %368 = vmatpush1.msra.mxu0 0.0
          %369 = vmatprep.subr.mxu0 0.0
          %370 = vmatpush1.msra.mxu0 0.0
          %371 = vmatprep.subr.mxu0 0.0
          %372 = vmatpush1.msra.mxu0 0.0
          %373 = vmatprep.subr.mxu0 0.0
          %374 = vmatpush1.msra.mxu0 0.0
          %375 = vmatprep.subr.mxu0 0.0
          %376 = vmatpush1.msra.mxu0 0.0
          %377 = vmatprep.subr.mxu0 0.0
          %378 = vmatpush1.msra.mxu0 0.0
          %379 = vmatprep.subr.mxu0 0.0
          %380 = vmatpush1.msra.mxu0 0.0
          %381 = vmatprep.subr.mxu0 0.0
          %382 = vmatpush1.msra.mxu0 0.0
          %383 = vmatprep.subr.mxu0 0.0
          %384 = vmatpush1.msra.mxu0 0.0
          %385 = vmatprep.subr.mxu0 0.0
          %386 = vmatpush1.msra.mxu0 0.0
          %387 = vmatprep.subr.mxu0 0.0
          %388 = vmatpush1.msra.mxu0 0.0
          %389 = vmatprep.subr.mxu0 0.0
          %390 = vmatpush1.msra.mxu0 0.0
          %391 = vmatprep.subr.mxu0 0.0
          %392 = vmatpush1.msra.mxu0 0.0
          %393 = vmatprep.subr.mxu0 0.0
          %394 = vmatpush1.msra.mxu0 0.0
          %395 = vmatprep.mubr.f32.mxu0 0.0
          %396 = vmatmul.mubr.f32.gmra.mrb[0].mxu0 %v322
          %v397 = vpop.f32.mrb[0].mxu0
          %v398 = vadd.f32 0.0, %v397
          %v399 = vpop.f32.mrb[0].mxu0
          %v400 = vadd.f32 0.0, %v399
          %401 = vdwg.mxu0
          %v403 = vsel %vm320, %v311, 0
          %v406 = vsel %vm324, %v310, 0
          %v409 = vsel %vm324, %v309, 0
          %411 = vmatprep.subr.mxu0 %v409
          %412 = vmatpush1.msra.mxu0 %v406
          %413 = vmatprep.subr.mxu0 0.0
          %414 = vmatpush1.msra.mxu0 0.0
          %415 = vmatprep.subr.mxu0 0.0
          %416 = vmatpush1.msra.mxu0 0.0
          %417 = vmatprep.subr.mxu0 0.0
          %418 = vmatpush1.msra.mxu0 0.0
          %419 = vmatprep.subr.mxu0 0.0
          %420 = vmatpush1.msra.mxu0 0.0
          %421 = vmatprep.subr.mxu0 0.0
          %422 = vmatpush1.msra.mxu0 0.0
          %423 = vmatprep.subr.mxu0 0.0
          %424 = vmatpush1.msra.mxu0 0.0
          %425 = vmatprep.subr.mxu0 0.0
          %426 = vmatpush1.msra.mxu0 0.0
          %427 = vmatprep.subr.mxu0 0.0
          %428 = vmatpush1.msra.mxu0 0.0
          %429 = vmatprep.subr.mxu0 0.0
          %430 = vmatpush1.msra.mxu0 0.0
          %431 = vmatprep.subr.mxu0 0.0
          %432 = vmatpush1.msra.mxu0 0.0
          %433 = vmatprep.subr.mxu0 0.0
          %434 = vmatpush1.msra.mxu0 0.0
          %435 = vmatprep.subr.mxu0 0.0
          %436 = vmatpush1.msra.mxu0 0.0
          %437 = vmatprep.subr.mxu0 0.0
          %438 = vmatpush1.msra.mxu0 0.0
          %439 = vmatprep.subr.mxu0 0.0
          %440 = vmatpush1.msra.mxu0 0.0
          %441 = vmatprep.subr.mxu0 0.0
          %442 = vmatpush1.msra.mxu0 0.0
          %443 = vmatprep.subr.mxu0 0.0
          %444 = vmatpush1.msra.mxu0 0.0
          %445 = vmatprep.subr.mxu0 0.0
          %446 = vmatpush1.msra.mxu0 0.0
          %447 = vmatprep.subr.mxu0 0.0
          %448 = vmatpush1.msra.mxu0 0.0
          %449 = vmatprep.subr.mxu0 0.0
          %450 = vmatpush1.msra.mxu0 0.0
          %451 = vmatprep.subr.mxu0 0.0
          %452 = vmatpush1.msra.mxu0 0.0
          %453 = vmatprep.subr.mxu0 0.0
          %454 = vmatpush1.msra.mxu0 0.0
          %455 = vmatprep.subr.mxu0 0.0
          %456 = vmatpush1.msra.mxu0 0.0
          %457 = vmatprep.subr.mxu0 0.0
          %458 = vmatpush1.msra.mxu0 0.0
          %459 = vmatprep.subr.mxu0 0.0
          %460 = vmatpush1.msra.mxu0 0.0
          %461 = vmatprep.subr.mxu0 0.0
          %462 = vmatpush1.msra.mxu0 0.0
          %463 = vmatprep.subr.mxu0 0.0
          %464 = vmatpush1.msra.mxu0 0.0
          %465 = vmatprep.subr.mxu0 0.0
          %466 = vmatpush1.msra.mxu0 0.0
          %467 = vmatprep.subr.mxu0 0.0
          %468 = vmatpush1.msra.mxu0 0.0
          %469 = vmatprep.subr.mxu0 0.0
          %470 = vmatpush1.msra.mxu0 0.0
          %471 = vmatprep.subr.mxu0 0.0
          %472 = vmatpush1.msra.mxu0 0.0
          %473 = vmatprep.subr.mxu0 0.0
          %474 = vmatpush1.msra.mxu0 0.0
          %475 = vmatprep.mubr.f32.mxu0 0.0
          %476 = vmatmul.mubr.f32.gmra.mrb[0].mxu0 %v403
          %v477 = vpop.f32.mrb[0].mxu0
          %v478 = vadd.f32 %v398, %v477
          %v479 = vpop.f32.mrb[0].mxu0
          %v480 = vadd.f32 %v400, %v479
          %481 = vdwg.mxu0
          %482 = vrot.lane.b32.xlu0 %v302, 16
          %v483 = vpop.permute.xlu0 %482
          %484 = vrot.lane.b32.xlu0 %v303, 16
          %v485 = vpop.permute.xlu0 %484
          %v486 = vsel %vm308, %v483, %v485
          %v487 = vsel %vm308, %v485, %v483
          %s488 = scalar_lea.vmem %s222, 16
          %v489 = vld [vmem:[%s488] sm:$0xff]
          %v491 = vsel %vm320, %v489, 0
          %v494 = vsel %vm324, %v487, 0
          %v497 = vsel %vm324, %v486, 0
          %499 = vmatprep.subr.mxu0 %v497
          %500 = vmatpush1.msra.mxu0 %v494
          %501 = vmatprep.subr.mxu0 0.0
          %502 = vmatpush1.msra.mxu0 0.0
          %503 = vmatprep.subr.mxu0 0.0
          %504 = vmatpush1.msra.mxu0 0.0
          %505 = vmatprep.subr.mxu0 0.0
          %506 = vmatpush1.msra.mxu0 0.0
          %507 = vmatprep.subr.mxu0 0.0
          %508 = vmatpush1.msra.mxu0 0.0
          %509 = vmatprep.subr.mxu0 0.0
          %510 = vmatpush1.msra.mxu0 0.0
          %511 = vmatprep.subr.mxu0 0.0
          %512 = vmatpush1.msra.mxu0 0.0
          %513 = vmatprep.subr.mxu0 0.0
          %514 = vmatpush1.msra.mxu0 0.0
          %515 = vmatprep.subr.mxu0 0.0
          %516 = vmatpush1.msra.mxu0 0.0
          %517 = vmatprep.subr.mxu0 0.0
          %518 = vmatpush1.msra.mxu0 0.0
          %519 = vmatprep.subr.mxu0 0.0
          %520 = vmatpush1.msra.mxu0 0.0
          %521 = vmatprep.subr.mxu0 0.0
          %522 = vmatpush1.msra.mxu0 0.0
          %523 = vmatprep.subr.mxu0 0.0
          %524 = vmatpush1.msra.mxu0 0.0
          %525 = vmatprep.subr.mxu0 0.0
          %526 = vmatpush1.msra.mxu0 0.0
          %527 = vmatprep.subr.mxu0 0.0
          %528 = vmatpush1.msra.mxu0 0.0
          %529 = vmatprep.subr.mxu0 0.0
          %530 = vmatpush1.msra.mxu0 0.0
          %531 = vmatprep.subr.mxu0 0.0
          %532 = vmatpush1.msra.mxu0 0.0
          %533 = vmatprep.subr.mxu0 0.0
          %534 = vmatpush1.msra.mxu0 0.0
          %535 = vmatprep.subr.mxu0 0.0
          %536 = vmatpush1.msra.mxu0 0.0
          %537 = vmatprep.subr.mxu0 0.0
          %538 = vmatpush1.msra.mxu0 0.0
          %539 = vmatprep.subr.mxu0 0.0
          %540 = vmatpush1.msra.mxu0 0.0
          %541 = vmatprep.subr.mxu0 0.0
          %542 = vmatpush1.msra.mxu0 0.0
          %543 = vmatprep.subr.mxu0 0.0
          %544 = vmatpush1.msra.mxu0 0.0
          %545 = vmatprep.subr.mxu0 0.0
          %546 = vmatpush1.msra.mxu0 0.0
          %547 = vmatprep.subr.mxu0 0.0
          %548 = vmatpush1.msra.mxu0 0.0
          %549 = vmatprep.subr.mxu0 0.0
          %550 = vmatpush1.msra.mxu0 0.0
          %551 = vmatprep.subr.mxu0 0.0
          %552 = vmatpush1.msra.mxu0 0.0
          %553 = vmatprep.subr.mxu0 0.0
          %554 = vmatpush1.msra.mxu0 0.0
          %555 = vmatprep.subr.mxu0 0.0
          %556 = vmatpush1.msra.mxu0 0.0
          %557 = vmatprep.subr.mxu0 0.0
          %558 = vmatpush1.msra.mxu0 0.0
          %559 = vmatprep.subr.mxu0 0.0
          %560 = vmatpush1.msra.mxu0 0.0
          %561 = vmatprep.subr.mxu0 0.0
          %562 = vmatpush1.msra.mxu0 0.0
          %563 = vmatprep.mubr.f32.mxu0 0.0
          %564 = vmatmul.mubr.f32.gmra.mrb[0].mxu0 %v491
          %v565 = vpop.f32.mrb[0].mxu0
          %v566 = vadd.f32 0.0, %v565
          %v567 = vpop.f32.mrb[0].mxu0
          %v568 = vadd.f32 0.0, %v567
          %569 = vdwg.mxu0
          %v570 = vadd.f32 %v478, %v566
          %v571 = vadd.f32 %v480, %v568
          %s572 = scalar_lea.vmem %s222, 24
          %v573 = vld [vmem:[%s572] sm:$0xff]
          %v575 = vsel %vm320, %v573, 0
          %v578 = vsel %vm324, %v282, 0
          %v581 = vsel %vm324, %v283, 0
          %583 = vmatprep.subr.mxu0 %v581
          %584 = vmatpush1.msra.mxu0 %v578
          %585 = vmatprep.subr.mxu0 0.0
          %586 = vmatpush1.msra.mxu0 0.0
          %587 = vmatprep.subr.mxu0 0.0
          %588 = vmatpush1.msra.mxu0 0.0
          %589 = vmatprep.subr.mxu0 0.0
          %590 = vmatpush1.msra.mxu0 0.0
          %591 = vmatprep.subr.mxu0 0.0
          %592 = vmatpush1.msra.mxu0 0.0
          %593 = vmatprep.subr.mxu0 0.0
          %594 = vmatpush1.msra.mxu0 0.0
          %595 = vmatprep.subr.mxu0 0.0
          %596 = vmatpush1.msra.mxu0 0.0
          %597 = vmatprep.subr.mxu0 0.0
          %598 = vmatpush1.msra.mxu0 0.0
          %599 = vmatprep.subr.mxu0 0.0
          %600 = vmatpush1.msra.mxu0 0.0
          %601 = vmatprep.subr.mxu0 0.0
          %602 = vmatpush1.msra.mxu0 0.0
          %603 = vmatprep.subr.mxu0 0.0
          %604 = vmatpush1.msra.mxu0 0.0
          %605 = vmatprep.subr.mxu0 0.0
          %606 = vmatpush1.msra.mxu0 0.0
          %607 = vmatprep.subr.mxu0 0.0
          %608 = vmatpush1.msra.mxu0 0.0
          %609 = vmatprep.subr.mxu0 0.0
          %610 = vmatpush1.msra.mxu0 0.0
          %611 = vmatprep.subr.mxu0 0.0
          %612 = vmatpush1.msra.mxu0 0.0
          %613 = vmatprep.subr.mxu0 0.0
          %614 = vmatpush1.msra.mxu0 0.0
          %615 = vmatprep.subr.mxu0 0.0
          %616 = vmatpush1.msra.mxu0 0.0
          %617 = vmatprep.subr.mxu0 0.0
          %618 = vmatpush1.msra.mxu0 0.0
          %619 = vmatprep.subr.mxu0 0.0
          %620 = vmatpush1.msra.mxu0 0.0
          %621 = vmatprep.subr.mxu0 0.0
          %622 = vmatpush1.msra.mxu0 0.0
          %623 = vmatprep.subr.mxu0 0.0
          %624 = vmatpush1.msra.mxu0 0.0
          %625 = vmatprep.subr.mxu0 0.0
          %626 = vmatpush1.msra.mxu0 0.0
          %627 = vmatprep.subr.mxu0 0.0
          %628 = vmatpush1.msra.mxu0 0.0
          %629 = vmatprep.subr.mxu0 0.0
          %630 = vmatpush1.msra.mxu0 0.0
          %631 = vmatprep.subr.mxu0 0.0
          %632 = vmatpush1.msra.mxu0 0.0
          %633 = vmatprep.subr.mxu0 0.0
          %634 = vmatpush1.msra.mxu0 0.0
          %635 = vmatprep.subr.mxu0 0.0
          %636 = vmatpush1.msra.mxu0 0.0
          %637 = vmatprep.subr.mxu0 0.0
          %638 = vmatpush1.msra.mxu0 0.0
          %639 = vmatprep.subr.mxu0 0.0
          %640 = vmatpush1.msra.mxu0 0.0
          %641 = vmatprep.subr.mxu0 0.0
          %642 = vmatpush1.msra.mxu0 0.0
          %643 = vmatprep.subr.mxu0 0.0
          %644 = vmatpush1.msra.mxu0 0.0
          %645 = vmatprep.subr.mxu0 0.0
          %646 = vmatpush1.msra.mxu0 0.0
          %647 = vmatprep.mubr.f32.mxu0 0.0
          %648 = vmatmul.mubr.f32.gmra.mrb[0].mxu0 %v575
          %v649 = vpop.f32.mrb[0].mxu0
          %v650 = vadd.f32 0.0, %v649
          %v651 = vpop.f32.mrb[0].mxu0
          %v652 = vadd.f32 0.0, %v651
          %653 = vdwg.mxu0
          %v654 = vadd.f32 %v570, %v650
          %v655 = vadd.f32 %v571, %v652
          %s656 = scalar_lea.vmem %s222, 32
          %v657 = vld [vmem:[%s656] sm:$0xff]
          %v659 = vsel %vm320, %v657, 0
          %v661 = vsel %vm324, %v260, 0
          %v663 = vsel %vm324, %v262, 0
          %665 = vmatprep.subr.mxu0 %v663
          %666 = vmatpush1.msra.mxu0 %v661
          %667 = vmatprep.subr.mxu0 0.0
          %668 = vmatpush1.msra.mxu0 0.0
          %669 = vmatprep.subr.mxu0 0.0
          %670 = vmatpush1.msra.mxu0 0.0
          %671 = vmatprep.subr.mxu0 0.0
          %672 = vmatpush1.msra.mxu0 0.0
          %673 = vmatprep.subr.mxu0 0.0
          %674 = vmatpush1.msra.mxu0 0.0
          %675 = vmatprep.subr.mxu0 0.0
          %676 = vmatpush1.msra.mxu0 0.0
          %677 = vmatprep.subr.mxu0 0.0
          %678 = vmatpush1.msra.mxu0 0.0
          %679 = vmatprep.subr.mxu0 0.0
          %680 = vmatpush1.msra.mxu0 0.0
          %681 = vmatprep.subr.mxu0 0.0
          %682 = vmatpush1.msra.mxu0 0.0
          %683 = vmatprep.subr.mxu0 0.0
          %684 = vmatpush1.msra.mxu0 0.0
          %685 = vmatprep.subr.mxu0 0.0
          %686 = vmatpush1.msra.mxu0 0.0
          %687 = vmatprep.subr.mxu0 0.0
          %688 = vmatpush1.msra.mxu0 0.0
          %689 = vmatprep.subr.mxu0 0.0
          %690 = vmatpush1.msra.mxu0 0.0
          %691 = vmatprep.subr.mxu0 0.0
          %692 = vmatpush1.msra.mxu0 0.0
          %693 = vmatprep.subr.mxu0 0.0
          %694 = vmatpush1.msra.mxu0 0.0
          %695 = vmatprep.subr.mxu0 0.0
          %696 = vmatpush1.msra.mxu0 0.0
          %697 = vmatprep.subr.mxu0 0.0
          %698 = vmatpush1.msra.mxu0 0.0
          %699 = vmatprep.subr.mxu0 0.0
          %700 = vmatpush1.msra.mxu0 0.0
          %701 = vmatprep.subr.mxu0 0.0
          %702 = vmatpush1.msra.mxu0 0.0
          %703 = vmatprep.subr.mxu0 0.0
          %704 = vmatpush1.msra.mxu0 0.0
          %705 = vmatprep.subr.mxu0 0.0
          %706 = vmatpush1.msra.mxu0 0.0
          %707 = vmatprep.subr.mxu0 0.0
          %708 = vmatpush1.msra.mxu0 0.0
          %709 = vmatprep.subr.mxu0 0.0
          %710 = vmatpush1.msra.mxu0 0.0
          %711 = vmatprep.subr.mxu0 0.0
          %712 = vmatpush1.msra.mxu0 0.0
          %713 = vmatprep.subr.mxu0 0.0
          %714 = vmatpush1.msra.mxu0 0.0
          %715 = vmatprep.subr.mxu0 0.0
          %716 = vmatpush1.msra.mxu0 0.0
          %717 = vmatprep.subr.mxu0 0.0
          %718 = vmatpush1.msra.mxu0 0.0
          %719 = vmatprep.subr.mxu0 0.0
          %720 = vmatpush1.msra.mxu0 0.0
          %721 = vmatprep.subr.mxu0 0.0
          %722 = vmatpush1.msra.mxu0 0.0
          %723 = vmatprep.subr.mxu0 0.0
          %724 = vmatpush1.msra.mxu0 0.0
          %725 = vmatprep.subr.mxu0 0.0
          %726 = vmatpush1.msra.mxu0 0.0
          %727 = vmatprep.subr.mxu0 0.0
          %728 = vmatpush1.msra.mxu0 0.0
          %729 = vmatprep.mubr.f32.mxu0 0.0
          %730 = vmatmul.mubr.f32.gmra.mrb[0].mxu0 %v659
          %v731 = vpop.f32.mrb[0].mxu0
          %v732 = vadd.f32 0.0, %v731
          %v733 = vpop.f32.mrb[0].mxu0
          %v734 = vadd.f32 0.0, %v733
          %735 = vdwg.mxu0
          %v736 = vadd.f32 %v654, %v732
          %v737 = vadd.f32 %v655, %v734
          %s738 = scalar_lea.vmem %s222, 40
          %v739 = vld [vmem:[%s738] sm:$0xff]
          %v741 = vsel %vm320, %v739, 0
          %v744 = vsel %vm324, %v302, 0
          %v747 = vsel %vm324, %v303, 0
          %749 = vmatprep.subr.mxu0 %v747
          %750 = vmatpush1.msra.mxu0 %v744
          %751 = vmatprep.subr.mxu0 0.0
          %752 = vmatpush1.msra.mxu0 0.0
          %753 = vmatprep.subr.mxu0 0.0
          %754 = vmatpush1.msra.mxu0 0.0
          %755 = vmatprep.subr.mxu0 0.0
          %756 = vmatpush1.msra.mxu0 0.0
          %757 = vmatprep.subr.mxu0 0.0
          %758 = vmatpush1.msra.mxu0 0.0
          %759 = vmatprep.subr.mxu0 0.0
          %760 = vmatpush1.msra.mxu0 0.0
          %761 = vmatprep.subr.mxu0 0.0
          %762 = vmatpush1.msra.mxu0 0.0
          %763 = vmatprep.subr.mxu0 0.0
          %764 = vmatpush1.msra.mxu0 0.0
          %765 = vmatprep.subr.mxu0 0.0
          %766 = vmatpush1.msra.mxu0 0.0
          %767 = vmatprep.subr.mxu0 0.0
          %768 = vmatpush1.msra.mxu0 0.0
          %769 = vmatprep.subr.mxu0 0.0
          %770 = vmatpush1.msra.mxu0 0.0
          %771 = vmatprep.subr.mxu0 0.0
          %772 = vmatpush1.msra.mxu0 0.0
          %773 = vmatprep.subr.mxu0 0.0
          %774 = vmatpush1.msra.mxu0 0.0
          %775 = vmatprep.subr.mxu0 0.0
          %776 = vmatpush1.msra.mxu0 0.0
          %777 = vmatprep.subr.mxu0 0.0
          %778 = vmatpush1.msra.mxu0 0.0
          %779 = vmatprep.subr.mxu0 0.0
          %780 = vmatpush1.msra.mxu0 0.0
          %781 = vmatprep.subr.mxu0 0.0
          %782 = vmatpush1.msra.mxu0 0.0
          %783 = vmatprep.subr.mxu0 0.0
          %784 = vmatpush1.msra.mxu0 0.0
          %785 = vmatprep.subr.mxu0 0.0
          %786 = vmatpush1.msra.mxu0 0.0
          %787 = vmatprep.subr.mxu0 0.0
          %788 = vmatpush1.msra.mxu0 0.0
          %789 = vmatprep.subr.mxu0 0.0
          %790 = vmatpush1.msra.mxu0 0.0
          %791 = vmatprep.subr.mxu0 0.0
          %792 = vmatpush1.msra.mxu0 0.0
          %793 = vmatprep.subr.mxu0 0.0
          %794 = vmatpush1.msra.mxu0 0.0
          %795 = vmatprep.subr.mxu0 0.0
          %796 = vmatpush1.msra.mxu0 0.0
          %797 = vmatprep.subr.mxu0 0.0
          %798 = vmatpush1.msra.mxu0 0.0
          %799 = vmatprep.subr.mxu0 0.0
          %800 = vmatpush1.msra.mxu0 0.0
          %801 = vmatprep.subr.mxu0 0.0
          %802 = vmatpush1.msra.mxu0 0.0
          %803 = vmatprep.subr.mxu0 0.0
          %804 = vmatpush1.msra.mxu0 0.0
          %805 = vmatprep.subr.mxu0 0.0
          %806 = vmatpush1.msra.mxu0 0.0
          %807 = vmatprep.subr.mxu0 0.0
          %808 = vmatpush1.msra.mxu0 0.0
          %809 = vmatprep.subr.mxu0 0.0
          %810 = vmatpush1.msra.mxu0 0.0
          %811 = vmatprep.subr.mxu0 0.0
          %812 = vmatpush1.msra.mxu0 0.0
          %813 = vmatprep.mubr.f32.mxu0 0.0
          %814 = vmatmul.mubr.f32.gmra.mrb[0].mxu0 %v741
          %v815 = vpop.f32.mrb[0].mxu0
          %v816 = vadd.f32 0.0, %v815
          %v817 = vpop.f32.mrb[0].mxu0
          %v818 = vadd.f32 0.0, %v817
          %819 = vdwg.mxu0
          %v820 = vadd.f32 %v736, %v816
          %v821 = vadd.f32 %v737, %v818
          %822 = vrot.lane.b32.xlu0 %v282, 112
          %v823 = vpop.permute.xlu0 %822
          %824 = vrot.lane.b32.xlu0 %v283, 112
          %v825 = vpop.permute.xlu0 %824
          %vm826 = vcmp.lt.s32.totalorder %v230, 112
          %v827 = vsel %vm826, %v823, %v825
          %v828 = vsel %vm826, %v825, %v823
          %s829 = scalar_lea.vmem %s222, 48
          %v830 = vld [vmem:[%s829] sm:$0xff]
          %v832 = vsel %vm320, %v830, 0
          %v835 = vsel %vm324, %v827, 0
          %v838 = vsel %vm324, %v828, 0
          %840 = vmatprep.subr.mxu0 %v838
          %841 = vmatpush1.msra.mxu0 %v835
          %842 = vmatprep.subr.mxu0 0.0
          %843 = vmatpush1.msra.mxu0 0.0
          %844 = vmatprep.subr.mxu0 0.0
          %845 = vmatpush1.msra.mxu0 0.0
          %846 = vmatprep.subr.mxu0 0.0
          %847 = vmatpush1.msra.mxu0 0.0
          %848 = vmatprep.subr.mxu0 0.0
          %849 = vmatpush1.msra.mxu0 0.0
          %850 = vmatprep.subr.mxu0 0.0
          %851 = vmatpush1.msra.mxu0 0.0
          %852 = vmatprep.subr.mxu0 0.0
          %853 = vmatpush1.msra.mxu0 0.0
          %854 = vmatprep.subr.mxu0 0.0
          %855 = vmatpush1.msra.mxu0 0.0
          %856 = vmatprep.subr.mxu0 0.0
          %857 = vmatpush1.msra.mxu0 0.0
          %858 = vmatprep.subr.mxu0 0.0
          %859 = vmatpush1.msra.mxu0 0.0
          %860 = vmatprep.subr.mxu0 0.0
          %861 = vmatpush1.msra.mxu0 0.0
          %862 = vmatprep.subr.mxu0 0.0
          %863 = vmatpush1.msra.mxu0 0.0
          %864 = vmatprep.subr.mxu0 0.0
          %865 = vmatpush1.msra.mxu0 0.0
          %866 = vmatprep.subr.mxu0 0.0
          %867 = vmatpush1.msra.mxu0 0.0
          %868 = vmatprep.subr.mxu0 0.0
          %869 = vmatpush1.msra.mxu0 0.0
          %870 = vmatprep.subr.mxu0 0.0
          %871 = vmatpush1.msra.mxu0 0.0
          %872 = vmatprep.subr.mxu0 0.0
          %873 = vmatpush1.msra.mxu0 0.0
          %874 = vmatprep.subr.mxu0 0.0
          %875 = vmatpush1.msra.mxu0 0.0
          %876 = vmatprep.subr.mxu0 0.0
          %877 = vmatpush1.msra.mxu0 0.0
          %878 = vmatprep.subr.mxu0 0.0
          %879 = vmatpush1.msra.mxu0 0.0
          %880 = vmatprep.subr.mxu0 0.0
          %881 = vmatpush1.msra.mxu0 0.0
          %882 = vmatprep.subr.mxu0 0.0
          %883 = vmatpush1.msra.mxu0 0.0
          %884 = vmatprep.subr.mxu0 0.0
          %885 = vmatpush1.msra.mxu0 0.0
          %886 = vmatprep.subr.mxu0 0.0
          %887 = vmatpush1.msra.mxu0 0.0
          %888 = vmatprep.subr.mxu0 0.0
          %889 = vmatpush1.msra.mxu0 0.0
          %890 = vmatprep.subr.mxu0 0.0
          %891 = vmatpush1.msra.mxu0 0.0
          %892 = vmatprep.subr.mxu0 0.0
          %893 = vmatpush1.msra.mxu0 0.0
          %894 = vmatprep.subr.mxu0 0.0
          %895 = vmatpush1.msra.mxu0 0.0
          %896 = vmatprep.subr.mxu0 0.0
          %897 = vmatpush1.msra.mxu0 0.0
          %898 = vmatprep.subr.mxu0 0.0
          %899 = vmatpush1.msra.mxu0 0.0
          %900 = vmatprep.subr.mxu0 0.0
          %901 = vmatpush1.msra.mxu0 0.0
          %902 = vmatprep.subr.mxu0 0.0
          %903 = vmatpush1.msra.mxu0 0.0
          %904 = vmatprep.mubr.f32.mxu0 0.0
          %905 = vmatmul.mubr.f32.gmra.mrb[0].mxu0 %v832
          %v906 = vpop.f32.mrb[0].mxu0
          %v907 = vadd.f32 0.0, %v906
          %v908 = vpop.f32.mrb[0].mxu0
          %v909 = vadd.f32 0.0, %v908
          %910 = vdwg.mxu0
          %v911 = vadd.f32 %v820, %v907
          %v912 = vadd.f32 %v821, %v909
          %913 = vrot.lane.b32.xlu0 %v260, 112
          %v914 = vpop.permute.xlu0 %913
          %915 = vrot.lane.b32.xlu0 %v262, 112
          %v916 = vpop.permute.xlu0 %915
          %v917 = vsel %vm826, %v914, %v916
          %v918 = vsel %vm826, %v916, %v914
          %s919 = scalar_lea.vmem %s222, 56
          %v920 = vld [vmem:[%s919] sm:$0xff]
          %v922 = vsel %vm320, %v920, 0
          %v925 = vsel %vm324, %v917, 0
          %v928 = vsel %vm324, %v918, 0
          %930 = vmatprep.subr.mxu0 %v928
          %931 = vmatpush1.msra.mxu0 %v925
          %932 = vmatprep.subr.mxu0 0.0
          %933 = vmatpush1.msra.mxu0 0.0
          %934 = vmatprep.subr.mxu0 0.0
          %935 = vmatpush1.msra.mxu0 0.0
          %936 = vmatprep.subr.mxu0 0.0
          %937 = vmatpush1.msra.mxu0 0.0
          %938 = vmatprep.subr.mxu0 0.0
          %939 = vmatpush1.msra.mxu0 0.0
          %940 = vmatprep.subr.mxu0 0.0
          %941 = vmatpush1.msra.mxu0 0.0
          %942 = vmatprep.subr.mxu0 0.0
          %943 = vmatpush1.msra.mxu0 0.0
          %944 = vmatprep.subr.mxu0 0.0
          %945 = vmatpush1.msra.mxu0 0.0
          %946 = vmatprep.subr.mxu0 0.0
          %947 = vmatpush1.msra.mxu0 0.0
          %948 = vmatprep.subr.mxu0 0.0
          %949 = vmatpush1.msra.mxu0 0.0
          %950 = vmatprep.subr.mxu0 0.0
          %951 = vmatpush1.msra.mxu0 0.0
          %952 = vmatprep.subr.mxu0 0.0
          %953 = vmatpush1.msra.mxu0 0.0
          %954 = vmatprep.subr.mxu0 0.0
          %955 = vmatpush1.msra.mxu0 0.0
          %956 = vmatprep.subr.mxu0 0.0
          %957 = vmatpush1.msra.mxu0 0.0
          %958 = vmatprep.subr.mxu0 0.0
          %959 = vmatpush1.msra.mxu0 0.0
          %960 = vmatprep.subr.mxu0 0.0
          %961 = vmatpush1.msra.mxu0 0.0
          %962 = vmatprep.subr.mxu0 0.0
          %963 = vmatpush1.msra.mxu0 0.0
          %964 = vmatprep.subr.mxu0 0.0
          %965 = vmatpush1.msra.mxu0 0.0
          %966 = vmatprep.subr.mxu0 0.0
          %967 = vmatpush1.msra.mxu0 0.0
          %968 = vmatprep.subr.mxu0 0.0
          %969 = vmatpush1.msra.mxu0 0.0
          %970 = vmatprep.subr.mxu0 0.0
          %971 = vmatpush1.msra.mxu0 0.0
          %972 = vmatprep.subr.mxu0 0.0
          %973 = vmatpush1.msra.mxu0 0.0
          %974 = vmatprep.subr.mxu0 0.0
          %975 = vmatpush1.msra.mxu0 0.0
          %976 = vmatprep.subr.mxu0 0.0
          %977 = vmatpush1.msra.mxu0 0.0
          %978 = vmatprep.subr.mxu0 0.0
          %979 = vmatpush1.msra.mxu0 0.0
          %980 = vmatprep.subr.mxu0 0.0
          %981 = vmatpush1.msra.mxu0 0.0
          %982 = vmatprep.subr.mxu0 0.0
          %983 = vmatpush1.msra.mxu0 0.0
          %984 = vmatprep.subr.mxu0 0.0
          %985 = vmatpush1.msra.mxu0 0.0
          %986 = vmatprep.subr.mxu0 0.0
          %987 = vmatpush1.msra.mxu0 0.0
          %988 = vmatprep.subr.mxu0 0.0
          %989 = vmatpush1.msra.mxu0 0.0
          %990 = vmatprep.subr.mxu0 0.0
          %991 = vmatpush1.msra.mxu0 0.0
          %992 = vmatprep.subr.mxu0 0.0
          %993 = vmatpush1.msra.mxu0 0.0
          %994 = vmatprep.mubr.f32.mxu0 0.0
          %995 = vmatmul.mubr.f32.gmra.mrb[0].mxu0 %v922
          %v996 = vpop.f32.mrb[0].mxu0
          %v997 = vadd.f32 0.0, %v996
          %v998 = vpop.f32.mrb[0].mxu0
          %v999 = vadd.f32 0.0, %v998
          %1000 = vdwg.mxu0
          %v1001 = vadd.f32 %v911, %v997
          %v1002 = vadd.f32 %v912, %v999
          %1003 = vrot.lane.b32.xlu0 %v302, 112
          %v1004 = vpop.permute.xlu0 %1003
          %1005 = vrot.lane.b32.xlu0 %v303, 112
          %v1006 = vpop.permute.xlu0 %1005
          %v1007 = vsel %vm826, %v1004, %v1006
          %v1008 = vsel %vm826, %v1006, %v1004
          %s1009 = scalar_lea.vmem %s222, 64
          %v1010 = vld [vmem:[%s1009] sm:$0xff]
          %v1012 = vsel %vm320, %v1010, 0
          %v1015 = vsel %vm324, %v1007, 0
          %v1018 = vsel %vm324, %v1008, 0
          %1020 = vmatprep.subr.mxu0 %v1018
          %1021 = vmatpush1.msra.mxu0 %v1015
          %1022 = vmatprep.subr.mxu0 0.0
          %1023 = vmatpush1.msra.mxu0 0.0
          %1024 = vmatprep.subr.mxu0 0.0
          %1025 = vmatpush1.msra.mxu0 0.0
          %1026 = vmatprep.subr.mxu0 0.0
          %1027 = vmatpush1.msra.mxu0 0.0
          %1028 = vmatprep.subr.mxu0 0.0
          %1029 = vmatpush1.msra.mxu0 0.0
          %1030 = vmatprep.subr.mxu0 0.0
          %1031 = vmatpush1.msra.mxu0 0.0
          %1032 = vmatprep.subr.mxu0 0.0
          %1033 = vmatpush1.msra.mxu0 0.0
          %1034 = vmatprep.subr.mxu0 0.0
          %1035 = vmatpush1.msra.mxu0 0.0
          %1036 = vmatprep.subr.mxu0 0.0
          %1037 = vmatpush1.msra.mxu0 0.0
          %1038 = vmatprep.subr.mxu0 0.0
          %1039 = vmatpush1.msra.mxu0 0.0
          %1040 = vmatprep.subr.mxu0 0.0
          %1041 = vmatpush1.msra.mxu0 0.0
          %1042 = vmatprep.subr.mxu0 0.0
          %1043 = vmatpush1.msra.mxu0 0.0
          %1044 = vmatprep.subr.mxu0 0.0
          %1045 = vmatpush1.msra.mxu0 0.0
          %1046 = vmatprep.subr.mxu0 0.0
          %1047 = vmatpush1.msra.mxu0 0.0
          %1048 = vmatprep.subr.mxu0 0.0
          %1049 = vmatpush1.msra.mxu0 0.0
          %1050 = vmatprep.subr.mxu0 0.0
          %1051 = vmatpush1.msra.mxu0 0.0
          %1052 = vmatprep.subr.mxu0 0.0
          %1053 = vmatpush1.msra.mxu0 0.0
          %1054 = vmatprep.subr.mxu0 0.0
          %1055 = vmatpush1.msra.mxu0 0.0
          %1056 = vmatprep.subr.mxu0 0.0
          %1057 = vmatpush1.msra.mxu0 0.0
          %1058 = vmatprep.subr.mxu0 0.0
          %1059 = vmatpush1.msra.mxu0 0.0
          %1060 = vmatprep.subr.mxu0 0.0
          %1061 = vmatpush1.msra.mxu0 0.0
          %1062 = vmatprep.subr.mxu0 0.0
          %1063 = vmatpush1.msra.mxu0 0.0
          %1064 = vmatprep.subr.mxu0 0.0
          %1065 = vmatpush1.msra.mxu0 0.0
          %1066 = vmatprep.subr.mxu0 0.0
          %1067 = vmatpush1.msra.mxu0 0.0
          %1068 = vmatprep.subr.mxu0 0.0
          %1069 = vmatpush1.msra.mxu0 0.0
          %1070 = vmatprep.subr.mxu0 0.0
          %1071 = vmatpush1.msra.mxu0 0.0
          %1072 = vmatprep.subr.mxu0 0.0
          %1073 = vmatpush1.msra.mxu0 0.0
          %1074 = vmatprep.subr.mxu0 0.0
          %1075 = vmatpush1.msra.mxu0 0.0
          %1076 = vmatprep.subr.mxu0 0.0
          %1077 = vmatpush1.msra.mxu0 0.0
          %1078 = vmatprep.subr.mxu0 0.0
          %1079 = vmatpush1.msra.mxu0 0.0
          %1080 = vmatprep.subr.mxu0 0.0
          %1081 = vmatpush1.msra.mxu0 0.0
          %1082 = vmatprep.subr.mxu0 0.0
          %1083 = vmatpush1.msra.mxu0 0.0
          %1084 = vmatprep.mubr.f32.mxu0 0.0
          %1085 = vmatmul.mubr.f32.gmra.mrb[0].mxu0 %v1012
          %v1086 = vpop.f32.mrb[0].mxu0
          %v1087 = vadd.f32 0.0, %v1086
          %v1088 = vpop.f32.mrb[0].mxu0
          %v1089 = vadd.f32 0.0, %v1088
          %1090 = vdwg.mxu0
          %v1091 = vadd.f32 %v1001, %v1087
          %v1092 = vadd.f32 %v1002, %v1089
          %v1093 = vpack.c.bf16 %v1091, %v1091
          %v1094 = vpack.c.bf16 %v1092, %v1092
          %v1097 = vunpack.c.l.b16 %v1093
          %v1098 = vunpack.c.l.b16 %v1094
          %v1099 = vpack.c.b16 %v1098, %v1097
          %1101 = vst [vmem:[%s206] sm:$0xff] %v1099
          %v1102 = vld [vmem:[%s215 + $0x8] sm:$0xff]
          %v1104 = vcombine.high %v1102, %v1102
          %1106 = vrot.lane.b32.xlu0 %v1102, 113
          %v1107 = vpop.permute.xlu0 %1106
          %1108 = vrot.lane.b32.xlu0 %v1104, 113
          %v1109 = vpop.permute.xlu0 %1108
          %v1110 = vsel %vm268, %v1107, %v1109
          %v1111 = vsel %vm268, %v1109, %v1107
          %1112 = vrot.lane.b32.xlu0 %v1102, 1
          %v1113 = vpop.permute.xlu0 %1112
          %1114 = vrot.lane.b32.xlu0 %v1104, 1
          %v1115 = vpop.permute.xlu0 %1114
          %v1116 = vsel %vm275, %v1113, %v1115
          %v1117 = vsel %vm275, %v1115, %v1113
          %v1118 = vsel %vm280, %v1110, %v1117
          %v1119 = vsel %vm281, %v1111, %v1116
          %1120 = vrot.lane.b32.xlu0 %v1102, 15
          %v1121 = vpop.permute.xlu0 %1120
          %1122 = vrot.lane.b32.xlu0 %v1104, 15
          %v1123 = vpop.permute.xlu0 %1122
          %v1124 = vsel %vm288, %v1121, %v1123
          %v1125 = vsel %vm288, %v1123, %v1121
          %1126 = vrot.lane.b32.xlu0 %v1102, 127
          %v1127 = vpop.permute.xlu0 %1126
          %1128 = vrot.lane.b32.xlu0 %v1104, 127
          %v1129 = vpop.permute.xlu0 %1128
          %v1130 = vsel %vm295, %v1127, %v1129
          %v1131 = vsel %vm295, %v1129, %v1127
          %v1132 = vsel %vm300, %v1125, %v1130
          %v1133 = vsel %vm301, %v1124, %v1131
          %1134 = vrot.lane.b32.xlu0 %v1118, 16
          %v1135 = vpop.permute.xlu0 %1134
          %1136 = vrot.lane.b32.xlu0 %v1119, 16
          %v1137 = vpop.permute.xlu0 %1136
          %v1138 = vsel %vm308, %v1135, %v1137
          %v1139 = vsel %vm308, %v1137, %v1135
          %s1140 = scalar_lea.vmem %s222, 72
          %v1141 = vld [vmem:[%s1140] sm:$0xff]
          %1142 = vrot.lane.b32.xlu0 %v1102, 16
          %v1143 = vpop.permute.xlu0 %1142
          %1144 = vrot.lane.b32.xlu0 %v1104, 16
          %v1145 = vpop.permute.xlu0 %1144
          %v1146 = vsel %vm308, %v1143, %v1145
          %v1147 = vsel %vm308, %v1145, %v1143
          %s1148 = scalar_lea.vmem %s222, 80
          %v1149 = vld [vmem:[%s1148] sm:$0xff]
          %v1151 = vsel %vm320, %v1149, 0
          %v1154 = vsel %vm324, %v1147, 0
          %v1157 = vsel %vm324, %v1146, 0
          %1159 = vmatprep.subr.mxu0 %v1157
          %1160 = vmatpush1.msra.mxu0 %v1154
          %1161 = vmatprep.subr.mxu0 0.0
          %1162 = vmatpush1.msra.mxu0 0.0
          %1163 = vmatprep.subr.mxu0 0.0
          %1164 = vmatpush1.msra.mxu0 0.0
          %1165 = vmatprep.subr.mxu0 0.0
          %1166 = vmatpush1.msra.mxu0 0.0
          %1167 = vmatprep.subr.mxu0 0.0
          %1168 = vmatpush1.msra.mxu0 0.0
          %1169 = vmatprep.subr.mxu0 0.0
          %1170 = vmatpush1.msra.mxu0 0.0
          %1171 = vmatprep.subr.mxu0 0.0
          %1172 = vmatpush1.msra.mxu0 0.0
          %1173 = vmatprep.subr.mxu0 0.0
          %1174 = vmatpush1.msra.mxu0 0.0
          %1175 = vmatprep.subr.mxu0 0.0
          %1176 = vmatpush1.msra.mxu0 0.0
          %1177 = vmatprep.subr.mxu0 0.0
          %1178 = vmatpush1.msra.mxu0 0.0
          %1179 = vmatprep.subr.mxu0 0.0
          %1180 = vmatpush1.msra.mxu0 0.0
          %1181 = vmatprep.subr.mxu0 0.0
          %1182 = vmatpush1.msra.mxu0 0.0
          %1183 = vmatprep.subr.mxu0 0.0
          %1184 = vmatpush1.msra.mxu0 0.0
          %1185 = vmatprep.subr.mxu0 0.0
          %1186 = vmatpush1.msra.mxu0 0.0
          %1187 = vmatprep.subr.mxu0 0.0
          %1188 = vmatpush1.msra.mxu0 0.0
          %1189 = vmatprep.subr.mxu0 0.0
          %1190 = vmatpush1.msra.mxu0 0.0
          %1191 = vmatprep.subr.mxu0 0.0
          %1192 = vmatpush1.msra.mxu0 0.0
          %1193 = vmatprep.subr.mxu0 0.0
          %1194 = vmatpush1.msra.mxu0 0.0
          %1195 = vmatprep.subr.mxu0 0.0
          %1196 = vmatpush1.msra.mxu0 0.0
          %1197 = vmatprep.subr.mxu0 0.0
          %1198 = vmatpush1.msra.mxu0 0.0
          %1199 = vmatprep.subr.mxu0 0.0
          %1200 = vmatpush1.msra.mxu0 0.0
          %1201 = vmatprep.subr.mxu0 0.0
          %1202 = vmatpush1.msra.mxu0 0.0
          %1203 = vmatprep.subr.mxu0 0.0
          %1204 = vmatpush1.msra.mxu0 0.0
          %1205 = vmatprep.subr.mxu0 0.0
          %1206 = vmatpush1.msra.mxu0 0.0
          %1207 = vmatprep.subr.mxu0 0.0
          %1208 = vmatpush1.msra.mxu0 0.0
          %1209 = vmatprep.subr.mxu0 0.0
          %1210 = vmatpush1.msra.mxu0 0.0
          %1211 = vmatprep.subr.mxu0 0.0
          %1212 = vmatpush1.msra.mxu0 0.0
          %1213 = vmatprep.subr.mxu0 0.0
          %1214 = vmatpush1.msra.mxu0 0.0
          %1215 = vmatprep.subr.mxu0 0.0
          %1216 = vmatpush1.msra.mxu0 0.0
          %1217 = vmatprep.subr.mxu0 0.0
          %1218 = vmatpush1.msra.mxu0 0.0
          %1219 = vmatprep.subr.mxu0 0.0
          %1220 = vmatpush1.msra.mxu0 0.0
          %1221 = vmatprep.subr.mxu0 0.0
          %1222 = vmatpush1.msra.mxu0 0.0
          %1223 = vmatprep.mubr.f32.mxu0 0.0
          %1224 = vmatmul.mubr.f32.gmra.mrb[0].mxu0 %v1151
          %v1225 = vpop.f32.mrb[0].mxu0
          %v1226 = vadd.f32 0.0, %v1225
          %v1227 = vpop.f32.mrb[0].mxu0
          %v1228 = vadd.f32 0.0, %v1227
          %1229 = vdwg.mxu0
          %v1231 = vsel %vm320, %v1141, 0
          %v1234 = vsel %vm324, %v1139, 0
          %v1237 = vsel %vm324, %v1138, 0
          %1239 = vmatprep.subr.mxu0 %v1237
          %1240 = vmatpush1.msra.mxu0 %v1234
          %1241 = vmatprep.subr.mxu0 0.0
          %1242 = vmatpush1.msra.mxu0 0.0
          %1243 = vmatprep.subr.mxu0 0.0
          %1244 = vmatpush1.msra.mxu0 0.0
          %1245 = vmatprep.subr.mxu0 0.0
          %1246 = vmatpush1.msra.mxu0 0.0
          %1247 = vmatprep.subr.mxu0 0.0
          %1248 = vmatpush1.msra.mxu0 0.0
          %1249 = vmatprep.subr.mxu0 0.0
          %1250 = vmatpush1.msra.mxu0 0.0
          %1251 = vmatprep.subr.mxu0 0.0
          %1252 = vmatpush1.msra.mxu0 0.0
          %1253 = vmatprep.subr.mxu0 0.0
          %1254 = vmatpush1.msra.mxu0 0.0
          %1255 = vmatprep.subr.mxu0 0.0
          %1256 = vmatpush1.msra.mxu0 0.0
          %1257 = vmatprep.subr.mxu0 0.0
          %1258 = vmatpush1.msra.mxu0 0.0
          %1259 = vmatprep.subr.mxu0 0.0
          %1260 = vmatpush1.msra.mxu0 0.0
          %1261 = vmatprep.subr.mxu0 0.0
          %1262 = vmatpush1.msra.mxu0 0.0
          %1263 = vmatprep.subr.mxu0 0.0
          %1264 = vmatpush1.msra.mxu0 0.0
          %1265 = vmatprep.subr.mxu0 0.0
          %1266 = vmatpush1.msra.mxu0 0.0
          %1267 = vmatprep.subr.mxu0 0.0
          %1268 = vmatpush1.msra.mxu0 0.0
          %1269 = vmatprep.subr.mxu0 0.0
          %1270 = vmatpush1.msra.mxu0 0.0
          %1271 = vmatprep.subr.mxu0 0.0
          %1272 = vmatpush1.msra.mxu0 0.0
          %1273 = vmatprep.subr.mxu0 0.0
          %1274 = vmatpush1.msra.mxu0 0.0
          %1275 = vmatprep.subr.mxu0 0.0
          %1276 = vmatpush1.msra.mxu0 0.0
          %1277 = vmatprep.subr.mxu0 0.0
          %1278 = vmatpush1.msra.mxu0 0.0
          %1279 = vmatprep.subr.mxu0 0.0
          %1280 = vmatpush1.msra.mxu0 0.0
          %1281 = vmatprep.subr.mxu0 0.0
          %1282 = vmatpush1.msra.mxu0 0.0
          %1283 = vmatprep.subr.mxu0 0.0
          %1284 = vmatpush1.msra.mxu0 0.0
          %1285 = vmatprep.subr.mxu0 0.0
          %1286 = vmatpush1.msra.mxu0 0.0
          %1287 = vmatprep.subr.mxu0 0.0
          %1288 = vmatpush1.msra.mxu0 0.0
          %1289 = vmatprep.subr.mxu0 0.0
          %1290 = vmatpush1.msra.mxu0 0.0
          %1291 = vmatprep.subr.mxu0 0.0
          %1292 = vmatpush1.msra.mxu0 0.0
          %1293 = vmatprep.subr.mxu0 0.0
          %1294 = vmatpush1.msra.mxu0 0.0
          %1295 = vmatprep.subr.mxu0 0.0
          %1296 = vmatpush1.msra.mxu0 0.0
          %1297 = vmatprep.subr.mxu0 0.0
          %1298 = vmatpush1.msra.mxu0 0.0
          %1299 = vmatprep.subr.mxu0 0.0
          %1300 = vmatpush1.msra.mxu0 0.0
          %1301 = vmatprep.subr.mxu0 0.0
          %1302 = vmatpush1.msra.mxu0 0.0
          %1303 = vmatprep.mubr.f32.mxu0 0.0
          %1304 = vmatmul.mubr.f32.gmra.mrb[0].mxu0 %v1231
          %v1305 = vpop.f32.mrb[0].mxu0
          %v1306 = vadd.f32 %v1226, %v1305
          %v1307 = vpop.f32.mrb[0].mxu0
          %v1308 = vadd.f32 %v1228, %v1307
          %1309 = vdwg.mxu0
          %1310 = vrot.lane.b32.xlu0 %v1132, 16
          %v1311 = vpop.permute.xlu0 %1310
          %1312 = vrot.lane.b32.xlu0 %v1133, 16
          %v1313 = vpop.permute.xlu0 %1312
          %v1314 = vsel %vm308, %v1311, %v1313
          %v1315 = vsel %vm308, %v1313, %v1311
          %s1316 = scalar_lea.vmem %s222, 88
          %v1317 = vld [vmem:[%s1316] sm:$0xff]
          %v1319 = vsel %vm320, %v1317, 0
          %v1322 = vsel %vm324, %v1315, 0
          %v1325 = vsel %vm324, %v1314, 0
          %1327 = vmatprep.subr.mxu0 %v1325
          %1328 = vmatpush1.msra.mxu0 %v1322
          %1329 = vmatprep.subr.mxu0 0.0
          %1330 = vmatpush1.msra.mxu0 0.0
          %1331 = vmatprep.subr.mxu0 0.0
          %1332 = vmatpush1.msra.mxu0 0.0
          %1333 = vmatprep.subr.mxu0 0.0
          %1334 = vmatpush1.msra.mxu0 0.0
          %1335 = vmatprep.subr.mxu0 0.0
          %1336 = vmatpush1.msra.mxu0 0.0
          %1337 = vmatprep.subr.mxu0 0.0
          %1338 = vmatpush1.msra.mxu0 0.0
          %1339 = vmatprep.subr.mxu0 0.0
          %1340 = vmatpush1.msra.mxu0 0.0
          %1341 = vmatprep.subr.mxu0 0.0
          %1342 = vmatpush1.msra.mxu0 0.0
          %1343 = vmatprep.subr.mxu0 0.0
          %1344 = vmatpush1.msra.mxu0 0.0
          %1345 = vmatprep.subr.mxu0 0.0
          %1346 = vmatpush1.msra.mxu0 0.0
          %1347 = vmatprep.subr.mxu0 0.0
          %1348 = vmatpush1.msra.mxu0 0.0
          %1349 = vmatprep.subr.mxu0 0.0
          %1350 = vmatpush1.msra.mxu0 0.0
          %1351 = vmatprep.subr.mxu0 0.0
          %1352 = vmatpush1.msra.mxu0 0.0
          %1353 = vmatprep.subr.mxu0 0.0
          %1354 = vmatpush1.msra.mxu0 0.0
          %1355 = vmatprep.subr.mxu0 0.0
          %1356 = vmatpush1.msra.mxu0 0.0
          %1357 = vmatprep.subr.mxu0 0.0
          %1358 = vmatpush1.msra.mxu0 0.0
          %1359 = vmatprep.subr.mxu0 0.0
          %1360 = vmatpush1.msra.mxu0 0.0
          %1361 = vmatprep.subr.mxu0 0.0
          %1362 = vmatpush1.msra.mxu0 0.0
          %1363 = vmatprep.subr.mxu0 0.0
          %1364 = vmatpush1.msra.mxu0 0.0
          %1365 = vmatprep.subr.mxu0 0.0
          %1366 = vmatpush1.msra.mxu0 0.0
          %1367 = vmatprep.subr.mxu0 0.0
          %1368 = vmatpush1.msra.mxu0 0.0
          %1369 = vmatprep.subr.mxu0 0.0
          %1370 = vmatpush1.msra.mxu0 0.0
          %1371 = vmatprep.subr.mxu0 0.0
          %1372 = vmatpush1.msra.mxu0 0.0
          %1373 = vmatprep.subr.mxu0 0.0
          %1374 = vmatpush1.msra.mxu0 0.0
          %1375 = vmatprep.subr.mxu0 0.0
          %1376 = vmatpush1.msra.mxu0 0.0
          %1377 = vmatprep.subr.mxu0 0.0
          %1378 = vmatpush1.msra.mxu0 0.0
          %1379 = vmatprep.subr.mxu0 0.0
          %1380 = vmatpush1.msra.mxu0 0.0
          %1381 = vmatprep.subr.mxu0 0.0
          %1382 = vmatpush1.msra.mxu0 0.0
          %1383 = vmatprep.subr.mxu0 0.0
          %1384 = vmatpush1.msra.mxu0 0.0
          %1385 = vmatprep.subr.mxu0 0.0
          %1386 = vmatpush1.msra.mxu0 0.0
          %1387 = vmatprep.subr.mxu0 0.0
          %1388 = vmatpush1.msra.mxu0 0.0
          %1389 = vmatprep.subr.mxu0 0.0
          %1390 = vmatpush1.msra.mxu0 0.0
          %1391 = vmatprep.mubr.f32.mxu0 0.0
          %1392 = vmatmul.mubr.f32.gmra.mrb[0].mxu0 %v1319
          %v1393 = vpop.f32.mrb[0].mxu0
          %v1394 = vadd.f32 0.0, %v1393
          %v1395 = vpop.f32.mrb[0].mxu0
          %v1396 = vadd.f32 0.0, %v1395
          %1397 = vdwg.mxu0
          %v1398 = vadd.f32 %v1306, %v1394
          %v1399 = vadd.f32 %v1308, %v1396
          %s1400 = scalar_lea.vmem %s222, 96
          %v1401 = vld [vmem:[%s1400] sm:$0xff]
          %v1403 = vsel %vm320, %v1401, 0
          %v1406 = vsel %vm324, %v1118, 0
          %v1409 = vsel %vm324, %v1119, 0
          %1411 = vmatprep.subr.mxu0 %v1409
          %1412 = vmatpush1.msra.mxu0 %v1406
          %1413 = vmatprep.subr.mxu0 0.0
          %1414 = vmatpush1.msra.mxu0 0.0
          %1415 = vmatprep.subr.mxu0 0.0
          %1416 = vmatpush1.msra.mxu0 0.0
          %1417 = vmatprep.subr.mxu0 0.0
          %1418 = vmatpush1.msra.mxu0 0.0
          %1419 = vmatprep.subr.mxu0 0.0
          %1420 = vmatpush1.msra.mxu0 0.0
          %1421 = vmatprep.subr.mxu0 0.0
          %1422 = vmatpush1.msra.mxu0 0.0
          %1423 = vmatprep.subr.mxu0 0.0
          %1424 = vmatpush1.msra.mxu0 0.0
          %1425 = vmatprep.subr.mxu0 0.0
          %1426 = vmatpush1.msra.mxu0 0.0
          %1427 = vmatprep.subr.mxu0 0.0
          %1428 = vmatpush1.msra.mxu0 0.0
          %1429 = vmatprep.subr.mxu0 0.0
          %1430 = vmatpush1.msra.mxu0 0.0
          %1431 = vmatprep.subr.mxu0 0.0
          %1432 = vmatpush1.msra.mxu0 0.0
          %1433 = vmatprep.subr.mxu0 0.0
          %1434 = vmatpush1.msra.mxu0 0.0
          %1435 = vmatprep.subr.mxu0 0.0
          %1436 = vmatpush1.msra.mxu0 0.0
          %1437 = vmatprep.subr.mxu0 0.0
          %1438 = vmatpush1.msra.mxu0 0.0
          %1439 = vmatprep.subr.mxu0 0.0
          %1440 = vmatpush1.msra.mxu0 0.0
          %1441 = vmatprep.subr.mxu0 0.0
          %1442 = vmatpush1.msra.mxu0 0.0
          %1443 = vmatprep.subr.mxu0 0.0
          %1444 = vmatpush1.msra.mxu0 0.0
          %1445 = vmatprep.subr.mxu0 0.0
          %1446 = vmatpush1.msra.mxu0 0.0
          %1447 = vmatprep.subr.mxu0 0.0
          %1448 = vmatpush1.msra.mxu0 0.0
          %1449 = vmatprep.subr.mxu0 0.0
          %1450 = vmatpush1.msra.mxu0 0.0
          %1451 = vmatprep.subr.mxu0 0.0
          %1452 = vmatpush1.msra.mxu0 0.0
          %1453 = vmatprep.subr.mxu0 0.0
          %1454 = vmatpush1.msra.mxu0 0.0
          %1455 = vmatprep.subr.mxu0 0.0
          %1456 = vmatpush1.msra.mxu0 0.0
          %1457 = vmatprep.subr.mxu0 0.0
          %1458 = vmatpush1.msra.mxu0 0.0
          %1459 = vmatprep.subr.mxu0 0.0
          %1460 = vmatpush1.msra.mxu0 0.0
          %1461 = vmatprep.subr.mxu0 0.0
          %1462 = vmatpush1.msra.mxu0 0.0
          %1463 = vmatprep.subr.mxu0 0.0
          %1464 = vmatpush1.msra.mxu0 0.0
          %1465 = vmatprep.subr.mxu0 0.0
          %1466 = vmatpush1.msra.mxu0 0.0
          %1467 = vmatprep.subr.mxu0 0.0
          %1468 = vmatpush1.msra.mxu0 0.0
          %1469 = vmatprep.subr.mxu0 0.0
          %1470 = vmatpush1.msra.mxu0 0.0
          %1471 = vmatprep.subr.mxu0 0.0
          %1472 = vmatpush1.msra.mxu0 0.0
          %1473 = vmatprep.subr.mxu0 0.0
          %1474 = vmatpush1.msra.mxu0 0.0
          %1475 = vmatprep.mubr.f32.mxu0 0.0
          %1476 = vmatmul.mubr.f32.gmra.mrb[0].mxu0 %v1403
          %v1477 = vpop.f32.mrb[0].mxu0
          %v1478 = vadd.f32 0.0, %v1477
          %v1479 = vpop.f32.mrb[0].mxu0
          %v1480 = vadd.f32 0.0, %v1479
          %1481 = vdwg.mxu0
          %v1482 = vadd.f32 %v1398, %v1478
          %v1483 = vadd.f32 %v1399, %v1480
          %s1484 = scalar_lea.vmem %s222, 104
          %v1485 = vld [vmem:[%s1484] sm:$0xff]
          %v1487 = vsel %vm320, %v1485, 0
          %v1489 = vsel %vm324, %v1102, 0
          %v1491 = vsel %vm324, %v1104, 0
          %1493 = vmatprep.subr.mxu0 %v1491
          %1494 = vmatpush1.msra.mxu0 %v1489
          %1495 = vmatprep.subr.mxu0 0.0
          %1496 = vmatpush1.msra.mxu0 0.0
          %1497 = vmatprep.subr.mxu0 0.0
          %1498 = vmatpush1.msra.mxu0 0.0
          %1499 = vmatprep.subr.mxu0 0.0
          %1500 = vmatpush1.msra.mxu0 0.0
          %1501 = vmatprep.subr.mxu0 0.0
          %1502 = vmatpush1.msra.mxu0 0.0
          %1503 = vmatprep.subr.mxu0 0.0
          %1504 = vmatpush1.msra.mxu0 0.0
          %1505 = vmatprep.subr.mxu0 0.0
          %1506 = vmatpush1.msra.mxu0 0.0
          %1507 = vmatprep.subr.mxu0 0.0
          %1508 = vmatpush1.msra.mxu0 0.0
          %1509 = vmatprep.subr.mxu0 0.0
          %1510 = vmatpush1.msra.mxu0 0.0
          %1511 = vmatprep.subr.mxu0 0.0
          %1512 = vmatpush1.msra.mxu0 0.0
          %1513 = vmatprep.subr.mxu0 0.0
          %1514 = vmatpush1.msra.mxu0 0.0
          %1515 = vmatprep.subr.mxu0 0.0
          %1516 = vmatpush1.msra.mxu0 0.0
          %1517 = vmatprep.subr.mxu0 0.0
          %1518 = vmatpush1.msra.mxu0 0.0
          %1519 = vmatprep.subr.mxu0 0.0
          %1520 = vmatpush1.msra.mxu0 0.0
          %1521 = vmatprep.subr.mxu0 0.0
          %1522 = vmatpush1.msra.mxu0 0.0
          %1523 = vmatprep.subr.mxu0 0.0
          %1524 = vmatpush1.msra.mxu0 0.0
          %1525 = vmatprep.subr.mxu0 0.0
          %1526 = vmatpush1.msra.mxu0 0.0
          %1527 = vmatprep.subr.mxu0 0.0
          %1528 = vmatpush1.msra.mxu0 0.0
          %1529 = vmatprep.subr.mxu0 0.0
          %1530 = vmatpush1.msra.mxu0 0.0
          %1531 = vmatprep.subr.mxu0 0.0
          %1532 = vmatpush1.msra.mxu0 0.0
          %1533 = vmatprep.subr.mxu0 0.0
          %1534 = vmatpush1.msra.mxu0 0.0
          %1535 = vmatprep.subr.mxu0 0.0
          %1536 = vmatpush1.msra.mxu0 0.0
          %1537 = vmatprep.subr.mxu0 0.0
          %1538 = vmatpush1.msra.mxu0 0.0
          %1539 = vmatprep.subr.mxu0 0.0
          %1540 = vmatpush1.msra.mxu0 0.0
          %1541 = vmatprep.subr.mxu0 0.0
          %1542 = vmatpush1.msra.mxu0 0.0
          %1543 = vmatprep.subr.mxu0 0.0
          %1544 = vmatpush1.msra.mxu0 0.0
          %1545 = vmatprep.subr.mxu0 0.0
          %1546 = vmatpush1.msra.mxu0 0.0
          %1547 = vmatprep.subr.mxu0 0.0
          %1548 = vmatpush1.msra.mxu0 0.0
          %1549 = vmatprep.subr.mxu0 0.0
          %1550 = vmatpush1.msra.mxu0 0.0
          %1551 = vmatprep.subr.mxu0 0.0
          %1552 = vmatpush1.msra.mxu0 0.0
          %1553 = vmatprep.subr.mxu0 0.0
          %1554 = vmatpush1.msra.mxu0 0.0
          %1555 = vmatprep.subr.mxu0 0.0
          %1556 = vmatpush1.msra.mxu0 0.0
          %1557 = vmatprep.mubr.f32.mxu0 0.0
          %1558 = vmatmul.mubr.f32.gmra.mrb[0].mxu0 %v1487
          %v1559 = vpop.f32.mrb[0].mxu0
          %v1560 = vadd.f32 0.0, %v1559
          %v1561 = vpop.f32.mrb[0].mxu0
          %v1562 = vadd.f32 0.0, %v1561
          %1563 = vdwg.mxu0
          %v1564 = vadd.f32 %v1482, %v1560
          %v1565 = vadd.f32 %v1483, %v1562
          %s1566 = scalar_lea.vmem %s222, 112
          %v1567 = vld [vmem:[%s1566] sm:$0xff]
          %v1569 = vsel %vm320, %v1567, 0
          %v1572 = vsel %vm324, %v1132, 0
          %v1575 = vsel %vm324, %v1133, 0
          %1577 = vmatprep.subr.mxu0 %v1575
          %1578 = vmatpush1.msra.mxu0 %v1572
          %1579 = vmatprep.subr.mxu0 0.0
          %1580 = vmatpush1.msra.mxu0 0.0
          %1581 = vmatprep.subr.mxu0 0.0
          %1582 = vmatpush1.msra.mxu0 0.0
          %1583 = vmatprep.subr.mxu0 0.0
          %1584 = vmatpush1.msra.mxu0 0.0
          %1585 = vmatprep.subr.mxu0 0.0
          %1586 = vmatpush1.msra.mxu0 0.0
          %1587 = vmatprep.subr.mxu0 0.0
          %1588 = vmatpush1.msra.mxu0 0.0
          %1589 = vmatprep.subr.mxu0 0.0
          %1590 = vmatpush1.msra.mxu0 0.0
          %1591 = vmatprep.subr.mxu0 0.0
          %1592 = vmatpush1.msra.mxu0 0.0
          %1593 = vmatprep.subr.mxu0 0.0
          %1594 = vmatpush1.msra.mxu0 0.0
          %1595 = vmatprep.subr.mxu0 0.0
          %1596 = vmatpush1.msra.mxu0 0.0
          %1597 = vmatprep.subr.mxu0 0.0
          %1598 = vmatpush1.msra.mxu0 0.0
          %1599 = vmatprep.subr.mxu0 0.0
          %1600 = vmatpush1.msra.mxu0 0.0
          %1601 = vmatprep.subr.mxu0 0.0
          %1602 = vmatpush1.msra.mxu0 0.0
          %1603 = vmatprep.subr.mxu0 0.0
          %1604 = vmatpush1.msra.mxu0 0.0
          %1605 = vmatprep.subr.mxu0 0.0
          %1606 = vmatpush1.msra.mxu0 0.0
          %1607 = vmatprep.subr.mxu0 0.0
          %1608 = vmatpush1.msra.mxu0 0.0
          %1609 = vmatprep.subr.mxu0 0.0
          %1610 = vmatpush1.msra.mxu0 0.0
          %1611 = vmatprep.subr.mxu0 0.0
          %1612 = vmatpush1.msra.mxu0 0.0
          %1613 = vmatprep.subr.mxu0 0.0
          %1614 = vmatpush1.msra.mxu0 0.0
          %1615 = vmatprep.subr.mxu0 0.0
          %1616 = vmatpush1.msra.mxu0 0.0
          %1617 = vmatprep.subr.mxu0 0.0
          %1618 = vmatpush1.msra.mxu0 0.0
          %1619 = vmatprep.subr.mxu0 0.0
          %1620 = vmatpush1.msra.mxu0 0.0
          %1621 = vmatprep.subr.mxu0 0.0
          %1622 = vmatpush1.msra.mxu0 0.0
          %1623 = vmatprep.subr.mxu0 0.0
          %1624 = vmatpush1.msra.mxu0 0.0
          %1625 = vmatprep.subr.mxu0 0.0
          %1626 = vmatpush1.msra.mxu0 0.0
          %1627 = vmatprep.subr.mxu0 0.0
          %1628 = vmatpush1.msra.mxu0 0.0
          %1629 = vmatprep.subr.mxu0 0.0
          %1630 = vmatpush1.msra.mxu0 0.0
          %1631 = vmatprep.subr.mxu0 0.0
          %1632 = vmatpush1.msra.mxu0 0.0
          %1633 = vmatprep.subr.mxu0 0.0
          %1634 = vmatpush1.msra.mxu0 0.0
          %1635 = vmatprep.subr.mxu0 0.0
          %1636 = vmatpush1.msra.mxu0 0.0
          %1637 = vmatprep.subr.mxu0 0.0
          %1638 = vmatpush1.msra.mxu0 0.0
          %1639 = vmatprep.subr.mxu0 0.0
          %1640 = vmatpush1.msra.mxu0 0.0
          %1641 = vmatprep.mubr.f32.mxu0 0.0
          %1642 = vmatmul.mubr.f32.gmra.mrb[0].mxu0 %v1569
          %v1643 = vpop.f32.mrb[0].mxu0
          %v1644 = vadd.f32 0.0, %v1643
          %v1645 = vpop.f32.mrb[0].mxu0
          %v1646 = vadd.f32 0.0, %v1645
          %1647 = vdwg.mxu0
          %v1648 = vadd.f32 %v1564, %v1644
          %v1649 = vadd.f32 %v1565, %v1646
          %1650 = vrot.lane.b32.xlu0 %v1118, 112
          %v1651 = vpop.permute.xlu0 %1650
          %1652 = vrot.lane.b32.xlu0 %v1119, 112
          %v1653 = vpop.permute.xlu0 %1652
          %v1654 = vsel %vm826, %v1651, %v1653
          %v1655 = vsel %vm826, %v1653, %v1651
          %s1656 = scalar_lea.vmem %s222, 120
          %v1657 = vld [vmem:[%s1656] sm:$0xff]
          %v1659 = vsel %vm320, %v1657, 0
          %v1662 = vsel %vm324, %v1654, 0
          %v1665 = vsel %vm324, %v1655, 0
          %1667 = vmatprep.subr.mxu0 %v1665
          %1668 = vmatpush1.msra.mxu0 %v1662
          %1669 = vmatprep.subr.mxu0 0.0
          %1670 = vmatpush1.msra.mxu0 0.0
          %1671 = vmatprep.subr.mxu0 0.0
          %1672 = vmatpush1.msra.mxu0 0.0
          %1673 = vmatprep.subr.mxu0 0.0
          %1674 = vmatpush1.msra.mxu0 0.0
          %1675 = vmatprep.subr.mxu0 0.0
          %1676 = vmatpush1.msra.mxu0 0.0
          %1677 = vmatprep.subr.mxu0 0.0
          %1678 = vmatpush1.msra.mxu0 0.0
          %1679 = vmatprep.subr.mxu0 0.0
          %1680 = vmatpush1.msra.mxu0 0.0
          %1681 = vmatprep.subr.mxu0 0.0
          %1682 = vmatpush1.msra.mxu0 0.0
          %1683 = vmatprep.subr.mxu0 0.0
          %1684 = vmatpush1.msra.mxu0 0.0
          %1685 = vmatprep.subr.mxu0 0.0
          %1686 = vmatpush1.msra.mxu0 0.0
          %1687 = vmatprep.subr.mxu0 0.0
          %1688 = vmatpush1.msra.mxu0 0.0
          %1689 = vmatprep.subr.mxu0 0.0
          %1690 = vmatpush1.msra.mxu0 0.0
          %1691 = vmatprep.subr.mxu0 0.0
          %1692 = vmatpush1.msra.mxu0 0.0
          %1693 = vmatprep.subr.mxu0 0.0
          %1694 = vmatpush1.msra.mxu0 0.0
          %1695 = vmatprep.subr.mxu0 0.0
          %1696 = vmatpush1.msra.mxu0 0.0
          %1697 = vmatprep.subr.mxu0 0.0
          %1698 = vmatpush1.msra.mxu0 0.0
          %1699 = vmatprep.subr.mxu0 0.0
          %1700 = vmatpush1.msra.mxu0 0.0
          %1701 = vmatprep.subr.mxu0 0.0
          %1702 = vmatpush1.msra.mxu0 0.0
          %1703 = vmatprep.subr.mxu0 0.0
          %1704 = vmatpush1.msra.mxu0 0.0
          %1705 = vmatprep.subr.mxu0 0.0
          %1706 = vmatpush1.msra.mxu0 0.0
          %1707 = vmatprep.subr.mxu0 0.0
          %1708 = vmatpush1.msra.mxu0 0.0
          %1709 = vmatprep.subr.mxu0 0.0
          %1710 = vmatpush1.msra.mxu0 0.0
          %1711 = vmatprep.subr.mxu0 0.0
          %1712 = vmatpush1.msra.mxu0 0.0
          %1713 = vmatprep.subr.mxu0 0.0
          %1714 = vmatpush1.msra.mxu0 0.0
          %1715 = vmatprep.subr.mxu0 0.0
          %1716 = vmatpush1.msra.mxu0 0.0
          %1717 = vmatprep.subr.mxu0 0.0
          %1718 = vmatpush1.msra.mxu0 0.0
          %1719 = vmatprep.subr.mxu0 0.0
          %1720 = vmatpush1.msra.mxu0 0.0
          %1721 = vmatprep.subr.mxu0 0.0
          %1722 = vmatpush1.msra.mxu0 0.0
          %1723 = vmatprep.subr.mxu0 0.0
          %1724 = vmatpush1.msra.mxu0 0.0
          %1725 = vmatprep.subr.mxu0 0.0
          %1726 = vmatpush1.msra.mxu0 0.0
          %1727 = vmatprep.subr.mxu0 0.0
          %1728 = vmatpush1.msra.mxu0 0.0
          %1729 = vmatprep.subr.mxu0 0.0
          %1730 = vmatpush1.msra.mxu0 0.0
          %1731 = vmatprep.mubr.f32.mxu0 0.0
          %1732 = vmatmul.mubr.f32.gmra.mrb[0].mxu0 %v1659
          %v1733 = vpop.f32.mrb[0].mxu0
          %v1734 = vadd.f32 0.0, %v1733
          %v1735 = vpop.f32.mrb[0].mxu0
          %v1736 = vadd.f32 0.0, %v1735
          %1737 = vdwg.mxu0
          %v1738 = vadd.f32 %v1648, %v1734
          %v1739 = vadd.f32 %v1649, %v1736
          %1740 = vrot.lane.b32.xlu0 %v1102, 112
          %v1741 = vpop.permute.xlu0 %1740
          %1742 = vrot.lane.b32.xlu0 %v1104, 112
          %v1743 = vpop.permute.xlu0 %1742
          %v1744 = vsel %vm826, %v1741, %v1743
          %v1745 = vsel %vm826, %v1743, %v1741
          %s1746 = scalar_lea.vmem %s222, 128
          %v1747 = vld [vmem:[%s1746] sm:$0xff]
          %v1749 = vsel %vm320, %v1747, 0
          %v1752 = vsel %vm324, %v1744, 0
          %v1755 = vsel %vm324, %v1745, 0
          %1757 = vmatprep.subr.mxu0 %v1755
          %1758 = vmatpush1.msra.mxu0 %v1752
          %1759 = vmatprep.subr.mxu0 0.0
          %1760 = vmatpush1.msra.mxu0 0.0
          %1761 = vmatprep.subr.mxu0 0.0
          %1762 = vmatpush1.msra.mxu0 0.0
          %1763 = vmatprep.subr.mxu0 0.0
          %1764 = vmatpush1.msra.mxu0 0.0
          %1765 = vmatprep.subr.mxu0 0.0
          %1766 = vmatpush1.msra.mxu0 0.0
          %1767 = vmatprep.subr.mxu0 0.0
          %1768 = vmatpush1.msra.mxu0 0.0
          %1769 = vmatprep.subr.mxu0 0.0
          %1770 = vmatpush1.msra.mxu0 0.0
          %1771 = vmatprep.subr.mxu0 0.0
          %1772 = vmatpush1.msra.mxu0 0.0
          %1773 = vmatprep.subr.mxu0 0.0
          %1774 = vmatpush1.msra.mxu0 0.0
          %1775 = vmatprep.subr.mxu0 0.0
          %1776 = vmatpush1.msra.mxu0 0.0
          %1777 = vmatprep.subr.mxu0 0.0
          %1778 = vmatpush1.msra.mxu0 0.0
          %1779 = vmatprep.subr.mxu0 0.0
          %1780 = vmatpush1.msra.mxu0 0.0
          %1781 = vmatprep.subr.mxu0 0.0
          %1782 = vmatpush1.msra.mxu0 0.0
          %1783 = vmatprep.subr.mxu0 0.0
          %1784 = vmatpush1.msra.mxu0 0.0
          %1785 = vmatprep.subr.mxu0 0.0
          %1786 = vmatpush1.msra.mxu0 0.0
          %1787 = vmatprep.subr.mxu0 0.0
          %1788 = vmatpush1.msra.mxu0 0.0
          %1789 = vmatprep.subr.mxu0 0.0
          %1790 = vmatpush1.msra.mxu0 0.0
          %1791 = vmatprep.subr.mxu0 0.0
          %1792 = vmatpush1.msra.mxu0 0.0
          %1793 = vmatprep.subr.mxu0 0.0
          %1794 = vmatpush1.msra.mxu0 0.0
          %1795 = vmatprep.subr.mxu0 0.0
          %1796 = vmatpush1.msra.mxu0 0.0
          %1797 = vmatprep.subr.mxu0 0.0
          %1798 = vmatpush1.msra.mxu0 0.0
          %1799 = vmatprep.subr.mxu0 0.0
          %1800 = vmatpush1.msra.mxu0 0.0
          %1801 = vmatprep.subr.mxu0 0.0
          %1802 = vmatpush1.msra.mxu0 0.0
          %1803 = vmatprep.subr.mxu0 0.0
          %1804 = vmatpush1.msra.mxu0 0.0
          %1805 = vmatprep.subr.mxu0 0.0
          %1806 = vmatpush1.msra.mxu0 0.0
          %1807 = vmatprep.subr.mxu0 0.0
          %1808 = vmatpush1.msra.mxu0 0.0
          %1809 = vmatprep.subr.mxu0 0.0
          %1810 = vmatpush1.msra.mxu0 0.0
          %1811 = vmatprep.subr.mxu0 0.0
          %1812 = vmatpush1.msra.mxu0 0.0
          %1813 = vmatprep.subr.mxu0 0.0
          %1814 = vmatpush1.msra.mxu0 0.0
          %1815 = vmatprep.subr.mxu0 0.0
          %1816 = vmatpush1.msra.mxu0 0.0
          %1817 = vmatprep.subr.mxu0 0.0
          %1818 = vmatpush1.msra.mxu0 0.0
          %1819 = vmatprep.subr.mxu0 0.0
          %1820 = vmatpush1.msra.mxu0 0.0
          %1821 = vmatprep.mubr.f32.mxu0 0.0
          %1822 = vmatmul.mubr.f32.gmra.mrb[0].mxu0 %v1749
          %v1823 = vpop.f32.mrb[0].mxu0
          %v1824 = vadd.f32 0.0, %v1823
          %v1825 = vpop.f32.mrb[0].mxu0
          %v1826 = vadd.f32 0.0, %v1825
          %1827 = vdwg.mxu0
          %v1828 = vadd.f32 %v1738, %v1824
          %v1829 = vadd.f32 %v1739, %v1826
          %1830 = vrot.lane.b32.xlu0 %v1132, 112
          %v1831 = vpop.permute.xlu0 %1830
          %1832 = vrot.lane.b32.xlu0 %v1133, 112
          %v1833 = vpop.permute.xlu0 %1832
          %v1834 = vsel %vm826, %v1831, %v1833
          %v1835 = vsel %vm826, %v1833, %v1831
          %s1836 = scalar_lea.vmem %s222, 136
          %v1837 = vld [vmem:[%s1836] sm:$0xff]
          %v1839 = vsel %vm320, %v1837, 0
          %v1842 = vsel %vm324, %v1834, 0
          %v1845 = vsel %vm324, %v1835, 0
          %1847 = vmatprep.subr.mxu0 %v1845
          %1848 = vmatpush1.msra.mxu0 %v1842
          %1849 = vmatprep.subr.mxu0 0.0
          %1850 = vmatpush1.msra.mxu0 0.0
          %1851 = vmatprep.subr.mxu0 0.0
          %1852 = vmatpush1.msra.mxu0 0.0
          %1853 = vmatprep.subr.mxu0 0.0
          %1854 = vmatpush1.msra.mxu0 0.0
          %1855 = vmatprep.subr.mxu0 0.0
          %1856 = vmatpush1.msra.mxu0 0.0
          %1857 = vmatprep.subr.mxu0 0.0
          %1858 = vmatpush1.msra.mxu0 0.0
          %1859 = vmatprep.subr.mxu0 0.0
          %1860 = vmatpush1.msra.mxu0 0.0
          %1861 = vmatprep.subr.mxu0 0.0
          %1862 = vmatpush1.msra.mxu0 0.0
          %1863 = vmatprep.subr.mxu0 0.0
          %1864 = vmatpush1.msra.mxu0 0.0
          %1865 = vmatprep.subr.mxu0 0.0
          %1866 = vmatpush1.msra.mxu0 0.0
          %1867 = vmatprep.subr.mxu0 0.0
          %1868 = vmatpush1.msra.mxu0 0.0
          %1869 = vmatprep.subr.mxu0 0.0
          %1870 = vmatpush1.msra.mxu0 0.0
          %1871 = vmatprep.subr.mxu0 0.0
          %1872 = vmatpush1.msra.mxu0 0.0
          %1873 = vmatprep.subr.mxu0 0.0
          %1874 = vmatpush1.msra.mxu0 0.0
          %1875 = vmatprep.subr.mxu0 0.0
          %1876 = vmatpush1.msra.mxu0 0.0
          %1877 = vmatprep.subr.mxu0 0.0
          %1878 = vmatpush1.msra.mxu0 0.0
          %1879 = vmatprep.subr.mxu0 0.0
          %1880 = vmatpush1.msra.mxu0 0.0
          %1881 = vmatprep.subr.mxu0 0.0
          %1882 = vmatpush1.msra.mxu0 0.0
          %1883 = vmatprep.subr.mxu0 0.0
          %1884 = vmatpush1.msra.mxu0 0.0
          %1885 = vmatprep.subr.mxu0 0.0
          %1886 = vmatpush1.msra.mxu0 0.0
          %1887 = vmatprep.subr.mxu0 0.0
          %1888 = vmatpush1.msra.mxu0 0.0
          %1889 = vmatprep.subr.mxu0 0.0
          %1890 = vmatpush1.msra.mxu0 0.0
          %1891 = vmatprep.subr.mxu0 0.0
          %1892 = vmatpush1.msra.mxu0 0.0
          %1893 = vmatprep.subr.mxu0 0.0
          %1894 = vmatpush1.msra.mxu0 0.0
          %1895 = vmatprep.subr.mxu0 0.0
          %1896 = vmatpush1.msra.mxu0 0.0
          %1897 = vmatprep.subr.mxu0 0.0
          %1898 = vmatpush1.msra.mxu0 0.0
          %1899 = vmatprep.subr.mxu0 0.0
          %1900 = vmatpush1.msra.mxu0 0.0
          %1901 = vmatprep.subr.mxu0 0.0
          %1902 = vmatpush1.msra.mxu0 0.0
          %1903 = vmatprep.subr.mxu0 0.0
          %1904 = vmatpush1.msra.mxu0 0.0
          %1905 = vmatprep.subr.mxu0 0.0
          %1906 = vmatpush1.msra.mxu0 0.0
          %1907 = vmatprep.subr.mxu0 0.0
          %1908 = vmatpush1.msra.mxu0 0.0
          %1909 = vmatprep.subr.mxu0 0.0
          %1910 = vmatpush1.msra.mxu0 0.0
          %1911 = vmatprep.mubr.f32.mxu0 0.0
          %1912 = vmatmul.mubr.f32.gmra.mrb[0].mxu0 %v1839
          %v1913 = vpop.f32.mrb[0].mxu0
          %v1914 = vadd.f32 0.0, %v1913
          %v1915 = vpop.f32.mrb[0].mxu0
          %v1916 = vadd.f32 0.0, %v1915
          %1917 = vdwg.mxu0
          %v1918 = vadd.f32 %v1828, %v1914
          %v1919 = vadd.f32 %v1829, %v1916
          %v1920 = vpack.c.bf16 %v1918, %v1918
          %v1921 = vpack.c.bf16 %v1919, %v1919
          %v1924 = vunpack.c.l.b16 %v1920
          %v1925 = vunpack.c.l.b16 %v1921
          %v1926 = vpack.c.b16 %v1925, %v1924
          %1928 = vst [vmem:[%s206 + $0x8] sm:$0xff] %v1926
          %v1929 = vld [vmem:[%s215 + $0x10] sm:$0xff]
          %v1931 = vcombine.high %v1929, %v1929
          %1933 = vrot.lane.b32.xlu0 %v1929, 113
          %v1934 = vpop.permute.xlu0 %1933
          %1935 = vrot.lane.b32.xlu0 %v1931, 113
          %v1936 = vpop.permute.xlu0 %1935
          %v1937 = vsel %vm268, %v1934, %v1936
          %v1938 = vsel %vm268, %v1936, %v1934
          %1939 = vrot.lane.b32.xlu0 %v1929, 1
          %v1940 = vpop.permute.xlu0 %1939
          %1941 = vrot.lane.b32.xlu0 %v1931, 1
          %v1942 = vpop.permute.xlu0 %1941
          %v1943 = vsel %vm275, %v1940, %v1942
          %v1944 = vsel %vm275, %v1942, %v1940
          %v1945 = vsel %vm280, %v1937, %v1944
          %v1946 = vsel %vm281, %v1938, %v1943
          %1947 = vrot.lane.b32.xlu0 %v1929, 15
          %v1948 = vpop.permute.xlu0 %1947
          %1949 = vrot.lane.b32.xlu0 %v1931, 15
          %v1950 = vpop.permute.xlu0 %1949
          %v1951 = vsel %vm288, %v1948, %v1950
          %v1952 = vsel %vm288, %v1950, %v1948
          %1953 = vrot.lane.b32.xlu0 %v1929, 127
          %v1954 = vpop.permute.xlu0 %1953
          %1955 = vrot.lane.b32.xlu0 %v1931, 127
          %v1956 = vpop.permute.xlu0 %1955
          %v1957 = vsel %vm295, %v1954, %v1956
          %v1958 = vsel %vm295, %v1956, %v1954
          %v1959 = vsel %vm300, %v1952, %v1957
          %v1960 = vsel %vm301, %v1951, %v1958
          %1961 = vrot.lane.b32.xlu0 %v1945, 16
          %v1962 = vpop.permute.xlu0 %1961
          %1963 = vrot.lane.b32.xlu0 %v1946, 16
          %v1964 = vpop.permute.xlu0 %1963
          %v1965 = vsel %vm308, %v1962, %v1964
          %v1966 = vsel %vm308, %v1964, %v1962
          %s1967 = scalar_lea.vmem %s222, 144
          %v1968 = vld [vmem:[%s1967] sm:$0xff]
          %1969 = vrot.lane.b32.xlu0 %v1929, 16
          %v1970 = vpop.permute.xlu0 %1969
          %1971 = vrot.lane.b32.xlu0 %v1931, 16
          %v1972 = vpop.permute.xlu0 %1971
          %v1973 = vsel %vm308, %v1970, %v1972
          %v1974 = vsel %vm308, %v1972, %v1970
          %s1975 = scalar_lea.vmem %s222, 152
          %v1976 = vld [vmem:[%s1975] sm:$0xff]
          %v1978 = vsel %vm320, %v1976, 0
          %v1981 = vsel %vm324, %v1974, 0
          %v1984 = vsel %vm324, %v1973, 0
          %1986 = vmatprep.subr.mxu0 %v1984
          %1987 = vmatpush1.msra.mxu0 %v1981
          %1988 = vmatprep.subr.mxu0 0.0
          %1989 = vmatpush1.msra.mxu0 0.0
          %1990 = vmatprep.subr.mxu0 0.0
          %1991 = vmatpush1.msra.mxu0 0.0
          %1992 = vmatprep.subr.mxu0 0.0
          %1993 = vmatpush1.msra.mxu0 0.0
          %1994 = vmatprep.subr.mxu0 0.0
          %1995 = vmatpush1.msra.mxu0 0.0
          %1996 = vmatprep.subr.mxu0 0.0
          %1997 = vmatpush1.msra.mxu0 0.0
          %1998 = vmatprep.subr.mxu0 0.0
          %1999 = vmatpush1.msra.mxu0 0.0
          %2000 = vmatprep.subr.mxu0 0.0
          %2001 = vmatpush1.msra.mxu0 0.0
          %2002 = vmatprep.subr.mxu0 0.0
          %2003 = vmatpush1.msra.mxu0 0.0
          %2004 = vmatprep.subr.mxu0 0.0
          %2005 = vmatpush1.msra.mxu0 0.0
          %2006 = vmatprep.subr.mxu0 0.0
          %2007 = vmatpush1.msra.mxu0 0.0
          %2008 = vmatprep.subr.mxu0 0.0
          %2009 = vmatpush1.msra.mxu0 0.0
          %2010 = vmatprep.subr.mxu0 0.0
          %2011 = vmatpush1.msra.mxu0 0.0
          %2012 = vmatprep.subr.mxu0 0.0
          %2013 = vmatpush1.msra.mxu0 0.0
          %2014 = vmatprep.subr.mxu0 0.0
          %2015 = vmatpush1.msra.mxu0 0.0
          %2016 = vmatprep.subr.mxu0 0.0
          %2017 = vmatpush1.msra.mxu0 0.0
          %2018 = vmatprep.subr.mxu0 0.0
          %2019 = vmatpush1.msra.mxu0 0.0
          %2020 = vmatprep.subr.mxu0 0.0
          %2021 = vmatpush1.msra.mxu0 0.0
          %2022 = vmatprep.subr.mxu0 0.0
          %2023 = vmatpush1.msra.mxu0 0.0
          %2024 = vmatprep.subr.mxu0 0.0
          %2025 = vmatpush1.msra.mxu0 0.0
          %2026 = vmatprep.subr.mxu0 0.0
          %2027 = vmatpush1.msra.mxu0 0.0
          %2028 = vmatprep.subr.mxu0 0.0
          %2029 = vmatpush1.msra.mxu0 0.0
          %2030 = vmatprep.subr.mxu0 0.0
          %2031 = vmatpush1.msra.mxu0 0.0
          %2032 = vmatprep.subr.mxu0 0.0
          %2033 = vmatpush1.msra.mxu0 0.0
          %2034 = vmatprep.subr.mxu0 0.0
          %2035 = vmatpush1.msra.mxu0 0.0
          %2036 = vmatprep.subr.mxu0 0.0
          %2037 = vmatpush1.msra.mxu0 0.0
          %2038 = vmatprep.subr.mxu0 0.0
          %2039 = vmatpush1.msra.mxu0 0.0
          %2040 = vmatprep.subr.mxu0 0.0
          %2041 = vmatpush1.msra.mxu0 0.0
          %2042 = vmatprep.subr.mxu0 0.0
          %2043 = vmatpush1.msra.mxu0 0.0
          %2044 = vmatprep.subr.mxu0 0.0
          %2045 = vmatpush1.msra.mxu0 0.0
          %2046 = vmatprep.subr.mxu0 0.0
          %2047 = vmatpush1.msra.mxu0 0.0
          %2048 = vmatprep.subr.mxu0 0.0
          %2049 = vmatpush1.msra.mxu0 0.0
          %2050 = vmatprep.mubr.f32.mxu0 0.0
          %2051 = vmatmul.mubr.f32.gmra.mrb[0].mxu0 %v1978
          %v2052 = vpop.f32.mrb[0].mxu0
          %v2053 = vadd.f32 0.0, %v2052
          %v2054 = vpop.f32.mrb[0].mxu0
          %v2055 = vadd.f32 0.0, %v2054
          %2056 = vdwg.mxu0
          %v2058 = vsel %vm320, %v1968, 0
          %v2061 = vsel %vm324, %v1966, 0
          %v2064 = vsel %vm324, %v1965, 0
          %2066 = vmatprep.subr.mxu0 %v2064
          %2067 = vmatpush1.msra.mxu0 %v2061
          %2068 = vmatprep.subr.mxu0 0.0
          %2069 = vmatpush1.msra.mxu0 0.0
          %2070 = vmatprep.subr.mxu0 0.0
          %2071 = vmatpush1.msra.mxu0 0.0
          %2072 = vmatprep.subr.mxu0 0.0
          %2073 = vmatpush1.msra.mxu0 0.0
          %2074 = vmatprep.subr.mxu0 0.0
          %2075 = vmatpush1.msra.mxu0 0.0
          %2076 = vmatprep.subr.mxu0 0.0
          %2077 = vmatpush1.msra.mxu0 0.0
          %2078 = vmatprep.subr.mxu0 0.0
          %2079 = vmatpush1.msra.mxu0 0.0
          %2080 = vmatprep.subr.mxu0 0.0
          %2081 = vmatpush1.msra.mxu0 0.0
          %2082 = vmatprep.subr.mxu0 0.0
          %2083 = vmatpush1.msra.mxu0 0.0
          %2084 = vmatprep.subr.mxu0 0.0
          %2085 = vmatpush1.msra.mxu0 0.0
          %2086 = vmatprep.subr.mxu0 0.0
          %2087 = vmatpush1.msra.mxu0 0.0
          %2088 = vmatprep.subr.mxu0 0.0
          %2089 = vmatpush1.msra.mxu0 0.0
          %2090 = vmatprep.subr.mxu0 0.0
          %2091 = vmatpush1.msra.mxu0 0.0
          %2092 = vmatprep.subr.mxu0 0.0
          %2093 = vmatpush1.msra.mxu0 0.0
          %2094 = vmatprep.subr.mxu0 0.0
          %2095 = vmatpush1.msra.mxu0 0.0
          %2096 = vmatprep.subr.mxu0 0.0
          %2097 = vmatpush1.msra.mxu0 0.0
          %2098 = vmatprep.subr.mxu0 0.0
          %2099 = vmatpush1.msra.mxu0 0.0
          %2100 = vmatprep.subr.mxu0 0.0
          %2101 = vmatpush1.msra.mxu0 0.0
          %2102 = vmatprep.subr.mxu0 0.0
          %2103 = vmatpush1.msra.mxu0 0.0
          %2104 = vmatprep.subr.mxu0 0.0
          %2105 = vmatpush1.msra.mxu0 0.0
          %2106 = vmatprep.subr.mxu0 0.0
          %2107 = vmatpush1.msra.mxu0 0.0
          %2108 = vmatprep.subr.mxu0 0.0
          %2109 = vmatpush1.msra.mxu0 0.0
          %2110 = vmatprep.subr.mxu0 0.0
          %2111 = vmatpush1.msra.mxu0 0.0
          %2112 = vmatprep.subr.mxu0 0.0
          %2113 = vmatpush1.msra.mxu0 0.0
          %2114 = vmatprep.subr.mxu0 0.0
          %2115 = vmatpush1.msra.mxu0 0.0
          %2116 = vmatprep.subr.mxu0 0.0
          %2117 = vmatpush1.msra.mxu0 0.0
          %2118 = vmatprep.subr.mxu0 0.0
          %2119 = vmatpush1.msra.mxu0 0.0
          %2120 = vmatprep.subr.mxu0 0.0
          %2121 = vmatpush1.msra.mxu0 0.0
          %2122 = vmatprep.subr.mxu0 0.0
          %2123 = vmatpush1.msra.mxu0 0.0
          %2124 = vmatprep.subr.mxu0 0.0
          %2125 = vmatpush1.msra.mxu0 0.0
          %2126 = vmatprep.subr.mxu0 0.0
          %2127 = vmatpush1.msra.mxu0 0.0
          %2128 = vmatprep.subr.mxu0 0.0
          %2129 = vmatpush1.msra.mxu0 0.0
          %2130 = vmatprep.mubr.f32.mxu0 0.0
          %2131 = vmatmul.mubr.f32.gmra.mrb[0].mxu0 %v2058
          %v2132 = vpop.f32.mrb[0].mxu0
          %v2133 = vadd.f32 %v2053, %v2132
          %v2134 = vpop.f32.mrb[0].mxu0
          %v2135 = vadd.f32 %v2055, %v2134
          %2136 = vdwg.mxu0
          %2137 = vrot.lane.b32.xlu0 %v1959, 16
          %v2138 = vpop.permute.xlu0 %2137
          %2139 = vrot.lane.b32.xlu0 %v1960, 16
          %v2140 = vpop.permute.xlu0 %2139
          %v2141 = vsel %vm308, %v2138, %v2140
          %v2142 = vsel %vm308, %v2140, %v2138
          %s2143 = scalar_lea.vmem %s222, 160
          %v2144 = vld [vmem:[%s2143] sm:$0xff]
          %v2146 = vsel %vm320, %v2144, 0
          %v2149 = vsel %vm324, %v2142, 0
          %v2152 = vsel %vm324, %v2141, 0
          %2154 = vmatprep.subr.mxu0 %v2152
          %2155 = vmatpush1.msra.mxu0 %v2149
          %2156 = vmatprep.subr.mxu0 0.0
          %2157 = vmatpush1.msra.mxu0 0.0
          %2158 = vmatprep.subr.mxu0 0.0
          %2159 = vmatpush1.msra.mxu0 0.0
          %2160 = vmatprep.subr.mxu0 0.0
          %2161 = vmatpush1.msra.mxu0 0.0
          %2162 = vmatprep.subr.mxu0 0.0
          %2163 = vmatpush1.msra.mxu0 0.0
          %2164 = vmatprep.subr.mxu0 0.0
          %2165 = vmatpush1.msra.mxu0 0.0
          %2166 = vmatprep.subr.mxu0 0.0
          %2167 = vmatpush1.msra.mxu0 0.0
          %2168 = vmatprep.subr.mxu0 0.0
          %2169 = vmatpush1.msra.mxu0 0.0
          %2170 = vmatprep.subr.mxu0 0.0
          %2171 = vmatpush1.msra.mxu0 0.0
          %2172 = vmatprep.subr.mxu0 0.0
          %2173 = vmatpush1.msra.mxu0 0.0
          %2174 = vmatprep.subr.mxu0 0.0
          %2175 = vmatpush1.msra.mxu0 0.0
          %2176 = vmatprep.subr.mxu0 0.0
          %2177 = vmatpush1.msra.mxu0 0.0
          %2178 = vmatprep.subr.mxu0 0.0
          %2179 = vmatpush1.msra.mxu0 0.0
          %2180 = vmatprep.subr.mxu0 0.0
          %2181 = vmatpush1.msra.mxu0 0.0
          %2182 = vmatprep.subr.mxu0 0.0
          %2183 = vmatpush1.msra.mxu0 0.0
          %2184 = vmatprep.subr.mxu0 0.0
          %2185 = vmatpush1.msra.mxu0 0.0
          %2186 = vmatprep.subr.mxu0 0.0
          %2187 = vmatpush1.msra.mxu0 0.0
          %2188 = vmatprep.subr.mxu0 0.0
          %2189 = vmatpush1.msra.mxu0 0.0
          %2190 = vmatprep.subr.mxu0 0.0
          %2191 = vmatpush1.msra.mxu0 0.0
          %2192 = vmatprep.subr.mxu0 0.0
          %2193 = vmatpush1.msra.mxu0 0.0
          %2194 = vmatprep.subr.mxu0 0.0
          %2195 = vmatpush1.msra.mxu0 0.0
          %2196 = vmatprep.subr.mxu0 0.0
          %2197 = vmatpush1.msra.mxu0 0.0
          %2198 = vmatprep.subr.mxu0 0.0
          %2199 = vmatpush1.msra.mxu0 0.0
          %2200 = vmatprep.subr.mxu0 0.0
          %2201 = vmatpush1.msra.mxu0 0.0
          %2202 = vmatprep.subr.mxu0 0.0
          %2203 = vmatpush1.msra.mxu0 0.0
          %2204 = vmatprep.subr.mxu0 0.0
          %2205 = vmatpush1.msra.mxu0 0.0
          %2206 = vmatprep.subr.mxu0 0.0
          %2207 = vmatpush1.msra.mxu0 0.0
          %2208 = vmatprep.subr.mxu0 0.0
          %2209 = vmatpush1.msra.mxu0 0.0
          %2210 = vmatprep.subr.mxu0 0.0
          %2211 = vmatpush1.msra.mxu0 0.0
          %2212 = vmatprep.subr.mxu0 0.0
          %2213 = vmatpush1.msra.mxu0 0.0
          %2214 = vmatprep.subr.mxu0 0.0
          %2215 = vmatpush1.msra.mxu0 0.0
          %2216 = vmatprep.subr.mxu0 0.0
          %2217 = vmatpush1.msra.mxu0 0.0
          %2218 = vmatprep.mubr.f32.mxu0 0.0
          %2219 = vmatmul.mubr.f32.gmra.mrb[0].mxu0 %v2146
          %v2220 = vpop.f32.mrb[0].mxu0
          %v2221 = vadd.f32 0.0, %v2220
          %v2222 = vpop.f32.mrb[0].mxu0
          %v2223 = vadd.f32 0.0, %v2222
          %2224 = vdwg.mxu0
          %v2225 = vadd.f32 %v2133, %v2221
          %v2226 = vadd.f32 %v2135, %v2223
          %s2227 = scalar_lea.vmem %s222, 168
          %v2228 = vld [vmem:[%s2227] sm:$0xff]
          %v2230 = vsel %vm320, %v2228, 0
          %v2233 = vsel %vm324, %v1945, 0
          %v2236 = vsel %vm324, %v1946, 0
          %2238 = vmatprep.subr.mxu0 %v2236
          %2239 = vmatpush1.msra.mxu0 %v2233
          %2240 = vmatprep.subr.mxu0 0.0
          %2241 = vmatpush1.msra.mxu0 0.0
          %2242 = vmatprep.subr.mxu0 0.0
          %2243 = vmatpush1.msra.mxu0 0.0
          %2244 = vmatprep.subr.mxu0 0.0
          %2245 = vmatpush1.msra.mxu0 0.0
          %2246 = vmatprep.subr.mxu0 0.0
          %2247 = vmatpush1.msra.mxu0 0.0
          %2248 = vmatprep.subr.mxu0 0.0
          %2249 = vmatpush1.msra.mxu0 0.0
          %2250 = vmatprep.subr.mxu0 0.0
          %2251 = vmatpush1.msra.mxu0 0.0
          %2252 = vmatprep.subr.mxu0 0.0
          %2253 = vmatpush1.msra.mxu0 0.0
          %2254 = vmatprep.subr.mxu0 0.0
          %2255 = vmatpush1.msra.mxu0 0.0
          %2256 = vmatprep.subr.mxu0 0.0
          %2257 = vmatpush1.msra.mxu0 0.0
          %2258 = vmatprep.subr.mxu0 0.0
          %2259 = vmatpush1.msra.mxu0 0.0
          %2260 = vmatprep.subr.mxu0 0.0
          %2261 = vmatpush1.msra.mxu0 0.0
          %2262 = vmatprep.subr.mxu0 0.0
          %2263 = vmatpush1.msra.mxu0 0.0
          %2264 = vmatprep.subr.mxu0 0.0
          %2265 = vmatpush1.msra.mxu0 0.0
          %2266 = vmatprep.subr.mxu0 0.0
          %2267 = vmatpush1.msra.mxu0 0.0
          %2268 = vmatprep.subr.mxu0 0.0
          %2269 = vmatpush1.msra.mxu0 0.0
          %2270 = vmatprep.subr.mxu0 0.0
          %2271 = vmatpush1.msra.mxu0 0.0
          %2272 = vmatprep.subr.mxu0 0.0
          %2273 = vmatpush1.msra.mxu0 0.0
          %2274 = vmatprep.subr.mxu0 0.0
          %2275 = vmatpush1.msra.mxu0 0.0
          %2276 = vmatprep.subr.mxu0 0.0
          %2277 = vmatpush1.msra.mxu0 0.0
          %2278 = vmatprep.subr.mxu0 0.0
          %2279 = vmatpush1.msra.mxu0 0.0
          %2280 = vmatprep.subr.mxu0 0.0
          %2281 = vmatpush1.msra.mxu0 0.0
          %2282 = vmatprep.subr.mxu0 0.0
          %2283 = vmatpush1.msra.mxu0 0.0
          %2284 = vmatprep.subr.mxu0 0.0
          %2285 = vmatpush1.msra.mxu0 0.0
          %2286 = vmatprep.subr.mxu0 0.0
          %2287 = vmatpush1.msra.mxu0 0.0
          %2288 = vmatprep.subr.mxu0 0.0
          %2289 = vmatpush1.msra.mxu0 0.0
          %2290 = vmatprep.subr.mxu0 0.0
          %2291 = vmatpush1.msra.mxu0 0.0
          %2292 = vmatprep.subr.mxu0 0.0
          %2293 = vmatpush1.msra.mxu0 0.0
          %2294 = vmatprep.subr.mxu0 0.0
          %2295 = vmatpush1.msra.mxu0 0.0
          %2296 = vmatprep.subr.mxu0 0.0
          %2297 = vmatpush1.msra.mxu0 0.0
          %2298 = vmatprep.subr.mxu0 0.0
          %2299 = vmatpush1.msra.mxu0 0.0
          %2300 = vmatprep.subr.mxu0 0.0
          %2301 = vmatpush1.msra.mxu0 0.0
          %2302 = vmatprep.mubr.f32.mxu0 0.0
          %2303 = vmatmul.mubr.f32.gmra.mrb[0].mxu0 %v2230
          %v2304 = vpop.f32.mrb[0].mxu0
          %v2305 = vadd.f32 0.0, %v2304
          %v2306 = vpop.f32.mrb[0].mxu0
          %v2307 = vadd.f32 0.0, %v2306
          %2308 = vdwg.mxu0
          %v2309 = vadd.f32 %v2225, %v2305
          %v2310 = vadd.f32 %v2226, %v2307
          %s2311 = scalar_lea.vmem %s222, 176
          %v2312 = vld [vmem:[%s2311] sm:$0xff]
          %v2314 = vsel %vm320, %v2312, 0
          %v2316 = vsel %vm324, %v1929, 0
          %v2318 = vsel %vm324, %v1931, 0
          %2320 = vmatprep.subr.mxu0 %v2318
          %2321 = vmatpush1.msra.mxu0 %v2316
          %2322 = vmatprep.subr.mxu0 0.0
          %2323 = vmatpush1.msra.mxu0 0.0
          %2324 = vmatprep.subr.mxu0 0.0
          %2325 = vmatpush1.msra.mxu0 0.0
          %2326 = vmatprep.subr.mxu0 0.0
          %2327 = vmatpush1.msra.mxu0 0.0
          %2328 = vmatprep.subr.mxu0 0.0
          %2329 = vmatpush1.msra.mxu0 0.0
          %2330 = vmatprep.subr.mxu0 0.0
          %2331 = vmatpush1.msra.mxu0 0.0
          %2332 = vmatprep.subr.mxu0 0.0
          %2333 = vmatpush1.msra.mxu0 0.0
          %2334 = vmatprep.subr.mxu0 0.0
          %2335 = vmatpush1.msra.mxu0 0.0
          %2336 = vmatprep.subr.mxu0 0.0
          %2337 = vmatpush1.msra.mxu0 0.0
          %2338 = vmatprep.subr.mxu0 0.0
          %2339 = vmatpush1.msra.mxu0 0.0
          %2340 = vmatprep.subr.mxu0 0.0
          %2341 = vmatpush1.msra.mxu0 0.0
          %2342 = vmatprep.subr.mxu0 0.0
          %2343 = vmatpush1.msra.mxu0 0.0
          %2344 = vmatprep.subr.mxu0 0.0
          %2345 = vmatpush1.msra.mxu0 0.0
          %2346 = vmatprep.subr.mxu0 0.0
          %2347 = vmatpush1.msra.mxu0 0.0
          %2348 = vmatprep.subr.mxu0 0.0
          %2349 = vmatpush1.msra.mxu0 0.0
          %2350 = vmatprep.subr.mxu0 0.0
          %2351 = vmatpush1.msra.mxu0 0.0
          %2352 = vmatprep.subr.mxu0 0.0
          %2353 = vmatpush1.msra.mxu0 0.0
          %2354 = vmatprep.subr.mxu0 0.0
          %2355 = vmatpush1.msra.mxu0 0.0
          %2356 = vmatprep.subr.mxu0 0.0
          %2357 = vmatpush1.msra.mxu0 0.0
          %2358 = vmatprep.subr.mxu0 0.0
          %2359 = vmatpush1.msra.mxu0 0.0
          %2360 = vmatprep.subr.mxu0 0.0
          %2361 = vmatpush1.msra.mxu0 0.0
          %2362 = vmatprep.subr.mxu0 0.0
          %2363 = vmatpush1.msra.mxu0 0.0
          %2364 = vmatprep.subr.mxu0 0.0
          %2365 = vmatpush1.msra.mxu0 0.0
          %2366 = vmatprep.subr.mxu0 0.0
          %2367 = vmatpush1.msra.mxu0 0.0
          %2368 = vmatprep.subr.mxu0 0.0
          %2369 = vmatpush1.msra.mxu0 0.0
          %2370 = vmatprep.subr.mxu0 0.0
          %2371 = vmatpush1.msra.mxu0 0.0
          %2372 = vmatprep.subr.mxu0 0.0
          %2373 = vmatpush1.msra.mxu0 0.0
          %2374 = vmatprep.subr.mxu0 0.0
          %2375 = vmatpush1.msra.mxu0 0.0
          %2376 = vmatprep.subr.mxu0 0.0
          %2377 = vmatpush1.msra.mxu0 0.0
          %2378 = vmatprep.subr.mxu0 0.0
          %2379 = vmatpush1.msra.mxu0 0.0
          %2380 = vmatprep.subr.mxu0 0.0
          %2381 = vmatpush1.msra.mxu0 0.0
          %2382 = vmatprep.subr.mxu0 0.0
          %2383 = vmatpush1.msra.mxu0 0.0
          %2384 = vmatprep.mubr.f32.mxu0 0.0
          %2385 = vmatmul.mubr.f32.gmra.mrb[0].mxu0 %v2314
          %v2386 = vpop.f32.mrb[0].mxu0
          %v2387 = vadd.f32 0.0, %v2386
          %v2388 = vpop.f32.mrb[0].mxu0
          %v2389 = vadd.f32 0.0, %v2388
          %2390 = vdwg.mxu0
          %v2391 = vadd.f32 %v2309, %v2387
          %v2392 = vadd.f32 %v2310, %v2389
          %s2393 = scalar_lea.vmem %s222, 184
          %v2394 = vld [vmem:[%s2393] sm:$0xff]
          %v2396 = vsel %vm320, %v2394, 0
          %v2399 = vsel %vm324, %v1959, 0
          %v2402 = vsel %vm324, %v1960, 0
          %2404 = vmatprep.subr.mxu0 %v2402
          %2405 = vmatpush1.msra.mxu0 %v2399
          %2406 = vmatprep.subr.mxu0 0.0
          %2407 = vmatpush1.msra.mxu0 0.0
          %2408 = vmatprep.subr.mxu0 0.0
          %2409 = vmatpush1.msra.mxu0 0.0
          %2410 = vmatprep.subr.mxu0 0.0
          %2411 = vmatpush1.msra.mxu0 0.0
          %2412 = vmatprep.subr.mxu0 0.0
          %2413 = vmatpush1.msra.mxu0 0.0
          %2414 = vmatprep.subr.mxu0 0.0
          %2415 = vmatpush1.msra.mxu0 0.0
          %2416 = vmatprep.subr.mxu0 0.0
          %2417 = vmatpush1.msra.mxu0 0.0
          %2418 = vmatprep.subr.mxu0 0.0
          %2419 = vmatpush1.msra.mxu0 0.0
          %2420 = vmatprep.subr.mxu0 0.0
          %2421 = vmatpush1.msra.mxu0 0.0
          %2422 = vmatprep.subr.mxu0 0.0
          %2423 = vmatpush1.msra.mxu0 0.0
          %2424 = vmatprep.subr.mxu0 0.0
          %2425 = vmatpush1.msra.mxu0 0.0
          %2426 = vmatprep.subr.mxu0 0.0
          %2427 = vmatpush1.msra.mxu0 0.0
          %2428 = vmatprep.subr.mxu0 0.0
          %2429 = vmatpush1.msra.mxu0 0.0
          %2430 = vmatprep.subr.mxu0 0.0
          %2431 = vmatpush1.msra.mxu0 0.0
          %2432 = vmatprep.subr.mxu0 0.0
          %2433 = vmatpush1.msra.mxu0 0.0
          %2434 = vmatprep.subr.mxu0 0.0
          %2435 = vmatpush1.msra.mxu0 0.0
          %2436 = vmatprep.subr.mxu0 0.0
          %2437 = vmatpush1.msra.mxu0 0.0
          %2438 = vmatprep.subr.mxu0 0.0
          %2439 = vmatpush1.msra.mxu0 0.0
          %2440 = vmatprep.subr.mxu0 0.0
          %2441 = vmatpush1.msra.mxu0 0.0
          %2442 = vmatprep.subr.mxu0 0.0
          %2443 = vmatpush1.msra.mxu0 0.0
          %2444 = vmatprep.subr.mxu0 0.0
          %2445 = vmatpush1.msra.mxu0 0.0
          %2446 = vmatprep.subr.mxu0 0.0
          %2447 = vmatpush1.msra.mxu0 0.0
          %2448 = vmatprep.subr.mxu0 0.0
          %2449 = vmatpush1.msra.mxu0 0.0
          %2450 = vmatprep.subr.mxu0 0.0
          %2451 = vmatpush1.msra.mxu0 0.0
          %2452 = vmatprep.subr.mxu0 0.0
          %2453 = vmatpush1.msra.mxu0 0.0
          %2454 = vmatprep.subr.mxu0 0.0
          %2455 = vmatpush1.msra.mxu0 0.0
          %2456 = vmatprep.subr.mxu0 0.0
          %2457 = vmatpush1.msra.mxu0 0.0
          %2458 = vmatprep.subr.mxu0 0.0
          %2459 = vmatpush1.msra.mxu0 0.0
          %2460 = vmatprep.subr.mxu0 0.0
          %2461 = vmatpush1.msra.mxu0 0.0
          %2462 = vmatprep.subr.mxu0 0.0
          %2463 = vmatpush1.msra.mxu0 0.0
          %2464 = vmatprep.subr.mxu0 0.0
          %2465 = vmatpush1.msra.mxu0 0.0
          %2466 = vmatprep.subr.mxu0 0.0
          %2467 = vmatpush1.msra.mxu0 0.0
          %2468 = vmatprep.mubr.f32.mxu0 0.0
          %2469 = vmatmul.mubr.f32.gmra.mrb[0].mxu0 %v2396
          %v2470 = vpop.f32.mrb[0].mxu0
          %v2471 = vadd.f32 0.0, %v2470
          %v2472 = vpop.f32.mrb[0].mxu0
          %v2473 = vadd.f32 0.0, %v2472
          %2474 = vdwg.mxu0
          %v2475 = vadd.f32 %v2391, %v2471
          %v2476 = vadd.f32 %v2392, %v2473
          %2477 = vrot.lane.b32.xlu0 %v1945, 112
          %v2478 = vpop.permute.xlu0 %2477
          %2479 = vrot.lane.b32.xlu0 %v1946, 112
          %v2480 = vpop.permute.xlu0 %2479
          %v2481 = vsel %vm826, %v2478, %v2480
          %v2482 = vsel %vm826, %v2480, %v2478
          %s2483 = scalar_lea.vmem %s222, 192
          %v2484 = vld [vmem:[%s2483] sm:$0xff]
          %v2486 = vsel %vm320, %v2484, 0
          %v2489 = vsel %vm324, %v2481, 0
          %v2492 = vsel %vm324, %v2482, 0
          %2494 = vmatprep.subr.mxu0 %v2492
          %2495 = vmatpush1.msra.mxu0 %v2489
          %2496 = vmatprep.subr.mxu0 0.0
          %2497 = vmatpush1.msra.mxu0 0.0
          %2498 = vmatprep.subr.mxu0 0.0
          %2499 = vmatpush1.msra.mxu0 0.0
          %2500 = vmatprep.subr.mxu0 0.0
          %2501 = vmatpush1.msra.mxu0 0.0
          %2502 = vmatprep.subr.mxu0 0.0
          %2503 = vmatpush1.msra.mxu0 0.0
          %2504 = vmatprep.subr.mxu0 0.0
          %2505 = vmatpush1.msra.mxu0 0.0
          %2506 = vmatprep.subr.mxu0 0.0
          %2507 = vmatpush1.msra.mxu0 0.0
          %2508 = vmatprep.subr.mxu0 0.0
          %2509 = vmatpush1.msra.mxu0 0.0
          %2510 = vmatprep.subr.mxu0 0.0
          %2511 = vmatpush1.msra.mxu0 0.0
          %2512 = vmatprep.subr.mxu0 0.0
          %2513 = vmatpush1.msra.mxu0 0.0
          %2514 = vmatprep.subr.mxu0 0.0
          %2515 = vmatpush1.msra.mxu0 0.0
          %2516 = vmatprep.subr.mxu0 0.0
          %2517 = vmatpush1.msra.mxu0 0.0
          %2518 = vmatprep.subr.mxu0 0.0
          %2519 = vmatpush1.msra.mxu0 0.0
          %2520 = vmatprep.subr.mxu0 0.0
          %2521 = vmatpush1.msra.mxu0 0.0
          %2522 = vmatprep.subr.mxu0 0.0
          %2523 = vmatpush1.msra.mxu0 0.0
          %2524 = vmatprep.subr.mxu0 0.0
          %2525 = vmatpush1.msra.mxu0 0.0
          %2526 = vmatprep.subr.mxu0 0.0
          %2527 = vmatpush1.msra.mxu0 0.0
          %2528 = vmatprep.subr.mxu0 0.0
          %2529 = vmatpush1.msra.mxu0 0.0
          %2530 = vmatprep.subr.mxu0 0.0
          %2531 = vmatpush1.msra.mxu0 0.0
          %2532 = vmatprep.subr.mxu0 0.0
          %2533 = vmatpush1.msra.mxu0 0.0
          %2534 = vmatprep.subr.mxu0 0.0
          %2535 = vmatpush1.msra.mxu0 0.0
          %2536 = vmatprep.subr.mxu0 0.0
          %2537 = vmatpush1.msra.mxu0 0.0
          %2538 = vmatprep.subr.mxu0 0.0
          %2539 = vmatpush1.msra.mxu0 0.0
          %2540 = vmatprep.subr.mxu0 0.0
          %2541 = vmatpush1.msra.mxu0 0.0
          %2542 = vmatprep.subr.mxu0 0.0
          %2543 = vmatpush1.msra.mxu0 0.0
          %2544 = vmatprep.subr.mxu0 0.0
          %2545 = vmatpush1.msra.mxu0 0.0
          %2546 = vmatprep.subr.mxu0 0.0
          %2547 = vmatpush1.msra.mxu0 0.0
          %2548 = vmatprep.subr.mxu0 0.0
          %2549 = vmatpush1.msra.mxu0 0.0
          %2550 = vmatprep.subr.mxu0 0.0
          %2551 = vmatpush1.msra.mxu0 0.0
          %2552 = vmatprep.subr.mxu0 0.0
          %2553 = vmatpush1.msra.mxu0 0.0
          %2554 = vmatprep.subr.mxu0 0.0
          %2555 = vmatpush1.msra.mxu0 0.0
          %2556 = vmatprep.subr.mxu0 0.0
          %2557 = vmatpush1.msra.mxu0 0.0
          %2558 = vmatprep.mubr.f32.mxu0 0.0
          %2559 = vmatmul.mubr.f32.gmra.mrb[0].mxu0 %v2486
          %v2560 = vpop.f32.mrb[0].mxu0
          %v2561 = vadd.f32 0.0, %v2560
          %v2562 = vpop.f32.mrb[0].mxu0
          %v2563 = vadd.f32 0.0, %v2562
          %2564 = vdwg.mxu0
          %v2565 = vadd.f32 %v2475, %v2561
          %v2566 = vadd.f32 %v2476, %v2563
          %2567 = vrot.lane.b32.xlu0 %v1929, 112
          %v2568 = vpop.permute.xlu0 %2567
          %2569 = vrot.lane.b32.xlu0 %v1931, 112
          %v2570 = vpop.permute.xlu0 %2569
          %v2571 = vsel %vm826, %v2568, %v2570
          %v2572 = vsel %vm826, %v2570, %v2568
          %s2573 = scalar_lea.vmem %s222, 200
          %v2574 = vld [vmem:[%s2573] sm:$0xff]
          %v2576 = vsel %vm320, %v2574, 0
          %v2579 = vsel %vm324, %v2571, 0
          %v2582 = vsel %vm324, %v2572, 0
          %2584 = vmatprep.subr.mxu0 %v2582
          %2585 = vmatpush1.msra.mxu0 %v2579
          %2586 = vmatprep.subr.mxu0 0.0
          %2587 = vmatpush1.msra.mxu0 0.0
          %2588 = vmatprep.subr.mxu0 0.0
          %2589 = vmatpush1.msra.mxu0 0.0
          %2590 = vmatprep.subr.mxu0 0.0
          %2591 = vmatpush1.msra.mxu0 0.0
          %2592 = vmatprep.subr.mxu0 0.0
          %2593 = vmatpush1.msra.mxu0 0.0
          %2594 = vmatprep.subr.mxu0 0.0
          %2595 = vmatpush1.msra.mxu0 0.0
          %2596 = vmatprep.subr.mxu0 0.0
          %2597 = vmatpush1.msra.mxu0 0.0
          %2598 = vmatprep.subr.mxu0 0.0
          %2599 = vmatpush1.msra.mxu0 0.0
          %2600 = vmatprep.subr.mxu0 0.0
          %2601 = vmatpush1.msra.mxu0 0.0
          %2602 = vmatprep.subr.mxu0 0.0
          %2603 = vmatpush1.msra.mxu0 0.0
          %2604 = vmatprep.subr.mxu0 0.0
          %2605 = vmatpush1.msra.mxu0 0.0
          %2606 = vmatprep.subr.mxu0 0.0
          %2607 = vmatpush1.msra.mxu0 0.0
          %2608 = vmatprep.subr.mxu0 0.0
          %2609 = vmatpush1.msra.mxu0 0.0
          %2610 = vmatprep.subr.mxu0 0.0
          %2611 = vmatpush1.msra.mxu0 0.0
          %2612 = vmatprep.subr.mxu0 0.0
          %2613 = vmatpush1.msra.mxu0 0.0
          %2614 = vmatprep.subr.mxu0 0.0
          %2615 = vmatpush1.msra.mxu0 0.0
          %2616 = vmatprep.subr.mxu0 0.0
          %2617 = vmatpush1.msra.mxu0 0.0
          %2618 = vmatprep.subr.mxu0 0.0
          %2619 = vmatpush1.msra.mxu0 0.0
          %2620 = vmatprep.subr.mxu0 0.0
          %2621 = vmatpush1.msra.mxu0 0.0
          %2622 = vmatprep.subr.mxu0 0.0
          %2623 = vmatpush1.msra.mxu0 0.0
          %2624 = vmatprep.subr.mxu0 0.0
          %2625 = vmatpush1.msra.mxu0 0.0
          %2626 = vmatprep.subr.mxu0 0.0
          %2627 = vmatpush1.msra.mxu0 0.0
          %2628 = vmatprep.subr.mxu0 0.0
          %2629 = vmatpush1.msra.mxu0 0.0
          %2630 = vmatprep.subr.mxu0 0.0
          %2631 = vmatpush1.msra.mxu0 0.0
          %2632 = vmatprep.subr.mxu0 0.0
          %2633 = vmatpush1.msra.mxu0 0.0
          %2634 = vmatprep.subr.mxu0 0.0
          %2635 = vmatpush1.msra.mxu0 0.0
          %2636 = vmatprep.subr.mxu0 0.0
          %2637 = vmatpush1.msra.mxu0 0.0
          %2638 = vmatprep.subr.mxu0 0.0
          %2639 = vmatpush1.msra.mxu0 0.0
          %2640 = vmatprep.subr.mxu0 0.0
          %2641 = vmatpush1.msra.mxu0 0.0
          %2642 = vmatprep.subr.mxu0 0.0
          %2643 = vmatpush1.msra.mxu0 0.0
          %2644 = vmatprep.subr.mxu0 0.0
          %2645 = vmatpush1.msra.mxu0 0.0
          %2646 = vmatprep.subr.mxu0 0.0
          %2647 = vmatpush1.msra.mxu0 0.0
          %2648 = vmatprep.mubr.f32.mxu0 0.0
          %2649 = vmatmul.mubr.f32.gmra.mrb[0].mxu0 %v2576
          %v2650 = vpop.f32.mrb[0].mxu0
          %v2651 = vadd.f32 0.0, %v2650
          %v2652 = vpop.f32.mrb[0].mxu0
          %v2653 = vadd.f32 0.0, %v2652
          %2654 = vdwg.mxu0
          %v2655 = vadd.f32 %v2565, %v2651
          %v2656 = vadd.f32 %v2566, %v2653
          %2657 = vrot.lane.b32.xlu0 %v1959, 112
          %v2658 = vpop.permute.xlu0 %2657
          %2659 = vrot.lane.b32.xlu0 %v1960, 112
          %v2660 = vpop.permute.xlu0 %2659
          %v2661 = vsel %vm826, %v2658, %v2660
          %v2662 = vsel %vm826, %v2660, %v2658
          %s2663 = scalar_lea.vmem %s222, 208
          %v2664 = vld [vmem:[%s2663] sm:$0xff]
          %v2666 = vsel %vm320, %v2664, 0
          %v2669 = vsel %vm324, %v2661, 0
          %v2672 = vsel %vm324, %v2662, 0
          %2674 = vmatprep.subr.mxu0 %v2672
          %2675 = vmatpush1.msra.mxu0 %v2669
          %2676 = vmatprep.subr.mxu0 0.0
          %2677 = vmatpush1.msra.mxu0 0.0
          %2678 = vmatprep.subr.mxu0 0.0
          %2679 = vmatpush1.msra.mxu0 0.0
          %2680 = vmatprep.subr.mxu0 0.0
          %2681 = vmatpush1.msra.mxu0 0.0
          %2682 = vmatprep.subr.mxu0 0.0
          %2683 = vmatpush1.msra.mxu0 0.0
          %2684 = vmatprep.subr.mxu0 0.0
          %2685 = vmatpush1.msra.mxu0 0.0
          %2686 = vmatprep.subr.mxu0 0.0
          %2687 = vmatpush1.msra.mxu0 0.0
          %2688 = vmatprep.subr.mxu0 0.0
          %2689 = vmatpush1.msra.mxu0 0.0
          %2690 = vmatprep.subr.mxu0 0.0
          %2691 = vmatpush1.msra.mxu0 0.0
          %2692 = vmatprep.subr.mxu0 0.0
          %2693 = vmatpush1.msra.mxu0 0.0
          %2694 = vmatprep.subr.mxu0 0.0
          %2695 = vmatpush1.msra.mxu0 0.0
          %2696 = vmatprep.subr.mxu0 0.0
          %2697 = vmatpush1.msra.mxu0 0.0
          %2698 = vmatprep.subr.mxu0 0.0
          %2699 = vmatpush1.msra.mxu0 0.0
          %2700 = vmatprep.subr.mxu0 0.0
          %2701 = vmatpush1.msra.mxu0 0.0
          %2702 = vmatprep.subr.mxu0 0.0
          %2703 = vmatpush1.msra.mxu0 0.0
          %2704 = vmatprep.subr.mxu0 0.0
          %2705 = vmatpush1.msra.mxu0 0.0
          %2706 = vmatprep.subr.mxu0 0.0
          %2707 = vmatpush1.msra.mxu0 0.0
          %2708 = vmatprep.subr.mxu0 0.0
          %2709 = vmatpush1.msra.mxu0 0.0
          %2710 = vmatprep.subr.mxu0 0.0
          %2711 = vmatpush1.msra.mxu0 0.0
          %2712 = vmatprep.subr.mxu0 0.0
          %2713 = vmatpush1.msra.mxu0 0.0
          %2714 = vmatprep.subr.mxu0 0.0
          %2715 = vmatpush1.msra.mxu0 0.0
          %2716 = vmatprep.subr.mxu0 0.0
          %2717 = vmatpush1.msra.mxu0 0.0
          %2718 = vmatprep.subr.mxu0 0.0
          %2719 = vmatpush1.msra.mxu0 0.0
          %2720 = vmatprep.subr.mxu0 0.0
          %2721 = vmatpush1.msra.mxu0 0.0
          %2722 = vmatprep.subr.mxu0 0.0
          %2723 = vmatpush1.msra.mxu0 0.0
          %2724 = vmatprep.subr.mxu0 0.0
          %2725 = vmatpush1.msra.mxu0 0.0
          %2726 = vmatprep.subr.mxu0 0.0
          %2727 = vmatpush1.msra.mxu0 0.0
          %2728 = vmatprep.subr.mxu0 0.0
          %2729 = vmatpush1.msra.mxu0 0.0
          %2730 = vmatprep.subr.mxu0 0.0
          %2731 = vmatpush1.msra.mxu0 0.0
          %2732 = vmatprep.subr.mxu0 0.0
          %2733 = vmatpush1.msra.mxu0 0.0
          %2734 = vmatprep.subr.mxu0 0.0
          %2735 = vmatpush1.msra.mxu0 0.0
          %2736 = vmatprep.subr.mxu0 0.0
          %2737 = vmatpush1.msra.mxu0 0.0
          %2738 = vmatprep.mubr.f32.mxu0 0.0
          %2739 = vmatmul.mubr.f32.gmra.mrb[0].mxu0 %v2666
          %v2740 = vpop.f32.mrb[0].mxu0
          %v2741 = vadd.f32 0.0, %v2740
          %v2742 = vpop.f32.mrb[0].mxu0
          %v2743 = vadd.f32 0.0, %v2742
          %2744 = vdwg.mxu0
          %v2745 = vadd.f32 %v2655, %v2741
          %v2746 = vadd.f32 %v2656, %v2743
          %v2747 = vpack.c.bf16 %v2745, %v2745
          %v2748 = vpack.c.bf16 %v2746, %v2746
          %v2751 = vunpack.c.l.b16 %v2747
          %v2752 = vunpack.c.l.b16 %v2748
          %v2753 = vpack.c.b16 %v2752, %v2751
          %2755 = vst [vmem:[%s206 + $0x10] sm:$0xff] %v2753
          %v2756 = vld [vmem:[%s215 + $0x18] sm:$0xff]
          %v2758 = vcombine.high %v2756, %v2756
          %2760 = vrot.lane.b32.xlu0 %v2756, 113
          %v2761 = vpop.permute.xlu0 %2760
          %2762 = vrot.lane.b32.xlu0 %v2758, 113
          %v2763 = vpop.permute.xlu0 %2762
          %v2764 = vsel %vm268, %v2761, %v2763
          %v2765 = vsel %vm268, %v2763, %v2761
          %2766 = vrot.lane.b32.xlu0 %v2756, 1
          %v2767 = vpop.permute.xlu0 %2766
          %2768 = vrot.lane.b32.xlu0 %v2758, 1
          %v2769 = vpop.permute.xlu0 %2768
          %v2770 = vsel %vm275, %v2767, %v2769
          %v2771 = vsel %vm275, %v2769, %v2767
          %v2772 = vsel %vm280, %v2764, %v2771
          %v2773 = vsel %vm281, %v2765, %v2770
          %2774 = vrot.lane.b32.xlu0 %v2756, 15
          %v2775 = vpop.permute.xlu0 %2774
          %2776 = vrot.lane.b32.xlu0 %v2758, 15
          %v2777 = vpop.permute.xlu0 %2776
          %v2778 = vsel %vm288, %v2775, %v2777
          %v2779 = vsel %vm288, %v2777, %v2775
          %2780 = vrot.lane.b32.xlu0 %v2756, 127
          %v2781 = vpop.permute.xlu0 %2780
          %2782 = vrot.lane.b32.xlu0 %v2758, 127
          %v2783 = vpop.permute.xlu0 %2782
          %v2784 = vsel %vm295, %v2781, %v2783
          %v2785 = vsel %vm295, %v2783, %v2781
          %v2786 = vsel %vm300, %v2779, %v2784
          %v2787 = vsel %vm301, %v2778, %v2785
          %2788 = vrot.lane.b32.xlu0 %v2772, 16
          %v2789 = vpop.permute.xlu0 %2788
          %2790 = vrot.lane.b32.xlu0 %v2773, 16
          %v2791 = vpop.permute.xlu0 %2790
          %v2792 = vsel %vm308, %v2789, %v2791
          %v2793 = vsel %vm308, %v2791, %v2789
          %s2794 = scalar_lea.vmem %s222, 216
          %v2795 = vld [vmem:[%s2794] sm:$0xff]
          %2796 = vrot.lane.b32.xlu0 %v2756, 16
          %v2797 = vpop.permute.xlu0 %2796
          %2798 = vrot.lane.b32.xlu0 %v2758, 16
          %v2799 = vpop.permute.xlu0 %2798
          %v2800 = vsel %vm308, %v2797, %v2799
          %v2801 = vsel %vm308, %v2799, %v2797
          %s2802 = scalar_lea.vmem %s222, 224
          %v2803 = vld [vmem:[%s2802] sm:$0xff]
          %v2805 = vsel %vm320, %v2803, 0
          %v2808 = vsel %vm324, %v2801, 0
          %v2811 = vsel %vm324, %v2800, 0
          %2813 = vmatprep.subr.mxu0 %v2811
          %2814 = vmatpush1.msra.mxu0 %v2808
          %2815 = vmatprep.subr.mxu0 0.0
          %2816 = vmatpush1.msra.mxu0 0.0
          %2817 = vmatprep.subr.mxu0 0.0
          %2818 = vmatpush1.msra.mxu0 0.0
          %2819 = vmatprep.subr.mxu0 0.0
          %2820 = vmatpush1.msra.mxu0 0.0
          %2821 = vmatprep.subr.mxu0 0.0
          %2822 = vmatpush1.msra.mxu0 0.0
          %2823 = vmatprep.subr.mxu0 0.0
          %2824 = vmatpush1.msra.mxu0 0.0
          %2825 = vmatprep.subr.mxu0 0.0
          %2826 = vmatpush1.msra.mxu0 0.0
          %2827 = vmatprep.subr.mxu0 0.0
          %2828 = vmatpush1.msra.mxu0 0.0
          %2829 = vmatprep.subr.mxu0 0.0
          %2830 = vmatpush1.msra.mxu0 0.0
          %2831 = vmatprep.subr.mxu0 0.0
          %2832 = vmatpush1.msra.mxu0 0.0
          %2833 = vmatprep.subr.mxu0 0.0
          %2834 = vmatpush1.msra.mxu0 0.0
          %2835 = vmatprep.subr.mxu0 0.0
          %2836 = vmatpush1.msra.mxu0 0.0
          %2837 = vmatprep.subr.mxu0 0.0
          %2838 = vmatpush1.msra.mxu0 0.0
          %2839 = vmatprep.subr.mxu0 0.0
          %2840 = vmatpush1.msra.mxu0 0.0
          %2841 = vmatprep.subr.mxu0 0.0
          %2842 = vmatpush1.msra.mxu0 0.0
          %2843 = vmatprep.subr.mxu0 0.0
          %2844 = vmatpush1.msra.mxu0 0.0
          %2845 = vmatprep.subr.mxu0 0.0
          %2846 = vmatpush1.msra.mxu0 0.0
          %2847 = vmatprep.subr.mxu0 0.0
          %2848 = vmatpush1.msra.mxu0 0.0
          %2849 = vmatprep.subr.mxu0 0.0
          %2850 = vmatpush1.msra.mxu0 0.0
          %2851 = vmatprep.subr.mxu0 0.0
          %2852 = vmatpush1.msra.mxu0 0.0
          %2853 = vmatprep.subr.mxu0 0.0
          %2854 = vmatpush1.msra.mxu0 0.0
          %2855 = vmatprep.subr.mxu0 0.0
          %2856 = vmatpush1.msra.mxu0 0.0
          %2857 = vmatprep.subr.mxu0 0.0
          %2858 = vmatpush1.msra.mxu0 0.0
          %2859 = vmatprep.subr.mxu0 0.0
          %2860 = vmatpush1.msra.mxu0 0.0
          %2861 = vmatprep.subr.mxu0 0.0
          %2862 = vmatpush1.msra.mxu0 0.0
          %2863 = vmatprep.subr.mxu0 0.0
          %2864 = vmatpush1.msra.mxu0 0.0
          %2865 = vmatprep.subr.mxu0 0.0
          %2866 = vmatpush1.msra.mxu0 0.0
          %2867 = vmatprep.subr.mxu0 0.0
          %2868 = vmatpush1.msra.mxu0 0.0
          %2869 = vmatprep.subr.mxu0 0.0
          %2870 = vmatpush1.msra.mxu0 0.0
          %2871 = vmatprep.subr.mxu0 0.0
          %2872 = vmatpush1.msra.mxu0 0.0
          %2873 = vmatprep.subr.mxu0 0.0
          %2874 = vmatpush1.msra.mxu0 0.0
          %2875 = vmatprep.subr.mxu0 0.0
          %2876 = vmatpush1.msra.mxu0 0.0
          %2877 = vmatprep.mubr.f32.mxu0 0.0
          %2878 = vmatmul.mubr.f32.gmra.mrb[0].mxu0 %v2805
          %v2879 = vpop.f32.mrb[0].mxu0
          %v2880 = vadd.f32 0.0, %v2879
          %v2881 = vpop.f32.mrb[0].mxu0
          %v2882 = vadd.f32 0.0, %v2881
          %2883 = vdwg.mxu0
          %v2885 = vsel %vm320, %v2795, 0
          %v2888 = vsel %vm324, %v2793, 0
          %v2891 = vsel %vm324, %v2792, 0
          %2893 = vmatprep.subr.mxu0 %v2891
          %2894 = vmatpush1.msra.mxu0 %v2888
          %2895 = vmatprep.subr.mxu0 0.0
          %2896 = vmatpush1.msra.mxu0 0.0
          %2897 = vmatprep.subr.mxu0 0.0
          %2898 = vmatpush1.msra.mxu0 0.0
          %2899 = vmatprep.subr.mxu0 0.0
          %2900 = vmatpush1.msra.mxu0 0.0
          %2901 = vmatprep.subr.mxu0 0.0
          %2902 = vmatpush1.msra.mxu0 0.0
          %2903 = vmatprep.subr.mxu0 0.0
          %2904 = vmatpush1.msra.mxu0 0.0
          %2905 = vmatprep.subr.mxu0 0.0
          %2906 = vmatpush1.msra.mxu0 0.0
          %2907 = vmatprep.subr.mxu0 0.0
          %2908 = vmatpush1.msra.mxu0 0.0
          %2909 = vmatprep.subr.mxu0 0.0
          %2910 = vmatpush1.msra.mxu0 0.0
          %2911 = vmatprep.subr.mxu0 0.0
          %2912 = vmatpush1.msra.mxu0 0.0
          %2913 = vmatprep.subr.mxu0 0.0
          %2914 = vmatpush1.msra.mxu0 0.0
          %2915 = vmatprep.subr.mxu0 0.0
          %2916 = vmatpush1.msra.mxu0 0.0
          %2917 = vmatprep.subr.mxu0 0.0
          %2918 = vmatpush1.msra.mxu0 0.0
          %2919 = vmatprep.subr.mxu0 0.0
          %2920 = vmatpush1.msra.mxu0 0.0
          %2921 = vmatprep.subr.mxu0 0.0
          %2922 = vmatpush1.msra.mxu0 0.0
          %2923 = vmatprep.subr.mxu0 0.0
          %2924 = vmatpush1.msra.mxu0 0.0
          %2925 = vmatprep.subr.mxu0 0.0
          %2926 = vmatpush1.msra.mxu0 0.0
          %2927 = vmatprep.subr.mxu0 0.0
          %2928 = vmatpush1.msra.mxu0 0.0
          %2929 = vmatprep.subr.mxu0 0.0
          %2930 = vmatpush1.msra.mxu0 0.0
          %2931 = vmatprep.subr.mxu0 0.0
          %2932 = vmatpush1.msra.mxu0 0.0
          %2933 = vmatprep.subr.mxu0 0.0
          %2934 = vmatpush1.msra.mxu0 0.0
          %2935 = vmatprep.subr.mxu0 0.0
          %2936 = vmatpush1.msra.mxu0 0.0
          %2937 = vmatprep.subr.mxu0 0.0
          %2938 = vmatpush1.msra.mxu0 0.0
          %2939 = vmatprep.subr.mxu0 0.0
          %2940 = vmatpush1.msra.mxu0 0.0
          %2941 = vmatprep.subr.mxu0 0.0
          %2942 = vmatpush1.msra.mxu0 0.0
          %2943 = vmatprep.subr.mxu0 0.0
          %2944 = vmatpush1.msra.mxu0 0.0
          %2945 = vmatprep.subr.mxu0 0.0
          %2946 = vmatpush1.msra.mxu0 0.0
          %2947 = vmatprep.subr.mxu0 0.0
          %2948 = vmatpush1.msra.mxu0 0.0
          %2949 = vmatprep.subr.mxu0 0.0
          %2950 = vmatpush1.msra.mxu0 0.0
          %2951 = vmatprep.subr.mxu0 0.0
          %2952 = vmatpush1.msra.mxu0 0.0
          %2953 = vmatprep.subr.mxu0 0.0
          %2954 = vmatpush1.msra.mxu0 0.0
          %2955 = vmatprep.subr.mxu0 0.0
          %2956 = vmatpush1.msra.mxu0 0.0
          %2957 = vmatprep.mubr.f32.mxu0 0.0
          %2958 = vmatmul.mubr.f32.gmra.mrb[0].mxu0 %v2885
          %v2959 = vpop.f32.mrb[0].mxu0
          %v2960 = vadd.f32 %v2880, %v2959
          %v2961 = vpop.f32.mrb[0].mxu0
          %v2962 = vadd.f32 %v2882, %v2961
          %2963 = vdwg.mxu0
          %2964 = vrot.lane.b32.xlu0 %v2786, 16
          %v2965 = vpop.permute.xlu0 %2964
          %2966 = vrot.lane.b32.xlu0 %v2787, 16
          %v2967 = vpop.permute.xlu0 %2966
          %v2968 = vsel %vm308, %v2965, %v2967
          %v2969 = vsel %vm308, %v2967, %v2965
          %s2970 = scalar_lea.vmem %s222, 232
          %v2971 = vld [vmem:[%s2970] sm:$0xff]
          %v2973 = vsel %vm320, %v2971, 0
          %v2976 = vsel %vm324, %v2969, 0
          %v2979 = vsel %vm324, %v2968, 0
          %2981 = vmatprep.subr.mxu0 %v2979
          %2982 = vmatpush1.msra.mxu0 %v2976
          %2983 = vmatprep.subr.mxu0 0.0
          %2984 = vmatpush1.msra.mxu0 0.0
          %2985 = vmatprep.subr.mxu0 0.0
          %2986 = vmatpush1.msra.mxu0 0.0
          %2987 = vmatprep.subr.mxu0 0.0
          %2988 = vmatpush1.msra.mxu0 0.0
          %2989 = vmatprep.subr.mxu0 0.0
          %2990 = vmatpush1.msra.mxu0 0.0
          %2991 = vmatprep.subr.mxu0 0.0
          %2992 = vmatpush1.msra.mxu0 0.0
          %2993 = vmatprep.subr.mxu0 0.0
          %2994 = vmatpush1.msra.mxu0 0.0
          %2995 = vmatprep.subr.mxu0 0.0
          %2996 = vmatpush1.msra.mxu0 0.0
          %2997 = vmatprep.subr.mxu0 0.0
          %2998 = vmatpush1.msra.mxu0 0.0
          %2999 = vmatprep.subr.mxu0 0.0
          %3000 = vmatpush1.msra.mxu0 0.0
          %3001 = vmatprep.subr.mxu0 0.0
          %3002 = vmatpush1.msra.mxu0 0.0
          %3003 = vmatprep.subr.mxu0 0.0
          %3004 = vmatpush1.msra.mxu0 0.0
          %3005 = vmatprep.subr.mxu0 0.0
          %3006 = vmatpush1.msra.mxu0 0.0
          %3007 = vmatprep.subr.mxu0 0.0
          %3008 = vmatpush1.msra.mxu0 0.0
          %3009 = vmatprep.subr.mxu0 0.0
          %3010 = vmatpush1.msra.mxu0 0.0
          %3011 = vmatprep.subr.mxu0 0.0
          %3012 = vmatpush1.msra.mxu0 0.0
          %3013 = vmatprep.subr.mxu0 0.0
          %3014 = vmatpush1.msra.mxu0 0.0
          %3015 = vmatprep.subr.mxu0 0.0
          %3016 = vmatpush1.msra.mxu0 0.0
          %3017 = vmatprep.subr.mxu0 0.0
          %3018 = vmatpush1.msra.mxu0 0.0
          %3019 = vmatprep.subr.mxu0 0.0
          %3020 = vmatpush1.msra.mxu0 0.0
          %3021 = vmatprep.subr.mxu0 0.0
          %3022 = vmatpush1.msra.mxu0 0.0
          %3023 = vmatprep.subr.mxu0 0.0
          %3024 = vmatpush1.msra.mxu0 0.0
          %3025 = vmatprep.subr.mxu0 0.0
          %3026 = vmatpush1.msra.mxu0 0.0
          %3027 = vmatprep.subr.mxu0 0.0
          %3028 = vmatpush1.msra.mxu0 0.0
          %3029 = vmatprep.subr.mxu0 0.0
          %3030 = vmatpush1.msra.mxu0 0.0
          %3031 = vmatprep.subr.mxu0 0.0
          %3032 = vmatpush1.msra.mxu0 0.0
          %3033 = vmatprep.subr.mxu0 0.0
          %3034 = vmatpush1.msra.mxu0 0.0
          %3035 = vmatprep.subr.mxu0 0.0
          %3036 = vmatpush1.msra.mxu0 0.0
          %3037 = vmatprep.subr.mxu0 0.0
          %3038 = vmatpush1.msra.mxu0 0.0
          %3039 = vmatprep.subr.mxu0 0.0
          %3040 = vmatpush1.msra.mxu0 0.0
          %3041 = vmatprep.subr.mxu0 0.0
          %3042 = vmatpush1.msra.mxu0 0.0
          %3043 = vmatprep.subr.mxu0 0.0
          %3044 = vmatpush1.msra.mxu0 0.0
          %3045 = vmatprep.mubr.f32.mxu0 0.0
          %3046 = vmatmul.mubr.f32.gmra.mrb[0].mxu0 %v2973
          %v3047 = vpop.f32.mrb[0].mxu0
          %v3048 = vadd.f32 0.0, %v3047
          %v3049 = vpop.f32.mrb[0].mxu0
          %v3050 = vadd.f32 0.0, %v3049
          %3051 = vdwg.mxu0
          %v3052 = vadd.f32 %v2960, %v3048
          %v3053 = vadd.f32 %v2962, %v3050
          %s3054 = scalar_lea.vmem %s222, 240
          %v3055 = vld [vmem:[%s3054] sm:$0xff]
          %v3057 = vsel %vm320, %v3055, 0
          %v3060 = vsel %vm324, %v2772, 0
          %v3063 = vsel %vm324, %v2773, 0
          %3065 = vmatprep.subr.mxu0 %v3063
          %3066 = vmatpush1.msra.mxu0 %v3060
          %3067 = vmatprep.subr.mxu0 0.0
          %3068 = vmatpush1.msra.mxu0 0.0
          %3069 = vmatprep.subr.mxu0 0.0
          %3070 = vmatpush1.msra.mxu0 0.0
          %3071 = vmatprep.subr.mxu0 0.0
          %3072 = vmatpush1.msra.mxu0 0.0
          %3073 = vmatprep.subr.mxu0 0.0
          %3074 = vmatpush1.msra.mxu0 0.0
          %3075 = vmatprep.subr.mxu0 0.0
          %3076 = vmatpush1.msra.mxu0 0.0
          %3077 = vmatprep.subr.mxu0 0.0
          %3078 = vmatpush1.msra.mxu0 0.0
          %3079 = vmatprep.subr.mxu0 0.0
          %3080 = vmatpush1.msra.mxu0 0.0
          %3081 = vmatprep.subr.mxu0 0.0
          %3082 = vmatpush1.msra.mxu0 0.0
          %3083 = vmatprep.subr.mxu0 0.0
          %3084 = vmatpush1.msra.mxu0 0.0
          %3085 = vmatprep.subr.mxu0 0.0
          %3086 = vmatpush1.msra.mxu0 0.0
          %3087 = vmatprep.subr.mxu0 0.0
          %3088 = vmatpush1.msra.mxu0 0.0
          %3089 = vmatprep.subr.mxu0 0.0
          %3090 = vmatpush1.msra.mxu0 0.0
          %3091 = vmatprep.subr.mxu0 0.0
          %3092 = vmatpush1.msra.mxu0 0.0
          %3093 = vmatprep.subr.mxu0 0.0
          %3094 = vmatpush1.msra.mxu0 0.0
          %3095 = vmatprep.subr.mxu0 0.0
          %3096 = vmatpush1.msra.mxu0 0.0
          %3097 = vmatprep.subr.mxu0 0.0
          %3098 = vmatpush1.msra.mxu0 0.0
          %3099 = vmatprep.subr.mxu0 0.0
          %3100 = vmatpush1.msra.mxu0 0.0
          %3101 = vmatprep.subr.mxu0 0.0
          %3102 = vmatpush1.msra.mxu0 0.0
          %3103 = vmatprep.subr.mxu0 0.0
          %3104 = vmatpush1.msra.mxu0 0.0
          %3105 = vmatprep.subr.mxu0 0.0
          %3106 = vmatpush1.msra.mxu0 0.0
          %3107 = vmatprep.subr.mxu0 0.0
          %3108 = vmatpush1.msra.mxu0 0.0
          %3109 = vmatprep.subr.mxu0 0.0
          %3110 = vmatpush1.msra.mxu0 0.0
          %3111 = vmatprep.subr.mxu0 0.0
          %3112 = vmatpush1.msra.mxu0 0.0
          %3113 = vmatprep.subr.mxu0 0.0
          %3114 = vmatpush1.msra.mxu0 0.0
          %3115 = vmatprep.subr.mxu0 0.0
          %3116 = vmatpush1.msra.mxu0 0.0
          %3117 = vmatprep.subr.mxu0 0.0
          %3118 = vmatpush1.msra.mxu0 0.0
          %3119 = vmatprep.subr.mxu0 0.0
          %3120 = vmatpush1.msra.mxu0 0.0
          %3121 = vmatprep.subr.mxu0 0.0
          %3122 = vmatpush1.msra.mxu0 0.0
          %3123 = vmatprep.subr.mxu0 0.0
          %3124 = vmatpush1.msra.mxu0 0.0
          %3125 = vmatprep.subr.mxu0 0.0
          %3126 = vmatpush1.msra.mxu0 0.0
          %3127 = vmatprep.subr.mxu0 0.0
          %3128 = vmatpush1.msra.mxu0 0.0
          %3129 = vmatprep.mubr.f32.mxu0 0.0
          %3130 = vmatmul.mubr.f32.gmra.mrb[0].mxu0 %v3057
          %v3131 = vpop.f32.mrb[0].mxu0
          %v3132 = vadd.f32 0.0, %v3131
          %v3133 = vpop.f32.mrb[0].mxu0
          %v3134 = vadd.f32 0.0, %v3133
          %3135 = vdwg.mxu0
          %v3136 = vadd.f32 %v3052, %v3132
          %v3137 = vadd.f32 %v3053, %v3134
          %s3138 = scalar_lea.vmem %s222, 248
          %v3139 = vld [vmem:[%s3138] sm:$0xff]
          %v3141 = vsel %vm320, %v3139, 0
          %v3143 = vsel %vm324, %v2756, 0
          %v3145 = vsel %vm324, %v2758, 0
          %3147 = vmatprep.subr.mxu0 %v3145
          %3148 = vmatpush1.msra.mxu0 %v3143
          %3149 = vmatprep.subr.mxu0 0.0
          %3150 = vmatpush1.msra.mxu0 0.0
          %3151 = vmatprep.subr.mxu0 0.0
          %3152 = vmatpush1.msra.mxu0 0.0
          %3153 = vmatprep.subr.mxu0 0.0
          %3154 = vmatpush1.msra.mxu0 0.0
          %3155 = vmatprep.subr.mxu0 0.0
          %3156 = vmatpush1.msra.mxu0 0.0
          %3157 = vmatprep.subr.mxu0 0.0
          %3158 = vmatpush1.msra.mxu0 0.0
          %3159 = vmatprep.subr.mxu0 0.0
          %3160 = vmatpush1.msra.mxu0 0.0
          %3161 = vmatprep.subr.mxu0 0.0
          %3162 = vmatpush1.msra.mxu0 0.0
          %3163 = vmatprep.subr.mxu0 0.0
          %3164 = vmatpush1.msra.mxu0 0.0
          %3165 = vmatprep.subr.mxu0 0.0
          %3166 = vmatpush1.msra.mxu0 0.0
          %3167 = vmatprep.subr.mxu0 0.0
          %3168 = vmatpush1.msra.mxu0 0.0
          %3169 = vmatprep.subr.mxu0 0.0
          %3170 = vmatpush1.msra.mxu0 0.0
          %3171 = vmatprep.subr.mxu0 0.0
          %3172 = vmatpush1.msra.mxu0 0.0
          %3173 = vmatprep.subr.mxu0 0.0
          %3174 = vmatpush1.msra.mxu0 0.0
          %3175 = vmatprep.subr.mxu0 0.0
          %3176 = vmatpush1.msra.mxu0 0.0
          %3177 = vmatprep.subr.mxu0 0.0
          %3178 = vmatpush1.msra.mxu0 0.0
          %3179 = vmatprep.subr.mxu0 0.0
          %3180 = vmatpush1.msra.mxu0 0.0
          %3181 = vmatprep.subr.mxu0 0.0
          %3182 = vmatpush1.msra.mxu0 0.0
          %3183 = vmatprep.subr.mxu0 0.0
          %3184 = vmatpush1.msra.mxu0 0.0
          %3185 = vmatprep.subr.mxu0 0.0
          %3186 = vmatpush1.msra.mxu0 0.0
          %3187 = vmatprep.subr.mxu0 0.0
          %3188 = vmatpush1.msra.mxu0 0.0
          %3189 = vmatprep.subr.mxu0 0.0
          %3190 = vmatpush1.msra.mxu0 0.0
          %3191 = vmatprep.subr.mxu0 0.0
          %3192 = vmatpush1.msra.mxu0 0.0
          %3193 = vmatprep.subr.mxu0 0.0
          %3194 = vmatpush1.msra.mxu0 0.0
          %3195 = vmatprep.subr.mxu0 0.0
          %3196 = vmatpush1.msra.mxu0 0.0
          %3197 = vmatprep.subr.mxu0 0.0
          %3198 = vmatpush1.msra.mxu0 0.0
          %3199 = vmatprep.subr.mxu0 0.0
          %3200 = vmatpush1.msra.mxu0 0.0
          %3201 = vmatprep.subr.mxu0 0.0
          %3202 = vmatpush1.msra.mxu0 0.0
          %3203 = vmatprep.subr.mxu0 0.0
          %3204 = vmatpush1.msra.mxu0 0.0
          %3205 = vmatprep.subr.mxu0 0.0
          %3206 = vmatpush1.msra.mxu0 0.0
          %3207 = vmatprep.subr.mxu0 0.0
          %3208 = vmatpush1.msra.mxu0 0.0
          %3209 = vmatprep.subr.mxu0 0.0
          %3210 = vmatpush1.msra.mxu0 0.0
          %3211 = vmatprep.mubr.f32.mxu0 0.0
          %3212 = vmatmul.mubr.f32.gmra.mrb[0].mxu0 %v3141
          %v3213 = vpop.f32.mrb[0].mxu0
          %v3214 = vadd.f32 0.0, %v3213
          %v3215 = vpop.f32.mrb[0].mxu0
          %v3216 = vadd.f32 0.0, %v3215
          %3217 = vdwg.mxu0
          %v3218 = vadd.f32 %v3136, %v3214
          %v3219 = vadd.f32 %v3137, %v3216
          %s3220 = scalar_lea.vmem %s222, 256
          %v3221 = vld [vmem:[%s3220] sm:$0xff]
          %v3223 = vsel %vm320, %v3221, 0
          %v3226 = vsel %vm324, %v2786, 0
          %v3229 = vsel %vm324, %v2787, 0
          %3231 = vmatprep.subr.mxu0 %v3229
          %3232 = vmatpush1.msra.mxu0 %v3226
          %3233 = vmatprep.subr.mxu0 0.0
          %3234 = vmatpush1.msra.mxu0 0.0
          %3235 = vmatprep.subr.mxu0 0.0
          %3236 = vmatpush1.msra.mxu0 0.0
          %3237 = vmatprep.subr.mxu0 0.0
          %3238 = vmatpush1.msra.mxu0 0.0
          %3239 = vmatprep.subr.mxu0 0.0
          %3240 = vmatpush1.msra.mxu0 0.0
          %3241 = vmatprep.subr.mxu0 0.0
          %3242 = vmatpush1.msra.mxu0 0.0
          %3243 = vmatprep.subr.mxu0 0.0
          %3244 = vmatpush1.msra.mxu0 0.0
          %3245 = vmatprep.subr.mxu0 0.0
          %3246 = vmatpush1.msra.mxu0 0.0
          %3247 = vmatprep.subr.mxu0 0.0
          %3248 = vmatpush1.msra.mxu0 0.0
          %3249 = vmatprep.subr.mxu0 0.0
          %3250 = vmatpush1.msra.mxu0 0.0
          %3251 = vmatprep.subr.mxu0 0.0
          %3252 = vmatpush1.msra.mxu0 0.0
          %3253 = vmatprep.subr.mxu0 0.0
          %3254 = vmatpush1.msra.mxu0 0.0
          %3255 = vmatprep.subr.mxu0 0.0
          %3256 = vmatpush1.msra.mxu0 0.0
          %3257 = vmatprep.subr.mxu0 0.0
          %3258 = vmatpush1.msra.mxu0 0.0
          %3259 = vmatprep.subr.mxu0 0.0
          %3260 = vmatpush1.msra.mxu0 0.0
          %3261 = vmatprep.subr.mxu0 0.0
          %3262 = vmatpush1.msra.mxu0 0.0
          %3263 = vmatprep.subr.mxu0 0.0
          %3264 = vmatpush1.msra.mxu0 0.0
          %3265 = vmatprep.subr.mxu0 0.0
          %3266 = vmatpush1.msra.mxu0 0.0
          %3267 = vmatprep.subr.mxu0 0.0
          %3268 = vmatpush1.msra.mxu0 0.0
          %3269 = vmatprep.subr.mxu0 0.0
          %3270 = vmatpush1.msra.mxu0 0.0
          %3271 = vmatprep.subr.mxu0 0.0
          %3272 = vmatpush1.msra.mxu0 0.0
          %3273 = vmatprep.subr.mxu0 0.0
          %3274 = vmatpush1.msra.mxu0 0.0
          %3275 = vmatprep.subr.mxu0 0.0
          %3276 = vmatpush1.msra.mxu0 0.0
          %3277 = vmatprep.subr.mxu0 0.0
          %3278 = vmatpush1.msra.mxu0 0.0
          %3279 = vmatprep.subr.mxu0 0.0
          %3280 = vmatpush1.msra.mxu0 0.0
          %3281 = vmatprep.subr.mxu0 0.0
          %3282 = vmatpush1.msra.mxu0 0.0
          %3283 = vmatprep.subr.mxu0 0.0
          %3284 = vmatpush1.msra.mxu0 0.0
          %3285 = vmatprep.subr.mxu0 0.0
          %3286 = vmatpush1.msra.mxu0 0.0
          %3287 = vmatprep.subr.mxu0 0.0
          %3288 = vmatpush1.msra.mxu0 0.0
          %3289 = vmatprep.subr.mxu0 0.0
          %3290 = vmatpush1.msra.mxu0 0.0
          %3291 = vmatprep.subr.mxu0 0.0
          %3292 = vmatpush1.msra.mxu0 0.0
          %3293 = vmatprep.subr.mxu0 0.0
          %3294 = vmatpush1.msra.mxu0 0.0
          %3295 = vmatprep.mubr.f32.mxu0 0.0
          %3296 = vmatmul.mubr.f32.gmra.mrb[0].mxu0 %v3223
          %v3297 = vpop.f32.mrb[0].mxu0
          %v3298 = vadd.f32 0.0, %v3297
          %v3299 = vpop.f32.mrb[0].mxu0
          %v3300 = vadd.f32 0.0, %v3299
          %3301 = vdwg.mxu0
          %v3302 = vadd.f32 %v3218, %v3298
          %v3303 = vadd.f32 %v3219, %v3300
          %3304 = vrot.lane.b32.xlu0 %v2772, 112
          %v3305 = vpop.permute.xlu0 %3304
          %3306 = vrot.lane.b32.xlu0 %v2773, 112
          %v3307 = vpop.permute.xlu0 %3306
          %v3308 = vsel %vm826, %v3305, %v3307
          %v3309 = vsel %vm826, %v3307, %v3305
          %s3310 = scalar_lea.vmem %s222, 264
          %v3311 = vld [vmem:[%s3310] sm:$0xff]
          %v3313 = vsel %vm320, %v3311, 0
          %v3316 = vsel %vm324, %v3308, 0
          %v3319 = vsel %vm324, %v3309, 0
          %3321 = vmatprep.subr.mxu0 %v3319
          %3322 = vmatpush1.msra.mxu0 %v3316
          %3323 = vmatprep.subr.mxu0 0.0
          %3324 = vmatpush1.msra.mxu0 0.0
          %3325 = vmatprep.subr.mxu0 0.0
          %3326 = vmatpush1.msra.mxu0 0.0
          %3327 = vmatprep.subr.mxu0 0.0
          %3328 = vmatpush1.msra.mxu0 0.0
          %3329 = vmatprep.subr.mxu0 0.0
          %3330 = vmatpush1.msra.mxu0 0.0
          %3331 = vmatprep.subr.mxu0 0.0
          %3332 = vmatpush1.msra.mxu0 0.0
          %3333 = vmatprep.subr.mxu0 0.0
          %3334 = vmatpush1.msra.mxu0 0.0
          %3335 = vmatprep.subr.mxu0 0.0
          %3336 = vmatpush1.msra.mxu0 0.0
          %3337 = vmatprep.subr.mxu0 0.0
          %3338 = vmatpush1.msra.mxu0 0.0
          %3339 = vmatprep.subr.mxu0 0.0
          %3340 = vmatpush1.msra.mxu0 0.0
          %3341 = vmatprep.subr.mxu0 0.0
          %3342 = vmatpush1.msra.mxu0 0.0
          %3343 = vmatprep.subr.mxu0 0.0
          %3344 = vmatpush1.msra.mxu0 0.0
          %3345 = vmatprep.subr.mxu0 0.0
          %3346 = vmatpush1.msra.mxu0 0.0
          %3347 = vmatprep.subr.mxu0 0.0
          %3348 = vmatpush1.msra.mxu0 0.0
          %3349 = vmatprep.subr.mxu0 0.0
          %3350 = vmatpush1.msra.mxu0 0.0
          %3351 = vmatprep.subr.mxu0 0.0
          %3352 = vmatpush1.msra.mxu0 0.0
          %3353 = vmatprep.subr.mxu0 0.0
          %3354 = vmatpush1.msra.mxu0 0.0
          %3355 = vmatprep.subr.mxu0 0.0
          %3356 = vmatpush1.msra.mxu0 0.0
          %3357 = vmatprep.subr.mxu0 0.0
          %3358 = vmatpush1.msra.mxu0 0.0
          %3359 = vmatprep.subr.mxu0 0.0
          %3360 = vmatpush1.msra.mxu0 0.0
          %3361 = vmatprep.subr.mxu0 0.0
          %3362 = vmatpush1.msra.mxu0 0.0
          %3363 = vmatprep.subr.mxu0 0.0
          %3364 = vmatpush1.msra.mxu0 0.0
          %3365 = vmatprep.subr.mxu0 0.0
          %3366 = vmatpush1.msra.mxu0 0.0
          %3367 = vmatprep.subr.mxu0 0.0
          %3368 = vmatpush1.msra.mxu0 0.0
          %3369 = vmatprep.subr.mxu0 0.0
          %3370 = vmatpush1.msra.mxu0 0.0
          %3371 = vmatprep.subr.mxu0 0.0
          %3372 = vmatpush1.msra.mxu0 0.0
          %3373 = vmatprep.subr.mxu0 0.0
          %3374 = vmatpush1.msra.mxu0 0.0
          %3375 = vmatprep.subr.mxu0 0.0
          %3376 = vmatpush1.msra.mxu0 0.0
          %3377 = vmatprep.subr.mxu0 0.0
          %3378 = vmatpush1.msra.mxu0 0.0
          %3379 = vmatprep.subr.mxu0 0.0
          %3380 = vmatpush1.msra.mxu0 0.0
          %3381 = vmatprep.subr.mxu0 0.0
          %3382 = vmatpush1.msra.mxu0 0.0
          %3383 = vmatprep.subr.mxu0 0.0
          %3384 = vmatpush1.msra.mxu0 0.0
          %3385 = vmatprep.mubr.f32.mxu0 0.0
          %3386 = vmatmul.mubr.f32.gmra.mrb[0].mxu0 %v3313
          %v3387 = vpop.f32.mrb[0].mxu0
          %v3388 = vadd.f32 0.0, %v3387
          %v3389 = vpop.f32.mrb[0].mxu0
          %v3390 = vadd.f32 0.0, %v3389
          %3391 = vdwg.mxu0
          %v3392 = vadd.f32 %v3302, %v3388
          %v3393 = vadd.f32 %v3303, %v3390
          %3394 = vrot.lane.b32.xlu0 %v2756, 112
          %v3395 = vpop.permute.xlu0 %3394
          %3396 = vrot.lane.b32.xlu0 %v2758, 112
          %v3397 = vpop.permute.xlu0 %3396
          %v3398 = vsel %vm826, %v3395, %v3397
          %v3399 = vsel %vm826, %v3397, %v3395
          %s3400 = scalar_lea.vmem %s222, 272
          %v3401 = vld [vmem:[%s3400] sm:$0xff]
          %v3403 = vsel %vm320, %v3401, 0
          %v3406 = vsel %vm324, %v3398, 0
          %v3409 = vsel %vm324, %v3399, 0
          %3411 = vmatprep.subr.mxu0 %v3409
          %3412 = vmatpush1.msra.mxu0 %v3406
          %3413 = vmatprep.subr.mxu0 0.0
          %3414 = vmatpush1.msra.mxu0 0.0
          %3415 = vmatprep.subr.mxu0 0.0
          %3416 = vmatpush1.msra.mxu0 0.0
          %3417 = vmatprep.subr.mxu0 0.0
          %3418 = vmatpush1.msra.mxu0 0.0
          %3419 = vmatprep.subr.mxu0 0.0
          %3420 = vmatpush1.msra.mxu0 0.0
          %3421 = vmatprep.subr.mxu0 0.0
          %3422 = vmatpush1.msra.mxu0 0.0
          %3423 = vmatprep.subr.mxu0 0.0
          %3424 = vmatpush1.msra.mxu0 0.0
          %3425 = vmatprep.subr.mxu0 0.0
          %3426 = vmatpush1.msra.mxu0 0.0
          %3427 = vmatprep.subr.mxu0 0.0
          %3428 = vmatpush1.msra.mxu0 0.0
          %3429 = vmatprep.subr.mxu0 0.0
          %3430 = vmatpush1.msra.mxu0 0.0
          %3431 = vmatprep.subr.mxu0 0.0
          %3432 = vmatpush1.msra.mxu0 0.0
          %3433 = vmatprep.subr.mxu0 0.0
          %3434 = vmatpush1.msra.mxu0 0.0
          %3435 = vmatprep.subr.mxu0 0.0
          %3436 = vmatpush1.msra.mxu0 0.0
          %3437 = vmatprep.subr.mxu0 0.0
          %3438 = vmatpush1.msra.mxu0 0.0
          %3439 = vmatprep.subr.mxu0 0.0
          %3440 = vmatpush1.msra.mxu0 0.0
          %3441 = vmatprep.subr.mxu0 0.0
          %3442 = vmatpush1.msra.mxu0 0.0
          %3443 = vmatprep.subr.mxu0 0.0
          %3444 = vmatpush1.msra.mxu0 0.0
          %3445 = vmatprep.subr.mxu0 0.0
          %3446 = vmatpush1.msra.mxu0 0.0
          %3447 = vmatprep.subr.mxu0 0.0
          %3448 = vmatpush1.msra.mxu0 0.0
          %3449 = vmatprep.subr.mxu0 0.0
          %3450 = vmatpush1.msra.mxu0 0.0
          %3451 = vmatprep.subr.mxu0 0.0
          %3452 = vmatpush1.msra.mxu0 0.0
          %3453 = vmatprep.subr.mxu0 0.0
          %3454 = vmatpush1.msra.mxu0 0.0
          %3455 = vmatprep.subr.mxu0 0.0
          %3456 = vmatpush1.msra.mxu0 0.0
          %3457 = vmatprep.subr.mxu0 0.0
          %3458 = vmatpush1.msra.mxu0 0.0
          %3459 = vmatprep.subr.mxu0 0.0
          %3460 = vmatpush1.msra.mxu0 0.0
          %3461 = vmatprep.subr.mxu0 0.0
          %3462 = vmatpush1.msra.mxu0 0.0
          %3463 = vmatprep.subr.mxu0 0.0
          %3464 = vmatpush1.msra.mxu0 0.0
          %3465 = vmatprep.subr.mxu0 0.0
          %3466 = vmatpush1.msra.mxu0 0.0
          %3467 = vmatprep.subr.mxu0 0.0
          %3468 = vmatpush1.msra.mxu0 0.0
          %3469 = vmatprep.subr.mxu0 0.0
          %3470 = vmatpush1.msra.mxu0 0.0
          %3471 = vmatprep.subr.mxu0 0.0
          %3472 = vmatpush1.msra.mxu0 0.0
          %3473 = vmatprep.subr.mxu0 0.0
          %3474 = vmatpush1.msra.mxu0 0.0
          %3475 = vmatprep.mubr.f32.mxu0 0.0
          %3476 = vmatmul.mubr.f32.gmra.mrb[0].mxu0 %v3403
          %v3477 = vpop.f32.mrb[0].mxu0
          %v3478 = vadd.f32 0.0, %v3477
          %v3479 = vpop.f32.mrb[0].mxu0
          %v3480 = vadd.f32 0.0, %v3479
          %3481 = vdwg.mxu0
          %v3482 = vadd.f32 %v3392, %v3478
          %v3483 = vadd.f32 %v3393, %v3480
          %3484 = vrot.lane.b32.xlu0 %v2786, 112
          %v3485 = vpop.permute.xlu0 %3484
          %3486 = vrot.lane.b32.xlu0 %v2787, 112
          %v3487 = vpop.permute.xlu0 %3486
          %v3488 = vsel %vm826, %v3485, %v3487
          %v3489 = vsel %vm826, %v3487, %v3485
          %s3490 = scalar_lea.vmem %s222, 280
          %v3491 = vld [vmem:[%s3490] sm:$0xff]
          %v3493 = vsel %vm320, %v3491, 0
          %v3496 = vsel %vm324, %v3488, 0
          %v3499 = vsel %vm324, %v3489, 0
          %3501 = vmatprep.subr.mxu0 %v3499
          %3502 = vmatpush1.msra.mxu0 %v3496
          %3503 = vmatprep.subr.mxu0 0.0
          %3504 = vmatpush1.msra.mxu0 0.0
          %3505 = vmatprep.subr.mxu0 0.0
          %3506 = vmatpush1.msra.mxu0 0.0
          %3507 = vmatprep.subr.mxu0 0.0
          %3508 = vmatpush1.msra.mxu0 0.0
          %3509 = vmatprep.subr.mxu0 0.0
          %3510 = vmatpush1.msra.mxu0 0.0
          %3511 = vmatprep.subr.mxu0 0.0
          %3512 = vmatpush1.msra.mxu0 0.0
          %3513 = vmatprep.subr.mxu0 0.0
          %3514 = vmatpush1.msra.mxu0 0.0
          %3515 = vmatprep.subr.mxu0 0.0
          %3516 = vmatpush1.msra.mxu0 0.0
          %3517 = vmatprep.subr.mxu0 0.0
          %3518 = vmatpush1.msra.mxu0 0.0
          %3519 = vmatprep.subr.mxu0 0.0
          %3520 = vmatpush1.msra.mxu0 0.0
          %3521 = vmatprep.subr.mxu0 0.0
          %3522 = vmatpush1.msra.mxu0 0.0
          %3523 = vmatprep.subr.mxu0 0.0
          %3524 = vmatpush1.msra.mxu0 0.0
          %3525 = vmatprep.subr.mxu0 0.0
          %3526 = vmatpush1.msra.mxu0 0.0
          %3527 = vmatprep.subr.mxu0 0.0
          %3528 = vmatpush1.msra.mxu0 0.0
          %3529 = vmatprep.subr.mxu0 0.0
          %3530 = vmatpush1.msra.mxu0 0.0
          %3531 = vmatprep.subr.mxu0 0.0
          %3532 = vmatpush1.msra.mxu0 0.0
          %3533 = vmatprep.subr.mxu0 0.0
          %3534 = vmatpush1.msra.mxu0 0.0
          %3535 = vmatprep.subr.mxu0 0.0
          %3536 = vmatpush1.msra.mxu0 0.0
          %3537 = vmatprep.subr.mxu0 0.0
          %3538 = vmatpush1.msra.mxu0 0.0
          %3539 = vmatprep.subr.mxu0 0.0
          %3540 = vmatpush1.msra.mxu0 0.0
          %3541 = vmatprep.subr.mxu0 0.0
          %3542 = vmatpush1.msra.mxu0 0.0
          %3543 = vmatprep.subr.mxu0 0.0
          %3544 = vmatpush1.msra.mxu0 0.0
          %3545 = vmatprep.subr.mxu0 0.0
          %3546 = vmatpush1.msra.mxu0 0.0
          %3547 = vmatprep.subr.mxu0 0.0
          %3548 = vmatpush1.msra.mxu0 0.0
          %3549 = vmatprep.subr.mxu0 0.0
          %3550 = vmatpush1.msra.mxu0 0.0
          %3551 = vmatprep.subr.mxu0 0.0
          %3552 = vmatpush1.msra.mxu0 0.0
          %3553 = vmatprep.subr.mxu0 0.0
          %3554 = vmatpush1.msra.mxu0 0.0
          %3555 = vmatprep.subr.mxu0 0.0
          %3556 = vmatpush1.msra.mxu0 0.0
          %3557 = vmatprep.subr.mxu0 0.0
          %3558 = vmatpush1.msra.mxu0 0.0
          %3559 = vmatprep.subr.mxu0 0.0
          %3560 = vmatpush1.msra.mxu0 0.0
          %3561 = vmatprep.subr.mxu0 0.0
          %3562 = vmatpush1.msra.mxu0 0.0
          %3563 = vmatprep.subr.mxu0 0.0
          %3564 = vmatpush1.msra.mxu0 0.0
          %3565 = vmatprep.mubr.f32.mxu0 0.0
          %3566 = vmatmul.mubr.f32.gmra.mrb[0].mxu0 %v3493
          %v3567 = vpop.f32.mrb[0].mxu0
          %v3568 = vadd.f32 0.0, %v3567
          %v3569 = vpop.f32.mrb[0].mxu0
          %v3570 = vadd.f32 0.0, %v3569
          %3571 = vdwg.mxu0
          %v3572 = vadd.f32 %v3482, %v3568
          %v3573 = vadd.f32 %v3483, %v3570
          %v3574 = vpack.c.bf16 %v3572, %v3572
          %v3575 = vpack.c.bf16 %v3573, %v3573
          %v3578 = vunpack.c.l.b16 %v3574
          %v3579 = vunpack.c.l.b16 %v3575
          %v3580 = vpack.c.b16 %v3579, %v3578
          %3582 = vst [vmem:[%s206 + $0x18] sm:$0xff] %v3580
        $region36: #{tpu_custom_call.1} parent=31 // pred_fallthru
          _
        %p3583 = scmp.ge.s32.totalorder %s21, 2
        // Predicated region
        $region37: #{tpu_custom_call.1} parent=31 // pred_check
          %p3584 = pneg %p3583
        $region38: #{tpu_custom_call.1} parent=31 // pred_check_branch
          %3586 = sbr.rel (%p3584) target = $region40
        $region39: #{tpu_custom_call.1} parent=31 // pred_region
          %v3587 = vld [vmem:[%s2] sm:$0xff]
          %v3588 = vld [vmem:[%s215] sm:$0xff]
          %v3589 = vld [vmem:[%s215 + $0x8] sm:$0xff]
          %v3590 = vld [vmem:[%s215 + $0x10] sm:$0xff]
          %v3591 = vld [vmem:[%s215 + $0x18] sm:$0xff]
          %v3596 = vcombine.high %v3588, %v3588
          %v3597 = vcombine.high %v3589, %v3589
          %v3598 = vcombine.high %v3590, %v3590
          %v3599 = vcombine.high %v3591, %v3591
          %vm3600 = vcmask 31744
          %v3602 = vsel %vm3600, %v3587, 0
          %vm3604 = vcmask 1043456
          %v3605 = vsel %vm3604, %v3588, 0
          %v3607 = vsel %vm3604, %v3596, 0
          %v3609 = vsel %vm3604, %v3589, 0
          %v3611 = vsel %vm3604, %v3597, 0
          %v3613 = vsel %vm3604, %v3590, 0
          %v3615 = vsel %vm3604, %v3598, 0
          %v3617 = vsel %vm3604, %v3591, 0
          %v3619 = vsel %vm3604, %v3599, 0
          %3621 = vmatprep.subr.mxu0 %v3607
          %3622 = vmatpush1.msra.mxu0 %v3605
          %3623 = vmatprep.subr.mxu0 0.0
          %3624 = vmatpush1.msra.mxu0 0.0
          %3625 = vmatprep.subr.mxu0 0.0
          %3626 = vmatpush1.msra.mxu0 0.0
          %3627 = vmatprep.subr.mxu0 0.0
          %3628 = vmatpush1.msra.mxu0 0.0
          %3629 = vmatprep.subr.mxu0 0.0
          %3630 = vmatpush1.msra.mxu0 0.0
          %3631 = vmatprep.subr.mxu0 0.0
          %3632 = vmatpush1.msra.mxu0 0.0
          %3633 = vmatprep.subr.mxu0 0.0
          %3634 = vmatpush1.msra.mxu0 0.0
          %3635 = vmatprep.subr.mxu0 0.0
          %3636 = vmatpush1.msra.mxu0 0.0
          %3637 = vmatprep.subr.mxu0 0.0
          %3638 = vmatpush1.msra.mxu0 0.0
          %3639 = vmatprep.subr.mxu0 0.0
          %3640 = vmatpush1.msra.mxu0 0.0
          %3641 = vmatprep.subr.mxu0 0.0
          %3642 = vmatpush1.msra.mxu0 0.0
          %3643 = vmatprep.subr.mxu0 0.0
          %3644 = vmatpush1.msra.mxu0 0.0
          %3645 = vmatprep.subr.mxu0 0.0
          %3646 = vmatpush1.msra.mxu0 0.0
          %3647 = vmatprep.subr.mxu0 0.0
          %3648 = vmatpush1.msra.mxu0 0.0
          %3649 = vmatprep.subr.mxu0 0.0
          %3650 = vmatpush1.msra.mxu0 0.0
          %3651 = vmatprep.subr.mxu0 0.0
          %3652 = vmatpush1.msra.mxu0 0.0
          %3653 = vmatprep.subr.mxu0 0.0
          %3654 = vmatpush1.msra.mxu0 0.0
          %3655 = vmatprep.subr.mxu0 0.0
          %3656 = vmatpush1.msra.mxu0 0.0
          %3657 = vmatprep.subr.mxu0 0.0
          %3658 = vmatpush1.msra.mxu0 0.0
          %3659 = vmatprep.subr.mxu0 0.0
          %3660 = vmatpush1.msra.mxu0 0.0
          %3661 = vmatprep.subr.mxu0 0.0
          %3662 = vmatpush1.msra.mxu0 0.0
          %3663 = vmatprep.subr.mxu0 0.0
          %3664 = vmatpush1.msra.mxu0 0.0
          %3665 = vmatprep.subr.mxu0 0.0
          %3666 = vmatpush1.msra.mxu0 0.0
          %3667 = vmatprep.subr.mxu0 0.0
          %3668 = vmatpush1.msra.mxu0 0.0
          %3669 = vmatprep.subr.mxu0 0.0
          %3670 = vmatpush1.msra.mxu0 0.0
          %3671 = vmatprep.subr.mxu0 0.0
          %3672 = vmatpush1.msra.mxu0 0.0
          %3673 = vmatprep.subr.mxu0 0.0
          %3674 = vmatpush1.msra.mxu0 0.0
          %3675 = vmatprep.subr.mxu0 0.0
          %3676 = vmatpush1.msra.mxu0 0.0
          %3677 = vmatprep.subr.mxu0 0.0
          %3678 = vmatpush1.msra.mxu0 0.0
          %3679 = vmatprep.subr.mxu0 0.0
          %3680 = vmatpush1.msra.mxu0 0.0
          %3681 = vmatprep.subr.mxu0 0.0
          %3682 = vmatpush1.msra.mxu0 0.0
          %3683 = vmatprep.subr.mxu0 0.0
          %3684 = vmatpush1.msra.mxu0 0.0
          %3685 = vmatprep.mubr.f32.mxu0 0.0
          %3686 = vmatmul.mubr.f32.gmra.mrb[0].mxu0 %v3602
          %v3687 = vpop.f32.mrb[0].mxu0
          %v3688 = vadd.f32 0.0, %v3687
          %v3689 = vpop.f32.mrb[0].mxu0
          %v3690 = vadd.f32 0.0, %v3689
          %3691 = vdwg.mxu0
          %3692 = vmatprep.subr.mxu0 %v3611
          %3693 = vmatpush1.msra.mxu0 %v3609
          %3694 = vmatprep.subr.mxu0 0.0
          %3695 = vmatpush1.msra.mxu0 0.0
          %3696 = vmatprep.subr.mxu0 0.0
          %3697 = vmatpush1.msra.mxu0 0.0
          %3698 = vmatprep.subr.mxu0 0.0
          %3699 = vmatpush1.msra.mxu0 0.0
          %3700 = vmatprep.subr.mxu0 0.0
          %3701 = vmatpush1.msra.mxu0 0.0
          %3702 = vmatprep.subr.mxu0 0.0
          %3703 = vmatpush1.msra.mxu0 0.0
          %3704 = vmatprep.subr.mxu0 0.0
          %3705 = vmatpush1.msra.mxu0 0.0
          %3706 = vmatprep.subr.mxu0 0.0
          %3707 = vmatpush1.msra.mxu0 0.0
          %3708 = vmatprep.subr.mxu0 0.0
          %3709 = vmatpush1.msra.mxu0 0.0
          %3710 = vmatprep.subr.mxu0 0.0
          %3711 = vmatpush1.msra.mxu0 0.0
          %3712 = vmatprep.subr.mxu0 0.0
          %3713 = vmatpush1.msra.mxu0 0.0
          %3714 = vmatprep.subr.mxu0 0.0
          %3715 = vmatpush1.msra.mxu0 0.0
          %3716 = vmatprep.subr.mxu0 0.0
          %3717 = vmatpush1.msra.mxu0 0.0
          %3718 = vmatprep.subr.mxu0 0.0
          %3719 = vmatpush1.msra.mxu0 0.0
          %3720 = vmatprep.subr.mxu0 0.0
          %3721 = vmatpush1.msra.mxu0 0.0
          %3722 = vmatprep.subr.mxu0 0.0
          %3723 = vmatpush1.msra.mxu0 0.0
          %3724 = vmatprep.subr.mxu0 0.0
          %3725 = vmatpush1.msra.mxu0 0.0
          %3726 = vmatprep.subr.mxu0 0.0
          %3727 = vmatpush1.msra.mxu0 0.0
          %3728 = vmatprep.subr.mxu0 0.0
          %3729 = vmatpush1.msra.mxu0 0.0
          %3730 = vmatprep.subr.mxu0 0.0
          %3731 = vmatpush1.msra.mxu0 0.0
          %3732 = vmatprep.subr.mxu0 0.0
          %3733 = vmatpush1.msra.mxu0 0.0
          %3734 = vmatprep.subr.mxu0 0.0
          %3735 = vmatpush1.msra.mxu0 0.0
          %3736 = vmatprep.subr.mxu0 0.0
          %3737 = vmatpush1.msra.mxu0 0.0
          %3738 = vmatprep.subr.mxu0 0.0
          %3739 = vmatpush1.msra.mxu0 0.0
          %3740 = vmatprep.subr.mxu0 0.0
          %3741 = vmatpush1.msra.mxu0 0.0
          %3742 = vmatprep.subr.mxu0 0.0
          %3743 = vmatpush1.msra.mxu0 0.0
          %3744 = vmatprep.subr.mxu0 0.0
          %3745 = vmatpush1.msra.mxu0 0.0
          %3746 = vmatprep.subr.mxu0 0.0
          %3747 = vmatpush1.msra.mxu0 0.0
          %3748 = vmatprep.subr.mxu0 0.0
          %3749 = vmatpush1.msra.mxu0 0.0
          %3750 = vmatprep.subr.mxu0 0.0
          %3751 = vmatpush1.msra.mxu0 0.0
          %3752 = vmatprep.subr.mxu0 0.0
          %3753 = vmatpush1.msra.mxu0 0.0
          %3754 = vmatprep.subr.mxu0 0.0
          %3755 = vmatpush1.msra.mxu0 0.0
          %3756 = vmatprep.mubr.f32.mxu0 0.0
          %3757 = vmatmul.mubr.f32.gmra.mrb[0].mxu0 %v3602
          %v3758 = vpop.f32.mrb[0].mxu0
          %v3759 = vadd.f32 0.0, %v3758
          %v3760 = vpop.f32.mrb[0].mxu0
          %v3761 = vadd.f32 0.0, %v3760
          %3762 = vdwg.mxu0
          %3763 = vmatprep.subr.mxu0 %v3615
          %3764 = vmatpush1.msra.mxu0 %v3613
          %3765 = vmatprep.subr.mxu0 0.0
          %3766 = vmatpush1.msra.mxu0 0.0
          %3767 = vmatprep.subr.mxu0 0.0
          %3768 = vmatpush1.msra.mxu0 0.0
          %3769 = vmatprep.subr.mxu0 0.0
          %3770 = vmatpush1.msra.mxu0 0.0
          %3771 = vmatprep.subr.mxu0 0.0
          %3772 = vmatpush1.msra.mxu0 0.0
          %3773 = vmatprep.subr.mxu0 0.0
          %3774 = vmatpush1.msra.mxu0 0.0
          %3775 = vmatprep.subr.mxu0 0.0
          %3776 = vmatpush1.msra.mxu0 0.0
          %3777 = vmatprep.subr.mxu0 0.0
          %3778 = vmatpush1.msra.mxu0 0.0
          %3779 = vmatprep.subr.mxu0 0.0
          %3780 = vmatpush1.msra.mxu0 0.0
          %3781 = vmatprep.subr.mxu0 0.0
          %3782 = vmatpush1.msra.mxu0 0.0
          %3783 = vmatprep.subr.mxu0 0.0
          %3784 = vmatpush1.msra.mxu0 0.0
          %3785 = vmatprep.subr.mxu0 0.0
          %3786 = vmatpush1.msra.mxu0 0.0
          %3787 = vmatprep.subr.mxu0 0.0
          %3788 = vmatpush1.msra.mxu0 0.0
          %3789 = vmatprep.subr.mxu0 0.0
          %3790 = vmatpush1.msra.mxu0 0.0
          %3791 = vmatprep.subr.mxu0 0.0
          %3792 = vmatpush1.msra.mxu0 0.0
          %3793 = vmatprep.subr.mxu0 0.0
          %3794 = vmatpush1.msra.mxu0 0.0
          %3795 = vmatprep.subr.mxu0 0.0
          %3796 = vmatpush1.msra.mxu0 0.0
          %3797 = vmatprep.subr.mxu0 0.0
          %3798 = vmatpush1.msra.mxu0 0.0
          %3799 = vmatprep.subr.mxu0 0.0
          %3800 = vmatpush1.msra.mxu0 0.0
          %3801 = vmatprep.subr.mxu0 0.0
          %3802 = vmatpush1.msra.mxu0 0.0
          %3803 = vmatprep.subr.mxu0 0.0
          %3804 = vmatpush1.msra.mxu0 0.0
          %3805 = vmatprep.subr.mxu0 0.0
          %3806 = vmatpush1.msra.mxu0 0.0
          %3807 = vmatprep.subr.mxu0 0.0
          %3808 = vmatpush1.msra.mxu0 0.0
          %3809 = vmatprep.subr.mxu0 0.0
          %3810 = vmatpush1.msra.mxu0 0.0
          %3811 = vmatprep.subr.mxu0 0.0
          %3812 = vmatpush1.msra.mxu0 0.0
          %3813 = vmatprep.subr.mxu0 0.0
          %3814 = vmatpush1.msra.mxu0 0.0
          %3815 = vmatprep.subr.mxu0 0.0
          %3816 = vmatpush1.msra.mxu0 0.0
          %3817 = vmatprep.subr.mxu0 0.0
          %3818 = vmatpush1.msra.mxu0 0.0
          %3819 = vmatprep.subr.mxu0 0.0
          %3820 = vmatpush1.msra.mxu0 0.0
          %3821 = vmatprep.subr.mxu0 0.0
          %3822 = vmatpush1.msra.mxu0 0.0
          %3823 = vmatprep.subr.mxu0 0.0
          %3824 = vmatpush1.msra.mxu0 0.0
          %3825 = vmatprep.subr.mxu0 0.0
          %3826 = vmatpush1.msra.mxu0 0.0
          %3827 = vmatprep.mubr.f32.mxu0 0.0
          %3828 = vmatmul.mubr.f32.gmra.mrb[0].mxu0 %v3602
          %v3829 = vpop.f32.mrb[0].mxu0
          %v3830 = vadd.f32 0.0, %v3829
          %v3831 = vpop.f32.mrb[0].mxu0
          %v3832 = vadd.f32 0.0, %v3831
          %3833 = vdwg.mxu0
          %3834 = vmatprep.subr.mxu0 %v3619
          %3835 = vmatpush1.msra.mxu0 %v3617
          %3836 = vmatprep.subr.mxu0 0.0
          %3837 = vmatpush1.msra.mxu0 0.0
          %3838 = vmatprep.subr.mxu0 0.0
          %3839 = vmatpush1.msra.mxu0 0.0
          %3840 = vmatprep.subr.mxu0 0.0
          %3841 = vmatpush1.msra.mxu0 0.0
          %3842 = vmatprep.subr.mxu0 0.0
          %3843 = vmatpush1.msra.mxu0 0.0
          %3844 = vmatprep.subr.mxu0 0.0
          %3845 = vmatpush1.msra.mxu0 0.0
          %3846 = vmatprep.subr.mxu0 0.0
          %3847 = vmatpush1.msra.mxu0 0.0
          %3848 = vmatprep.subr.mxu0 0.0
          %3849 = vmatpush1.msra.mxu0 0.0
          %3850 = vmatprep.subr.mxu0 0.0
          %3851 = vmatpush1.msra.mxu0 0.0
          %3852 = vmatprep.subr.mxu0 0.0
          %3853 = vmatpush1.msra.mxu0 0.0
          %3854 = vmatprep.subr.mxu0 0.0
          %3855 = vmatpush1.msra.mxu0 0.0
          %3856 = vmatprep.subr.mxu0 0.0
          %3857 = vmatpush1.msra.mxu0 0.0
          %3858 = vmatprep.subr.mxu0 0.0
          %3859 = vmatpush1.msra.mxu0 0.0
          %3860 = vmatprep.subr.mxu0 0.0
          %3861 = vmatpush1.msra.mxu0 0.0
          %3862 = vmatprep.subr.mxu0 0.0
          %3863 = vmatpush1.msra.mxu0 0.0
          %3864 = vmatprep.subr.mxu0 0.0
          %3865 = vmatpush1.msra.mxu0 0.0
          %3866 = vmatprep.subr.mxu0 0.0
          %3867 = vmatpush1.msra.mxu0 0.0
          %3868 = vmatprep.subr.mxu0 0.0
          %3869 = vmatpush1.msra.mxu0 0.0
          %3870 = vmatprep.subr.mxu0 0.0
          %3871 = vmatpush1.msra.mxu0 0.0
          %3872 = vmatprep.subr.mxu0 0.0
          %3873 = vmatpush1.msra.mxu0 0.0
          %3874 = vmatprep.subr.mxu0 0.0
          %3875 = vmatpush1.msra.mxu0 0.0
          %3876 = vmatprep.subr.mxu0 0.0
          %3877 = vmatpush1.msra.mxu0 0.0
          %3878 = vmatprep.subr.mxu0 0.0
          %3879 = vmatpush1.msra.mxu0 0.0
          %3880 = vmatprep.subr.mxu0 0.0
          %3881 = vmatpush1.msra.mxu0 0.0
          %3882 = vmatprep.subr.mxu0 0.0
          %3883 = vmatpush1.msra.mxu0 0.0
          %3884 = vmatprep.subr.mxu0 0.0
          %3885 = vmatpush1.msra.mxu0 0.0
          %3886 = vmatprep.subr.mxu0 0.0
          %3887 = vmatpush1.msra.mxu0 0.0
          %3888 = vmatprep.subr.mxu0 0.0
          %3889 = vmatpush1.msra.mxu0 0.0
          %3890 = vmatprep.subr.mxu0 0.0
          %3891 = vmatpush1.msra.mxu0 0.0
          %3892 = vmatprep.subr.mxu0 0.0
          %3893 = vmatpush1.msra.mxu0 0.0
          %3894 = vmatprep.subr.mxu0 0.0
          %3895 = vmatpush1.msra.mxu0 0.0
          %3896 = vmatprep.subr.mxu0 0.0
          %3897 = vmatpush1.msra.mxu0 0.0
          %3898 = vmatprep.mubr.f32.mxu0 0.0
          %3899 = vmatmul.mubr.f32.gmra.mrb[0].mxu0 %v3602
          %v3900 = vpop.f32.mrb[0].mxu0
          %v3901 = vadd.f32 0.0, %v3900
          %v3902 = vpop.f32.mrb[0].mxu0
          %v3903 = vadd.f32 0.0, %v3902
          %3904 = vdwg.mxu0
          %v3905 = vpack.c.bf16 %v3688, %v3688
          %v3906 = vpack.c.bf16 %v3690, %v3690
          %v3907 = vpack.c.bf16 %v3759, %v3759
          %v3908 = vpack.c.bf16 %v3761, %v3761
          %v3909 = vpack.c.bf16 %v3830, %v3830
          %v3910 = vpack.c.bf16 %v3832, %v3832
          %v3911 = vpack.c.bf16 %v3901, %v3901
          %v3912 = vpack.c.bf16 %v3903, %v3903
          %v3921 = vunpack.c.l.b16 %v3905
          %v3922 = vunpack.c.l.b16 %v3906
          %v3923 = vunpack.c.l.b16 %v3907
          %v3924 = vunpack.c.l.b16 %v3908
          %v3925 = vunpack.c.l.b16 %v3909
          %v3926 = vunpack.c.l.b16 %v3910
          %v3927 = vunpack.c.l.b16 %v3911
          %v3928 = vunpack.c.l.b16 %v3912
          %v3929 = vpack.c.b16 %v3922, %v3921
          %v3930 = vpack.c.b16 %v3924, %v3923
          %v3931 = vpack.c.b16 %v3926, %v3925
          %v3932 = vpack.c.b16 %v3928, %v3927
          %3937 = vst [vmem:[%s206] sm:$0xff] %v3929
          %3938 = vst [vmem:[%s206 + $0x8] sm:$0xff] %v3930
          %3939 = vst [vmem:[%s206 + $0x10] sm:$0xff] %v3931
          %3940 = vst [vmem:[%s206 + $0x18] sm:$0xff] %v3932
        $region40: #{tpu_custom_call.1} parent=31 // pred_fallthru
          _
        %s3941 = sand.u32 %s114, 1
        %s3942 = scalar_lea.sflag [#allocation3], %s3941
        %s3943 = sand.u32 %s114, 1
        %s3944 = smul.addr %s3943, 32
        %s3945 = scalar_lea.vmem [#allocation2], %s3944
        // Predicated region
        $region41: #{tpu_custom_call.1} parent=31 // pred_check
          %p3946 = pneg %p124
        $region42: #{tpu_custom_call.1} parent=31 // pred_check_branch
          %3948 = sbr.rel (%p3946) target = $region44
        $region43: #{tpu_custom_call.1} parent=31 // pred_region
          %s3949 = smul.u32 8, %s22
          %s3951 = ssub.s32 512, 512
          %3952 = vsyncadd %s3942, %s3951
          %s3953 = smul.addr %s21, 8
          %s3954 = sadd.s32 %s3949, %s3953
          %s3955 = smul.addr %s3954, 64
          %s3956 = scalar_lea.hbm %s3, %s3955
          %s3958 = sshll.u32 %s3945, 4
          %s3959 = int_to_ptr.vmem [resolvable:$true] %s3958
          %3961 = dma.vmem_to_hbm [thread:$0]  %s3959, 512, %s3956, %s3942
        $region44: #{tpu_custom_call.1} parent=31 // pred_fallthru
          _
      $region32: #{tpu_custom_call.1} parent=5 // pred_fallthru
        _
      %p3962 = scmp.le.s32.totalorder 2, %s12
      // Predicated region
      $region45: #{tpu_custom_call.1} parent=5 // pred_check
        %p3963 = pneg %p3962
      $region46: #{tpu_custom_call.1} parent=5 // pred_check_branch
        %3965 = sbr.rel (%p3963) target = $region48
      $region47: #{tpu_custom_call.1} parent=5 // pred_region
        %s3966 = ssub.s32 %s12, 2
        // Predicated region
        $region49: #{tpu_custom_call.1} parent=47 // pred_check
          %p3967 = pneg %p130
        $region50: #{tpu_custom_call.1} parent=47 // pred_check_branch
          %3969 = sbr.rel (%p3967) target = $region52
        $region51: #{tpu_custom_call.1} parent=47 // pred_region
          %s3970 = sand.u32 %s115, 1
          %s3971 = scalar_lea.sflag [#allocation3], %s3970
          %s3972 = sand.u32 %s115, 1
          %s3973 = smul.addr %s3972, 32
          %s3974 = scalar_lea.vmem [#allocation2], %s3973
          %3975 = dma.done %s3971, 512
        $region52: #{tpu_custom_call.1} parent=47 // pred_fallthru
          _
      $region48: #{tpu_custom_call.1} parent=5 // pred_fallthru
        _
    $region6: #{tpu_custom_call.1} parent=1 // loop_footer
      %s16 = sadd.s32 1, %s12
    $region7: #{tpu_custom_call.1} parent=1 // loop_footer_branch
      %11 = sbr.rel target = $region3
    $region8: #{tpu_custom_call.1} parent=1 // loop_exit
      _
    %3976 = vsyncpa [#allocation3], 1
    %s3977 = scalar_lea.sflag [#allocation3], 1
    %3978 = vsyncpa %s3977, 1

</llo_original>
